<compile_context>
chip_gen: v7x
topology: tpu7x:2x2x1
jax: 0.10.0
libtpu: 0.0.40
codegen_flags: <defaults>
</compile_context>

<pallas_src>
import math

import jax
import jax.numpy as jnp
from jax.experimental import pallas as pl
from jax.experimental.pallas import tpu as pltpu

NUM_HEADS = 8


def _mha_kernel(x_ref, mask_ref, wq_ref, wk_ref, wv_ref,
                wlin_ref, blin_ref, wlast_ref, blast_ref, o_ref):
    bb, S, D = x_ref.shape          # batch tile, seq len, d_model
    H, _, DK = wq_ref.shape         # heads, d_model, d_k
    N = bb * S                      # rows fed to the projection matmuls
    G = H * bb                      # flattened (head, batch) groups for attention
    scale = 1.0 / math.sqrt(DK)

    # ---- per-head projections: one head-batched matmul per projection ----------
    x2 = x_ref[...].reshape(N, D).astype(jnp.bfloat16)
    xb = jnp.broadcast_to(x2[None], (H, N, D))          # hoisted, reused 3x
    q = jnp.einsum('hnd,hdk->hnk', xb, wq_ref[...],
                   preferred_element_type=jnp.float32).reshape(G, S, DK)
    k = jnp.einsum('hnd,hdk->hnk', xb, wk_ref[...],
                   preferred_element_type=jnp.float32).reshape(G, S, DK)
    v = jnp.einsum('hnd,hdk->hnk', xb, wv_ref[...],
                   preferred_element_type=jnp.float32).reshape(G, S, DK)

    # ---- scaled dot-product attention, batched over (head, batch) --------------
    # scale folded into q (exact power-of-two, no precision impact) before bf16 cast
    scores = jnp.einsum('gsd,gtd->gst',
                        (q * scale).astype(jnp.bfloat16), k.astype(jnp.bfloat16),
                        preferred_element_type=jnp.float32)          # (G, S, S)
    # boolean mask passed as {0,1} float, shared by every head of a batch row;
    # masked_fill with -float16_max exactly like the PyTorch module.
    mask = mask_ref[...]                                             # (bb, S, S)
    scores = jnp.where(mask[None] != 0.0, -65504.0,
                       scores.reshape(H, bb, S, S)).reshape(G, S, S)

    m = jnp.max(scores, axis=-1, keepdims=True)
    e = jnp.exp(scores - m)
    p = e * pl.reciprocal(jnp.sum(e, axis=-1, keepdims=True), approx=True)

    ctx = jnp.einsum('gst,gtd->gsd',
                     p.astype(jnp.bfloat16), v.astype(jnp.bfloat16),
                     preferred_element_type=jnp.float32)             # (G, S, DK)

    # ---- sequence mean, hoisted above the affine output layers -----------------
    pooled = jnp.mean(ctx.reshape(H, bb, S, DK), axis=2)             # (H, bb, DK)

    # linear(h*d_v -> d_model): per-head partial products summed over heads
    hid = jnp.einsum('hbj,hjo->hbo', pooled.astype(jnp.bfloat16), wlin_ref[...],
                     preferred_element_type=jnp.float32)             # (H, bb, D)
    hid = jnp.sum(hid, axis=0) + blin_ref[...]                       # (bb, D)

    # last_linear (classes zero-padded to a lane-dense width)
    out = jnp.dot(hid.astype(jnp.bfloat16), wlast_ref[...],
                  preferred_element_type=jnp.float32) + blast_ref[...]
    o_ref[...] = out


def mha_forward(x, mask_bool, params, *, batch_blocks=1):
    """x: (B, S, d_model) f32; mask_bool: (B, S, S) bool or None -> (B, num_classes)."""
    B, S, D = x.shape
    H = NUM_HEADS
    assert D % H == 0 and B % batch_blocks == 0
    DK = D // H
    C = params["b_last"].shape[0]
    CP = ((C + 127) // 128) * 128        # lane-dense (padded) class width
    bb = B // batch_blocks

    mask_f = (jnp.zeros((B, S, S), jnp.float32) if mask_bool is None
              else mask_bool.astype(jnp.float32))

    # --- glue: weight layout prep (bf16 for the MXU, f32 biases) ----------------
    wq = params["w_q"].astype(jnp.bfloat16)                               # (H, D, DK)
    wk = params["w_k"].astype(jnp.bfloat16)
    wv = params["w_v"].astype(jnp.bfloat16)
    wlin = params["w_lin"].T.reshape(H, DK, D).astype(jnp.bfloat16)       # (H, DK, D)
    blin = params["b_lin"].reshape(1, D).astype(jnp.float32)
    wlast = jnp.zeros((D, CP), jnp.float32).at[:, :C].set(params["w_last"].T)
    wlast = wlast.astype(jnp.bfloat16)                                    # (D, CP)
    blast = jnp.zeros((1, CP), jnp.float32).at[:, :C].set(params["b_last"][None, :])

    out = pl.pallas_call(
        _mha_kernel,
        out_shape=jax.ShapeDtypeStruct((B, CP), jnp.float32),
        grid_spec=pltpu.PrefetchScalarGridSpec(
            num_scalar_prefetch=0,
            grid=(batch_blocks,),
            in_specs=[
                pl.BlockSpec((bb, S, D), lambda i: (i, 0, 0)),    # x (batch tile)
                pl.BlockSpec((bb, S, S), lambda i: (i, 0, 0)),    # mask (batch tile)
                pl.BlockSpec((H, D, DK), lambda i: (0, 0, 0)),    # W_q (VMEM-resident)
                pl.BlockSpec((H, D, DK), lambda i: (0, 0, 0)),    # W_k
                pl.BlockSpec((H, D, DK), lambda i: (0, 0, 0)),    # W_v
                pl.BlockSpec((H, DK, D), lambda i: (0, 0, 0)),    # linear weight
                pl.BlockSpec((1, D), lambda i: (0, 0)),           # linear bias
                pl.BlockSpec((D, CP), lambda i: (0, 0)),          # last_linear weight (padded)
                pl.BlockSpec((1, CP), lambda i: (0, 0)),          # last_linear bias (padded)
            ],
            out_specs=pl.BlockSpec((bb, CP), lambda i: (i, 0)),
        ),
        compiler_params=pltpu.CompilerParams(
            dimension_semantics=("parallel",)),   # batch tiles independent (v7x: 2 TCs)
    )(x, mask_f, wq, wk, wv, wlin, blin, wlast, blast)
    return out[:, :C]


def ref_forward(x, mask_bool, params):
    """Pure-JAX f32 reference mirroring the PyTorch module exactly (unhoisted)."""
    H = NUM_HEADS
    B, S, D = x.shape
    DK = D // H
    q = jnp.einsum('bsd,hdk->hbsk', x, params["w_q"]).reshape(H * B, S, DK)
    k = jnp.einsum('bsd,hdk->hbsk', x, params["w_k"]).reshape(H * B, S, DK)
    v = jnp.einsum('bsd,hdk->hbsk', x, params["w_v"]).reshape(H * B, S, DK)
    aw = jnp.einsum('gsd,gtd->gst', q, k) / math.sqrt(DK)
    if mask_bool is not None:
        aw = jnp.where(jnp.tile(mask_bool, (H, 1, 1)), -65504.0, aw)
    aw = jax.nn.softmax(aw, axis=-1)
    attn = jnp.einsum('gst,gtd->gsd', aw, v)                       # (H*B, S, DK)
    attn = jnp.concatenate(jnp.split(attn, H, axis=0), axis=2)     # (B, S, H*DK)
    out = attn @ params["w_lin"].T + params["b_lin"]
    out = out @ params["w_last"].T + params["b_last"]
    return out.mean(axis=1)


if __name__ == "__main__":
    B, S, D, C = 2, 16, 128, 10          # batch, seq_len, cfg.feature_dim, cfg.num_classes
    H, DK = NUM_HEADS, D // NUM_HEADS

    key = jax.random.PRNGKey(0)
    ks = jax.random.split(key, 9)
    x = jax.random.normal(ks[0], (B, S, D), dtype=jnp.float32)
    mask_bool = jax.random.bernoulli(ks[1], 0.15, (B, S, S))       # True == masked out

    params = {
        "w_q":    0.05 * jax.random.normal(ks[2], (H, D, DK), dtype=jnp.float32),
        "w_k":    0.05 * jax.random.normal(ks[3], (H, D, DK), dtype=jnp.float32),
        "w_v":    0.05 * jax.random.normal(ks[4], (H, D, DK), dtype=jnp.float32),
        "w_lin":  0.1 * jax.random.normal(ks[5], (D, H * DK), dtype=jnp.float32),
        "b_lin":  0.1 * jax.random.normal(ks[6], (D,), dtype=jnp.float32),
        "w_last": 0.1 * jax.random.normal(ks[7], (C, D), dtype=jnp.float32),
        "b_last": 0.1 * jax.random.normal(ks[8], (C,), dtype=jnp.float32),
    }

    out = jax.block_until_ready(mha_forward(x, mask_bool, params))
    ref = ref_forward(x, mask_bool, params)

    assert out.shape == (B, C), out.shape
    max_err = float(jnp.max(jnp.abs(out - ref)))
    assert jnp.allclose(out, ref, atol=2e-2, rtol=2e-2), max_err   # bf16 MXU path vs f32 ref
    print("KERNEL_OK")
</pallas_src>

<mosaic_0001>
module attributes {stable_mosaic.version = 11 : i64} {
  func.func @_mha_kernel(%arg0: i32, %arg1: memref<2x16x128xf32, #tpu.memory_space<vmem>>, %arg2: memref<2x16x16xf32, #tpu.memory_space<vmem>>, %arg3: memref<8x128x16xbf16, #tpu.memory_space<vmem>>, %arg4: memref<8x128x16xbf16, #tpu.memory_space<vmem>>, %arg5: memref<8x128x16xbf16, #tpu.memory_space<vmem>>, %arg6: memref<8x16x128xbf16, #tpu.memory_space<vmem>>, %arg7: memref<1x128xf32, #tpu.memory_space<vmem>>, %arg8: memref<128x128xbf16, #tpu.memory_space<vmem>>, %arg9: memref<1x128xf32, #tpu.memory_space<vmem>>, %arg10: memref<2x128xf32, #tpu.memory_space<vmem>>) attributes {dimension_semantics = [#tpu.dimension_semantics<parallel>], iteration_bounds = array<i64: 1>, scalar_prefetch = 0 : i64, scratch_operands = 0 : i64, tpu.core_type = #tpu.core_type<tc>, window_params = [{transform_indices = @transform_0, window_bounds = array<i64: 2, 16, 128>}, {transform_indices = @transform_1, window_bounds = array<i64: 2, 16, 16>}, {pipeline_mode = #tpu.pipeline_mode<synchronous>, transform_indices = @transform_2, window_bounds = array<i64: 8, 128, 16>}, {pipeline_mode = #tpu.pipeline_mode<synchronous>, transform_indices = @transform_3, window_bounds = array<i64: 8, 128, 16>}, {pipeline_mode = #tpu.pipeline_mode<synchronous>, transform_indices = @transform_4, window_bounds = array<i64: 8, 128, 16>}, {pipeline_mode = #tpu.pipeline_mode<synchronous>, transform_indices = @transform_5, window_bounds = array<i64: 8, 16, 128>}, {pipeline_mode = #tpu.pipeline_mode<synchronous>, transform_indices = @transform_6, window_bounds = array<i64: 1, 128>}, {pipeline_mode = #tpu.pipeline_mode<synchronous>, transform_indices = @transform_7, window_bounds = array<i64: 128, 128>}, {pipeline_mode = #tpu.pipeline_mode<synchronous>, transform_indices = @transform_8, window_bounds = array<i64: 1, 128>}, {transform_indices = @transform_9, window_bounds = array<i64: 2, 128>}]} {
    %c0 = arith.constant 0 : index
    %c0_0 = arith.constant 0 : index
    %c0_1 = arith.constant 0 : index
    %0 = vector.load %arg1[%c0, %c0_0, %c0_1] : memref<2x16x128xf32, #tpu.memory_space<vmem>>, vector<2x16x128xf32>
    %1 = vector.shape_cast %0 : vector<2x16x128xf32> to vector<32x128xf32>
    %2 = arith.truncf %1 : vector<32x128xf32> to vector<32x128xbf16>
    %3 = vector.shape_cast %2 : vector<32x128xbf16> to vector<1x32x128xbf16>
    %4 = vector.shape_cast %3 : vector<1x32x128xbf16> to vector<1x32x128xbf16>
    %5 = vector.broadcast %4 : vector<1x32x128xbf16> to vector<8x32x128xbf16>
    %c0_2 = arith.constant 0 : index
    %c0_3 = arith.constant 0 : index
    %c0_4 = arith.constant 0 : index
    %6 = vector.load %arg3[%c0_2, %c0_3, %c0_4] : memref<8x128x16xbf16, #tpu.memory_space<vmem>>, vector<8x128x16xbf16>
    "tpu.trace_start"() <{level = 10 : i32, message = "hnd,hdk->hnk"}> : () -> ()
    %cst = arith.constant dense<0.000000e+00> : vector<8x32x16xf32>
    %7 = tpu.matmul %5, %6, %cst {dimension_numbers = #tpu.dot_dimension_numbers<[2], [1], [1], [2], [0, 0, 0, 1, 1, 2], [0], [0]>} : vector<8x32x128xbf16>, vector<8x128x16xbf16>, vector<8x32x16xf32> -> vector<8x32x16xf32>
    "tpu.trace_stop"() : () -> ()
    %8 = vector.shape_cast %7 : vector<8x32x16xf32> to vector<16x16x16xf32>
    %c0_5 = arith.constant 0 : index
    %c0_6 = arith.constant 0 : index
    %c0_7 = arith.constant 0 : index
    %9 = vector.load %arg4[%c0_5, %c0_6, %c0_7] : memref<8x128x16xbf16, #tpu.memory_space<vmem>>, vector<8x128x16xbf16>
    "tpu.trace_start"() <{level = 10 : i32, message = "hnd,hdk->hnk"}> : () -> ()
    %cst_8 = arith.constant dense<0.000000e+00> : vector<8x32x16xf32>
    %10 = tpu.matmul %5, %9, %cst_8 {dimension_numbers = #tpu.dot_dimension_numbers<[2], [1], [1], [2], [0, 0, 0, 1, 1, 2], [0], [0]>} : vector<8x32x128xbf16>, vector<8x128x16xbf16>, vector<8x32x16xf32> -> vector<8x32x16xf32>
    "tpu.trace_stop"() : () -> ()
    %11 = vector.shape_cast %10 : vector<8x32x16xf32> to vector<16x16x16xf32>
    %c0_9 = arith.constant 0 : index
    %c0_10 = arith.constant 0 : index
    %c0_11 = arith.constant 0 : index
    %12 = vector.load %arg5[%c0_9, %c0_10, %c0_11] : memref<8x128x16xbf16, #tpu.memory_space<vmem>>, vector<8x128x16xbf16>
    "tpu.trace_start"() <{level = 10 : i32, message = "hnd,hdk->hnk"}> : () -> ()
    %cst_12 = arith.constant dense<0.000000e+00> : vector<8x32x16xf32>
    %13 = tpu.matmul %5, %12, %cst_12 {dimension_numbers = #tpu.dot_dimension_numbers<[2], [1], [1], [2], [0, 0, 0, 1, 1, 2], [0], [0]>} : vector<8x32x128xbf16>, vector<8x128x16xbf16>, vector<8x32x16xf32> -> vector<8x32x16xf32>
    "tpu.trace_stop"() : () -> ()
    %14 = vector.shape_cast %13 : vector<8x32x16xf32> to vector<16x16x16xf32>
    %cst_13 = arith.constant 2.500000e-01 : f32
    %15 = vector.broadcast %cst_13 : f32 to vector<16x16x16xf32>
    %16 = arith.mulf %8, %15 : vector<16x16x16xf32>
    %17 = arith.truncf %16 : vector<16x16x16xf32> to vector<16x16x16xbf16>
    %18 = arith.truncf %11 : vector<16x16x16xf32> to vector<16x16x16xbf16>
    "tpu.trace_start"() <{level = 10 : i32, message = "gsd,gtd->gst"}> : () -> ()
    %cst_14 = arith.constant dense<0.000000e+00> : vector<16x16x16xf32>
    %19 = tpu.matmul %17, %18, %cst_14 {dimension_numbers = #tpu.dot_dimension_numbers<[2], [2], [1], [1], [0, 0, 0, 1, 1, 1], [0], [0]>} : vector<16x16x16xbf16>, vector<16x16x16xbf16>, vector<16x16x16xf32> -> vector<16x16x16xf32>
    "tpu.trace_stop"() : () -> ()
    %c0_15 = arith.constant 0 : index
    %c0_16 = arith.constant 0 : index
    %c0_17 = arith.constant 0 : index
    %20 = vector.load %arg2[%c0_15, %c0_16, %c0_17] : memref<2x16x16xf32, #tpu.memory_space<vmem>>, vector<2x16x16xf32>
    %21 = vector.shape_cast %20 : vector<2x16x16xf32> to vector<1x2x16x16xf32>
    %cst_18 = arith.constant 0.000000e+00 : f32
    %22 = vector.broadcast %cst_18 : f32 to vector<1x2x16x16xf32>
    %23 = arith.cmpf one, %21, %22 : vector<1x2x16x16xf32>
    %24 = vector.shape_cast %19 : vector<16x16x16xf32> to vector<8x2x16x16xf32>
    %cst_19 = arith.constant -6.550400e+04 : f32
    %25 = vector.shape_cast %23 : vector<1x2x16x16xi1> to vector<1x2x16x16xi1>
    %26 = vector.broadcast %25 : vector<1x2x16x16xi1> to vector<8x2x16x16xi1>
    %27 = vector.broadcast %cst_19 : f32 to vector<8x2x16x16xf32>
    %28 = arith.select %26, %27, %24 : vector<8x2x16x16xi1>, vector<8x2x16x16xf32>
    %29 = vector.shape_cast %28 : vector<8x2x16x16xf32> to vector<16x16x16xf32>
    %cst_20 = arith.constant dense<0xFF800000> : vector<16x16xf32>
    %30 = vector.multi_reduction <maximumf>, %29, %cst_20 [2] : vector<16x16x16xf32> to vector<16x16xf32>
    %31 = vector.shape_cast %30 : vector<16x16xf32> to vector<16x16x1xf32>
    %32 = vector.broadcast %31 : vector<16x16x1xf32> to vector<16x16x16xf32>
    %33 = arith.subf %29, %32 : vector<16x16x16xf32>
    %34 = math.exp %33 : vector<16x16x16xf32>
    %cst_21 = arith.constant dense<0.000000e+00> : vector<16x16xf32>
    %35 = vector.multi_reduction <add>, %34, %cst_21 [2] : vector<16x16x16xf32> to vector<16x16xf32>
    %36 = vector.shape_cast %35 : vector<16x16xf32> to vector<16x16x1xf32>
    %37 = tpu.reciprocal %36 {approx = true} : vector<16x16x1xf32> -> vector<16x16x1xf32>
    %38 = vector.broadcast %37 : vector<16x16x1xf32> to vector<16x16x16xf32>
    %39 = arith.mulf %34, %38 : vector<16x16x16xf32>
    %40 = arith.truncf %39 : vector<16x16x16xf32> to vector<16x16x16xbf16>
    %41 = arith.truncf %14 : vector<16x16x16xf32> to vector<16x16x16xbf16>
    "tpu.trace_start"() <{level = 10 : i32, message = "gst,gtd->gsd"}> : () -> ()
    %cst_22 = arith.constant dense<0.000000e+00> : vector<16x16x16xf32>
    %42 = tpu.matmul %40, %41, %cst_22 {dimension_numbers = #tpu.dot_dimension_numbers<[2], [1], [1], [2], [0, 0, 0, 1, 1, 2], [0], [0]>} : vector<16x16x16xbf16>, vector<16x16x16xbf16>, vector<16x16x16xf32> -> vector<16x16x16xf32>
    "tpu.trace_stop"() : () -> ()
    %43 = vector.shape_cast %42 : vector<16x16x16xf32> to vector<8x2x16x16xf32>
    %cst_23 = arith.constant dense<0.000000e+00> : vector<8x2x16xf32>
    %44 = vector.multi_reduction <add>, %43, %cst_23 [2] : vector<8x2x16x16xf32> to vector<8x2x16xf32>
    %cst_24 = arith.constant 1.600000e+01 : f32
    %45 = vector.broadcast %cst_24 : f32 to vector<8x2x16xf32>
    %46 = arith.divf %44, %45 : vector<8x2x16xf32>
    %47 = arith.truncf %46 : vector<8x2x16xf32> to vector<8x2x16xbf16>
    %c0_25 = arith.constant 0 : index
    %c0_26 = arith.constant 0 : index
    %c0_27 = arith.constant 0 : index
    %48 = vector.load %arg6[%c0_25, %c0_26, %c0_27] : memref<8x16x128xbf16, #tpu.memory_space<vmem>>, vector<8x16x128xbf16>
    "tpu.trace_start"() <{level = 10 : i32, message = "hbj,hjo->hbo"}> : () -> ()
    %cst_28 = arith.constant dense<0.000000e+00> : vector<8x2x128xf32>
    %49 = tpu.matmul %47, %48, %cst_28 {dimension_numbers = #tpu.dot_dimension_numbers<[2], [1], [1], [2], [0, 0, 0, 1, 1, 2], [0], [0]>} : vector<8x2x16xbf16>, vector<8x16x128xbf16>, vector<8x2x128xf32> -> vector<8x2x128xf32>
    "tpu.trace_stop"() : () -> ()
    %cst_29 = arith.constant dense<0.000000e+00> : vector<2x128xf32>
    %50 = vector.multi_reduction <add>, %49, %cst_29 [0] : vector<8x2x128xf32> to vector<2x128xf32>
    %c0_30 = arith.constant 0 : index
    %c0_31 = arith.constant 0 : index
    %51 = vector.load %arg7[%c0_30, %c0_31] : memref<1x128xf32, #tpu.memory_space<vmem>>, vector<1x128xf32>
    %52 = vector.broadcast %51 : vector<1x128xf32> to vector<2x128xf32>
    %53 = arith.addf %50, %52 : vector<2x128xf32>
    %54 = arith.truncf %53 : vector<2x128xf32> to vector<2x128xbf16>
    %c0_32 = arith.constant 0 : index
    %c0_33 = arith.constant 0 : index
    %55 = vector.load %arg8[%c0_32, %c0_33] : memref<128x128xbf16, #tpu.memory_space<vmem>>, vector<128x128xbf16>
    %cst_34 = arith.constant dense<0.000000e+00> : vector<2x128xf32>
    %56 = tpu.matmul %54, %55, %cst_34 {dimension_numbers = #tpu.dot_dimension_numbers<[1], [0], [0], [1], [0, 0, 1, 1], [], []>} : vector<2x128xbf16>, vector<128x128xbf16>, vector<2x128xf32> -> vector<2x128xf32>
    %c0_35 = arith.constant 0 : index
    %c0_36 = arith.constant 0 : index
    %57 = vector.load %arg9[%c0_35, %c0_36] : memref<1x128xf32, #tpu.memory_space<vmem>>, vector<1x128xf32>
    %58 = vector.broadcast %57 : vector<1x128xf32> to vector<2x128xf32>
    %59 = arith.addf %56, %58 : vector<2x128xf32>
    %c0_37 = arith.constant 0 : index
    %c0_38 = arith.constant 0 : index
    %60 = vector.load %arg10[%c0_37, %c0_38] : memref<2x128xf32, #tpu.memory_space<vmem>>, vector<2x128xf32>
    tpu.vector_store %arg10[%c0_37, %c0_38], %59 {strides = array<i32>} : memref<2x128xf32, #tpu.memory_space<vmem>>, vector<2x128xf32>,
    return
  }
  func.func @transform_0(%arg0: i32) -> (i32, i32, i32) {
    %c0_i32 = arith.constant 0 : i32
    %c0_i32_0 = arith.constant 0 : i32
    %c0_i32_1 = arith.constant 0 : i32
    return %arg0, %c0_i32, %c0_i32_0 : i32, i32, i32
  }
  func.func @transform_1(%arg0: i32) -> (i32, i32, i32) {
    %c0_i32 = arith.constant 0 : i32
    %c0_i32_0 = arith.constant 0 : i32
    %c0_i32_1 = arith.constant 0 : i32
    return %arg0, %c0_i32, %c0_i32_0 : i32, i32, i32
  }
  func.func @transform_2(%arg0: i32) -> (i32, i32, i32) {
    %c0_i32 = arith.constant 0 : i32
    %c0_i32_0 = arith.constant 0 : i32
    %c0_i32_1 = arith.constant 0 : i32
    %c0_i32_2 = arith.constant 0 : i32
    return %c0_i32, %c0_i32_0, %c0_i32_1 : i32, i32, i32
  }
  func.func @transform_3(%arg0: i32) -> (i32, i32, i32) {
    %c0_i32 = arith.constant 0 : i32
    %c0_i32_0 = arith.constant 0 : i32
    %c0_i32_1 = arith.constant 0 : i32
    %c0_i32_2 = arith.constant 0 : i32
    return %c0_i32, %c0_i32_0, %c0_i32_1 : i32, i32, i32
  }
  func.func @transform_4(%arg0: i32) -> (i32, i32, i32) {
    %c0_i32 = arith.constant 0 : i32
    %c0_i32_0 = arith.constant 0 : i32
    %c0_i32_1 = arith.constant 0 : i32
    %c0_i32_2 = arith.constant 0 : i32
    return %c0_i32, %c0_i32_0, %c0_i32_1 : i32, i32, i32
  }
  func.func @transform_5(%arg0: i32) -> (i32, i32, i32) {
    %c0_i32 = arith.constant 0 : i32
    %c0_i32_0 = arith.constant 0 : i32
    %c0_i32_1 = arith.constant 0 : i32
    %c0_i32_2 = arith.constant 0 : i32
    return %c0_i32, %c0_i32_0, %c0_i32_1 : i32, i32, i32
  }
  func.func @transform_6(%arg0: i32) -> (i32, i32) {
    %c0_i32 = arith.constant 0 : i32
    %c0_i32_0 = arith.constant 0 : i32
    %c0_i32_1 = arith.constant 0 : i32
    return %c0_i32, %c0_i32_0 : i32, i32
  }
  func.func @transform_7(%arg0: i32) -> (i32, i32) {
    %c0_i32 = arith.constant 0 : i32
    %c0_i32_0 = arith.constant 0 : i32
    %c0_i32_1 = arith.constant 0 : i32
    return %c0_i32, %c0_i32_0 : i32, i32
  }
  func.func @transform_8(%arg0: i32) -> (i32, i32) {
    %c0_i32 = arith.constant 0 : i32
    %c0_i32_0 = arith.constant 0 : i32
    %c0_i32_1 = arith.constant 0 : i32
    return %c0_i32, %c0_i32_0 : i32, i32
  }
  func.func @transform_9(%arg0: i32) -> (i32, i32) {
    %c0_i32 = arith.constant 0 : i32
    %c0_i32_0 = arith.constant 0 : i32
    return %arg0, %c0_i32 : i32, i32
  }
}

</mosaic_0001>

<llo_original>
// kernel: tpu_custom_call.1
$region0: #{tpu_custom_call.1}
  #allocation0 [shape = 'u32[]', space=smem, size = 0x4, offset = 0x4, fixed_abs, tag = 'smem constant byte address 0x4 - core index']
  #allocation1 [shape = 'u32[144,128]{1,0:T(1,128)}', space=vmem, size = 0x12000, scoped, tag = 'internal scratch']
  %s0 = inlined_call_operand.vmem [shape: f32[2,16,128], index: 0, kind: input, shape index: {}]
  %s1 = inlined_call_operand.vmem [shape: f32[2,16,16], index: 1, kind: input, shape index: {}]
  %s2 = inlined_call_operand.vmem [shape: bf16[8,128,16], index: 2, kind: input, shape index: {}]
  %s3 = inlined_call_operand.vmem [shape: bf16[8,128,16], index: 3, kind: input, shape index: {}]
  %s4 = inlined_call_operand.vmem [shape: bf16[8,128,16], index: 4, kind: input, shape index: {}]
  %s5 = inlined_call_operand.vmem [shape: bf16[8,16,128], index: 5, kind: input, shape index: {}]
  %s6 = inlined_call_operand.vmem [shape: f32[1,128], index: 6, kind: input, shape index: {}]
  %s7 = inlined_call_operand.vmem [shape: bf16[128,128], index: 7, kind: input, shape index: {}]
  %s8 = inlined_call_operand.vmem [shape: f32[1,128], index: 8, kind: input, shape index: {}]
  %s9 = inlined_call_operand.hbm [shape: f32[2,128], index: 9, kind: output, shape index: {}]
  %s10 = sld [smem:[#allocation0]]
  $region46: #{tpu_custom_call.1} parent=0
    _
  %s12 = ssub.s32 1, %s10
  %s13 = scalar_select 0, %s12, %s10
  $region1: #{tpu_custom_call.1} parent=0
    #allocation2 [shape = 'u8[1024]{0}', space=vmem, size = 0x400, scoped, tag = 'output window, operand 0, single buffered']
    #allocation3 [shape = 's32[1]{0}', space=sflag, size = 0x4, scoped, tag = 'scoped memory for tpu_custom_call.1']
    %14 = vsyncpa [#allocation3], 0
    // Predicated region
    $region2: #{tpu_custom_call.1} parent=1 // pred_check
      _
    $region3: #{tpu_custom_call.1} parent=1 // pred_check_branch
      %16 = sbr.rel (0) target = $region5
    $region4: #{tpu_custom_call.1} parent=1 // pred_region
      _
    $region5: #{tpu_custom_call.1} parent=1 // pred_fallthru
      _
    // Predicated region
    $region6: #{tpu_custom_call.1} parent=1 // pred_check
      _
    $region7: #{tpu_custom_call.1} parent=1 // pred_check_branch
      %18 = sbr.rel (0) target = $region9
    $region8: #{tpu_custom_call.1} parent=1 // pred_region
      _
    $region9: #{tpu_custom_call.1} parent=1 // pred_fallthru
      _
    // Predicated region
    $region10: #{tpu_custom_call.1} parent=1 // pred_check
      _
    $region11: #{tpu_custom_call.1} parent=1 // pred_check_branch
      %20 = sbr.rel (0) target = $region13
    $region12: #{tpu_custom_call.1} parent=1 // pred_region
      _
    $region13: #{tpu_custom_call.1} parent=1 // pred_fallthru
      _
    // Predicated region
    $region14: #{tpu_custom_call.1} parent=1 // pred_check
      _
    $region15: #{tpu_custom_call.1} parent=1 // pred_check_branch
      %22 = sbr.rel (0) target = $region17
    $region16: #{tpu_custom_call.1} parent=1 // pred_region
      _
    $region17: #{tpu_custom_call.1} parent=1 // pred_fallthru
      _
    // Predicated region
    $region18: #{tpu_custom_call.1} parent=1 // pred_check
      _
    $region19: #{tpu_custom_call.1} parent=1 // pred_check_branch
      %24 = sbr.rel (0) target = $region21
    $region20: #{tpu_custom_call.1} parent=1 // pred_region
      _
    $region21: #{tpu_custom_call.1} parent=1 // pred_fallthru
      _
    // Predicated region
    $region22: #{tpu_custom_call.1} parent=1 // pred_check
      _
    $region23: #{tpu_custom_call.1} parent=1 // pred_check_branch
      %26 = sbr.rel (0) target = $region25
    $region24: #{tpu_custom_call.1} parent=1 // pred_region
      _
    $region25: #{tpu_custom_call.1} parent=1 // pred_fallthru
      _
    // Predicated region
    $region26: #{tpu_custom_call.1} parent=1 // pred_check
      _
    $region27: #{tpu_custom_call.1} parent=1 // pred_check_branch
      %28 = sbr.rel (0) target = $region29
    $region28: #{tpu_custom_call.1} parent=1 // pred_region
      _
    $region29: #{tpu_custom_call.1} parent=1 // pred_fallthru
      _
    // Predicated region
    $region30: #{tpu_custom_call.1} parent=1 // pred_check
      _
    $region31: #{tpu_custom_call.1} parent=1 // pred_check_branch
      %30 = sbr.rel (0) target = $region33
    $region32: #{tpu_custom_call.1} parent=1 // pred_region
      _
    $region33: #{tpu_custom_call.1} parent=1 // pred_fallthru
      _
    // Predicated region
    $region34: #{tpu_custom_call.1} parent=1 // pred_check
      _
    $region35: #{tpu_custom_call.1} parent=1 // pred_check_branch
      %32 = sbr.rel (0) target = $region37
    $region36: #{tpu_custom_call.1} parent=1 // pred_region
      _
    $region37: #{tpu_custom_call.1} parent=1 // pred_fallthru
      _
    %v34 = vld [vmem:[%s0] sm:$0xff]
    %v35 = vld [vmem:[%s0 + $0x8] sm:$0xff]
    %v36 = vld [vmem:[%s0 + $0x10] sm:$0xff]
    %v37 = vld [vmem:[%s0 + $0x18] sm:$0xff]
    %v38 = vpack.c.bf16 %v35, %v34
    %v39 = vpack.c.bf16 %v37, %v36
    %v40 = vld [vmem:[%s2] sm:$0xf]
    %v41 = vld [vmem:[%s2 + $0x4] sm:$0xf]
    %v42 = vld [vmem:[%s2 + $0x8] sm:$0xf]
    %v43 = vld [vmem:[%s2 + $0xc] sm:$0xf]
    %v44 = vld [vmem:[%s2 + $0x10] sm:$0xf]
    %v45 = vld [vmem:[%s2 + $0x14] sm:$0xf]
    %v46 = vld [vmem:[%s2 + $0x18] sm:$0xf]
    %v47 = vld [vmem:[%s2 + $0x1c] sm:$0xf]
    %v48 = vld [vmem:[%s2 + $0x20] sm:$0xf]
    %v49 = vld [vmem:[%s2 + $0x24] sm:$0xf]
    %v50 = vld [vmem:[%s2 + $0x28] sm:$0xf]
    %v51 = vld [vmem:[%s2 + $0x2c] sm:$0xf]
    %v52 = vld [vmem:[%s2 + $0x30] sm:$0xf]
    %v53 = vld [vmem:[%s2 + $0x34] sm:$0xf]
    %v54 = vld [vmem:[%s2 + $0x38] sm:$0xf]
    %v55 = vld [vmem:[%s2 + $0x3c] sm:$0xf]
    %v56 = vld [vmem:[%s2 + $0x40] sm:$0xf]
    %v57 = vld [vmem:[%s2 + $0x44] sm:$0xf]
    %v58 = vld [vmem:[%s2 + $0x48] sm:$0xf]
    %v59 = vld [vmem:[%s2 + $0x4c] sm:$0xf]
    %v60 = vld [vmem:[%s2 + $0x50] sm:$0xf]
    %v61 = vld [vmem:[%s2 + $0x54] sm:$0xf]
    %v62 = vld [vmem:[%s2 + $0x58] sm:$0xf]
    %v63 = vld [vmem:[%s2 + $0x5c] sm:$0xf]
    %v64 = vld [vmem:[%s2 + $0x60] sm:$0xf]
    %v65 = vld [vmem:[%s2 + $0x64] sm:$0xf]
    %v66 = vld [vmem:[%s2 + $0x68] sm:$0xf]
    %v67 = vld [vmem:[%s2 + $0x6c] sm:$0xf]
    %v68 = vld [vmem:[%s2 + $0x70] sm:$0xf]
    %v69 = vld [vmem:[%s2 + $0x74] sm:$0xf]
    %v70 = vld [vmem:[%s2 + $0x78] sm:$0xf]
    %v71 = vld [vmem:[%s2 + $0x7c] sm:$0xf]
    %v72 = vld [vmem:[%s2 + $0x80] sm:$0xf]
    %v73 = vld [vmem:[%s2 + $0x84] sm:$0xf]
    %v74 = vld [vmem:[%s2 + $0x88] sm:$0xf]
    %v75 = vld [vmem:[%s2 + $0x8c] sm:$0xf]
    %v76 = vld [vmem:[%s2 + $0x90] sm:$0xf]
    %v77 = vld [vmem:[%s2 + $0x94] sm:$0xf]
    %v78 = vld [vmem:[%s2 + $0x98] sm:$0xf]
    %v79 = vld [vmem:[%s2 + $0x9c] sm:$0xf]
    %v80 = vld [vmem:[%s2 + $0xa0] sm:$0xf]
    %v81 = vld [vmem:[%s2 + $0xa4] sm:$0xf]
    %v82 = vld [vmem:[%s2 + $0xa8] sm:$0xf]
    %v83 = vld [vmem:[%s2 + $0xac] sm:$0xf]
    %v84 = vld [vmem:[%s2 + $0xb0] sm:$0xf]
    %v85 = vld [vmem:[%s2 + $0xb4] sm:$0xf]
    %v86 = vld [vmem:[%s2 + $0xb8] sm:$0xf]
    %v87 = vld [vmem:[%s2 + $0xbc] sm:$0xf]
    %v88 = vld [vmem:[%s2 + $0xc0] sm:$0xf]
    %v89 = vld [vmem:[%s2 + $0xc4] sm:$0xf]
    %v90 = vld [vmem:[%s2 + $0xc8] sm:$0xf]
    %v91 = vld [vmem:[%s2 + $0xcc] sm:$0xf]
    %v92 = vld [vmem:[%s2 + $0xd0] sm:$0xf]
    %v93 = vld [vmem:[%s2 + $0xd4] sm:$0xf]
    %v94 = vld [vmem:[%s2 + $0xd8] sm:$0xf]
    %v95 = vld [vmem:[%s2 + $0xdc] sm:$0xf]
    %v96 = vld [vmem:[%s2 + $0xe0] sm:$0xf]
    %v97 = vld [vmem:[%s2 + $0xe4] sm:$0xf]
    %v98 = vld [vmem:[%s2 + $0xe8] sm:$0xf]
    %v99 = vld [vmem:[%s2 + $0xec] sm:$0xf]
    %v100 = vld [vmem:[%s2 + $0xf0] sm:$0xf]
    %v101 = vld [vmem:[%s2 + $0xf4] sm:$0xf]
    %v102 = vld [vmem:[%s2 + $0xf8] sm:$0xf]
    %v103 = vld [vmem:[%s2 + $0xfc] sm:$0xf]
    %v104 = vld [vmem:[%s2 + $0x100] sm:$0xf]
    %v105 = vld [vmem:[%s2 + $0x104] sm:$0xf]
    %v106 = vld [vmem:[%s2 + $0x108] sm:$0xf]
    %v107 = vld [vmem:[%s2 + $0x10c] sm:$0xf]
    %v108 = vld [vmem:[%s2 + $0x110] sm:$0xf]
    %v109 = vld [vmem:[%s2 + $0x114] sm:$0xf]
    %v110 = vld [vmem:[%s2 + $0x118] sm:$0xf]
    %v111 = vld [vmem:[%s2 + $0x11c] sm:$0xf]
    %v112 = vld [vmem:[%s2 + $0x120] sm:$0xf]
    %v113 = vld [vmem:[%s2 + $0x124] sm:$0xf]
    %v114 = vld [vmem:[%s2 + $0x128] sm:$0xf]
    %v115 = vld [vmem:[%s2 + $0x12c] sm:$0xf]
    %v116 = vld [vmem:[%s2 + $0x130] sm:$0xf]
    %v117 = vld [vmem:[%s2 + $0x134] sm:$0xf]
    %v118 = vld [vmem:[%s2 + $0x138] sm:$0xf]
    %v119 = vld [vmem:[%s2 + $0x13c] sm:$0xf]
    %v120 = vld [vmem:[%s2 + $0x140] sm:$0xf]
    %v121 = vld [vmem:[%s2 + $0x144] sm:$0xf]
    %v122 = vld [vmem:[%s2 + $0x148] sm:$0xf]
    %v123 = vld [vmem:[%s2 + $0x14c] sm:$0xf]
    %v124 = vld [vmem:[%s2 + $0x150] sm:$0xf]
    %v125 = vld [vmem:[%s2 + $0x154] sm:$0xf]
    %v126 = vld [vmem:[%s2 + $0x158] sm:$0xf]
    %v127 = vld [vmem:[%s2 + $0x15c] sm:$0xf]
    %v128 = vld [vmem:[%s2 + $0x160] sm:$0xf]
    %v129 = vld [vmem:[%s2 + $0x164] sm:$0xf]
    %v130 = vld [vmem:[%s2 + $0x168] sm:$0xf]
    %v131 = vld [vmem:[%s2 + $0x16c] sm:$0xf]
    %v132 = vld [vmem:[%s2 + $0x170] sm:$0xf]
    %v133 = vld [vmem:[%s2 + $0x174] sm:$0xf]
    %v134 = vld [vmem:[%s2 + $0x178] sm:$0xf]
    %v135 = vld [vmem:[%s2 + $0x17c] sm:$0xf]
    %v136 = vld [vmem:[%s2 + $0x180] sm:$0xf]
    %v137 = vld [vmem:[%s2 + $0x184] sm:$0xf]
    %v138 = vld [vmem:[%s2 + $0x188] sm:$0xf]
    %v139 = vld [vmem:[%s2 + $0x18c] sm:$0xf]
    %v140 = vld [vmem:[%s2 + $0x190] sm:$0xf]
    %v141 = vld [vmem:[%s2 + $0x194] sm:$0xf]
    %v142 = vld [vmem:[%s2 + $0x198] sm:$0xf]
    %v143 = vld [vmem:[%s2 + $0x19c] sm:$0xf]
    %v144 = vld [vmem:[%s2 + $0x1a0] sm:$0xf]
    %v145 = vld [vmem:[%s2 + $0x1a4] sm:$0xf]
    %v146 = vld [vmem:[%s2 + $0x1a8] sm:$0xf]
    %v147 = vld [vmem:[%s2 + $0x1ac] sm:$0xf]
    %v148 = vld [vmem:[%s2 + $0x1b0] sm:$0xf]
    %v149 = vld [vmem:[%s2 + $0x1b4] sm:$0xf]
    %v150 = vld [vmem:[%s2 + $0x1b8] sm:$0xf]
    %v151 = vld [vmem:[%s2 + $0x1bc] sm:$0xf]
    %v152 = vld [vmem:[%s2 + $0x1c0] sm:$0xf]
    %v153 = vld [vmem:[%s2 + $0x1c4] sm:$0xf]
    %v154 = vld [vmem:[%s2 + $0x1c8] sm:$0xf]
    %v155 = vld [vmem:[%s2 + $0x1cc] sm:$0xf]
    %v156 = vld [vmem:[%s2 + $0x1d0] sm:$0xf]
    %v157 = vld [vmem:[%s2 + $0x1d4] sm:$0xf]
    %v158 = vld [vmem:[%s2 + $0x1d8] sm:$0xf]
    %v159 = vld [vmem:[%s2 + $0x1dc] sm:$0xf]
    %v160 = vld [vmem:[%s2 + $0x1e0] sm:$0xf]
    %v161 = vld [vmem:[%s2 + $0x1e4] sm:$0xf]
    %v162 = vld [vmem:[%s2 + $0x1e8] sm:$0xf]
    %v163 = vld [vmem:[%s2 + $0x1ec] sm:$0xf]
    %v164 = vld [vmem:[%s2 + $0x1f0] sm:$0xf]
    %v165 = vld [vmem:[%s2 + $0x1f4] sm:$0xf]
    %v166 = vld [vmem:[%s2 + $0x1f8] sm:$0xf]
    %v167 = vld [vmem:[%s2 + $0x1fc] sm:$0xf]
    %v184 = vunpack.c.l.b16 %v40
    %v185 = vunpack.c.l.b16 %v41
    %v186 = vunpack.c.l.b16 %v42
    %v187 = vunpack.c.l.b16 %v43
    %v188 = vunpack.c.l.b16 %v44
    %v189 = vunpack.c.l.b16 %v45
    %v190 = vunpack.c.l.b16 %v46
    %v191 = vunpack.c.l.b16 %v47
    %v192 = vunpack.c.l.b16 %v48
    %v193 = vunpack.c.l.b16 %v49
    %v194 = vunpack.c.l.b16 %v50
    %v195 = vunpack.c.l.b16 %v51
    %v196 = vunpack.c.l.b16 %v52
    %v197 = vunpack.c.l.b16 %v53
    %v198 = vunpack.c.l.b16 %v54
    %v199 = vunpack.c.l.b16 %v55
    %v200 = vpack.c.b16 %v185, %v184
    %v201 = vpack.c.b16 %v187, %v186
    %v202 = vpack.c.b16 %v189, %v188
    %v203 = vpack.c.b16 %v191, %v190
    %v204 = vpack.c.b16 %v193, %v192
    %v205 = vpack.c.b16 %v195, %v194
    %v206 = vpack.c.b16 %v197, %v196
    %v207 = vpack.c.b16 %v199, %v198
    %216 = vmatprep.subr.bf16.mxu0 0
    %217 = vmatpush1.bf16.msra.mxu0 %v200
    %218 = vmatprep.subr.bf16.mxu0 0
    %219 = vmatpush1.bf16.msra.mxu0 %v201
    %220 = vmatprep.subr.bf16.mxu0 0
    %221 = vmatpush1.bf16.msra.mxu0 %v202
    %222 = vmatprep.subr.bf16.mxu0 0
    %223 = vmatpush1.bf16.msra.mxu0 %v203
    %224 = vmatprep.subr.bf16.mxu0 0
    %225 = vmatpush1.bf16.msra.mxu0 %v204
    %226 = vmatprep.subr.bf16.mxu0 0
    %227 = vmatpush1.bf16.msra.mxu0 %v205
    %228 = vmatprep.subr.bf16.mxu0 0
    %229 = vmatpush1.bf16.msra.mxu0 %v206
    %230 = vmatprep.subr.bf16.mxu0 0
    %231 = vmatpush1.bf16.msra.mxu0 %v207
    %232 = vmatprep.subr.bf16.mxu0 0
    %233 = vmatpush1.bf16.msra.mxu0 0
    %234 = vmatprep.subr.bf16.mxu0 0
    %235 = vmatpush1.bf16.msra.mxu0 0
    %236 = vmatprep.subr.bf16.mxu0 0
    %237 = vmatpush1.bf16.msra.mxu0 0
    %238 = vmatprep.subr.bf16.mxu0 0
    %239 = vmatpush1.bf16.msra.mxu0 0
    %240 = vmatprep.subr.bf16.mxu0 0
    %241 = vmatpush1.bf16.msra.mxu0 0
    %242 = vmatprep.subr.bf16.mxu0 0
    %243 = vmatpush1.bf16.msra.mxu0 0
    %244 = vmatprep.subr.bf16.mxu0 0
    %245 = vmatpush1.bf16.msra.mxu0 0
    %246 = vmatprep.subr.bf16.mxu0 0
    %247 = vmatpush1.bf16.msra.mxu0 0
    %248 = vmatprep.mubr.bf16.mxu0 0
    %249 = vmatmul.mubr.bf16.gmra.mrb[0].mxu0 %v38
    %v250 = vpop.f32.mrb[0].mxu0
    %v251 = vadd.f32 0.0, %v250
    %v252 = vpop.f32.mrb[0].mxu0
    %v253 = vpop.f32.mrb[0].mxu0
    %v254 = vadd.f32 0.0, %v253
    %v255 = vpop.f32.mrb[0].mxu0
    %256 = vmatprep.mubr.bf16.mxu0 0
    %257 = vmatmul.mubr.bf16.gmra.mrb[0].mxu0 %v39
    %v258 = vpop.f32.mrb[0].mxu0
    %v259 = vadd.f32 0.0, %v258
    %v260 = vpop.f32.mrb[0].mxu0
    %v261 = vpop.f32.mrb[0].mxu0
    %v262 = vadd.f32 0.0, %v261
    %v263 = vpop.f32.mrb[0].mxu0
    %264 = vdwg.mxu0
    %v281 = vunpack.c.l.b16 %v56
    %v282 = vunpack.c.l.b16 %v57
    %v283 = vunpack.c.l.b16 %v58
    %v284 = vunpack.c.l.b16 %v59
    %v285 = vunpack.c.l.b16 %v60
    %v286 = vunpack.c.l.b16 %v61
    %v287 = vunpack.c.l.b16 %v62
    %v288 = vunpack.c.l.b16 %v63
    %v289 = vunpack.c.l.b16 %v64
    %v290 = vunpack.c.l.b16 %v65
    %v291 = vunpack.c.l.b16 %v66
    %v292 = vunpack.c.l.b16 %v67
    %v293 = vunpack.c.l.b16 %v68
    %v294 = vunpack.c.l.b16 %v69
    %v295 = vunpack.c.l.b16 %v70
    %v296 = vunpack.c.l.b16 %v71
    %v297 = vpack.c.b16 %v282, %v281
    %v298 = vpack.c.b16 %v284, %v283
    %v299 = vpack.c.b16 %v286, %v285
    %v300 = vpack.c.b16 %v288, %v287
    %v301 = vpack.c.b16 %v290, %v289
    %v302 = vpack.c.b16 %v292, %v291
    %v303 = vpack.c.b16 %v294, %v293
    %v304 = vpack.c.b16 %v296, %v295
    %313 = vmatprep.subr.bf16.mxu0 0
    %314 = vmatpush1.bf16.msra.mxu0 %v297
    %315 = vmatprep.subr.bf16.mxu0 0
    %316 = vmatpush1.bf16.msra.mxu0 %v298
    %317 = vmatprep.subr.bf16.mxu0 0
    %318 = vmatpush1.bf16.msra.mxu0 %v299
    %319 = vmatprep.subr.bf16.mxu0 0
    %320 = vmatpush1.bf16.msra.mxu0 %v300
    %321 = vmatprep.subr.bf16.mxu0 0
    %322 = vmatpush1.bf16.msra.mxu0 %v301
    %323 = vmatprep.subr.bf16.mxu0 0
    %324 = vmatpush1.bf16.msra.mxu0 %v302
    %325 = vmatprep.subr.bf16.mxu0 0
    %326 = vmatpush1.bf16.msra.mxu0 %v303
    %327 = vmatprep.subr.bf16.mxu0 0
    %328 = vmatpush1.bf16.msra.mxu0 %v304
    %329 = vmatprep.subr.bf16.mxu0 0
    %330 = vmatpush1.bf16.msra.mxu0 0
    %331 = vmatprep.subr.bf16.mxu0 0
    %332 = vmatpush1.bf16.msra.mxu0 0
    %333 = vmatprep.subr.bf16.mxu0 0
    %334 = vmatpush1.bf16.msra.mxu0 0
    %335 = vmatprep.subr.bf16.mxu0 0
    %336 = vmatpush1.bf16.msra.mxu0 0
    %337 = vmatprep.subr.bf16.mxu0 0
    %338 = vmatpush1.bf16.msra.mxu0 0
    %339 = vmatprep.subr.bf16.mxu0 0
    %340 = vmatpush1.bf16.msra.mxu0 0
    %341 = vmatprep.subr.bf16.mxu0 0
    %342 = vmatpush1.bf16.msra.mxu0 0
    %343 = vmatprep.subr.bf16.mxu0 0
    %344 = vmatpush1.bf16.msra.mxu0 0
    %345 = vmatprep.mubr.bf16.mxu0 0
    %346 = vmatmul.mubr.bf16.gmra.mrb[0].mxu0 %v38
    %v347 = vpop.f32.mrb[0].mxu0
    %v348 = vadd.f32 0.0, %v347
    %v349 = vpop.f32.mrb[0].mxu0
    %v350 = vpop.f32.mrb[0].mxu0
    %v351 = vadd.f32 0.0, %v350
    %v352 = vpop.f32.mrb[0].mxu0
    %353 = vmatprep.mubr.bf16.mxu0 0
    %354 = vmatmul.mubr.bf16.gmra.mrb[0].mxu0 %v39
    %v355 = vpop.f32.mrb[0].mxu0
    %v356 = vadd.f32 0.0, %v355
    %v357 = vpop.f32.mrb[0].mxu0
    %v358 = vpop.f32.mrb[0].mxu0
    %v359 = vadd.f32 0.0, %v358
    %v360 = vpop.f32.mrb[0].mxu0
    %361 = vdwg.mxu0
    %v378 = vunpack.c.l.b16 %v72
    %v379 = vunpack.c.l.b16 %v73
    %v380 = vunpack.c.l.b16 %v74
    %v381 = vunpack.c.l.b16 %v75
    %v382 = vunpack.c.l.b16 %v76
    %v383 = vunpack.c.l.b16 %v77
    %v384 = vunpack.c.l.b16 %v78
    %v385 = vunpack.c.l.b16 %v79
    %v386 = vunpack.c.l.b16 %v80
    %v387 = vunpack.c.l.b16 %v81
    %v388 = vunpack.c.l.b16 %v82
    %v389 = vunpack.c.l.b16 %v83
    %v390 = vunpack.c.l.b16 %v84
    %v391 = vunpack.c.l.b16 %v85
    %v392 = vunpack.c.l.b16 %v86
    %v393 = vunpack.c.l.b16 %v87
    %v394 = vpack.c.b16 %v379, %v378
    %v395 = vpack.c.b16 %v381, %v380
    %v396 = vpack.c.b16 %v383, %v382
    %v397 = vpack.c.b16 %v385, %v384
    %v398 = vpack.c.b16 %v387, %v386
    %v399 = vpack.c.b16 %v389, %v388
    %v400 = vpack.c.b16 %v391, %v390
    %v401 = vpack.c.b16 %v393, %v392
    %410 = vmatprep.subr.bf16.mxu0 0
    %411 = vmatpush1.bf16.msra.mxu0 %v394
    %412 = vmatprep.subr.bf16.mxu0 0
    %413 = vmatpush1.bf16.msra.mxu0 %v395
    %414 = vmatprep.subr.bf16.mxu0 0
    %415 = vmatpush1.bf16.msra.mxu0 %v396
    %416 = vmatprep.subr.bf16.mxu0 0
    %417 = vmatpush1.bf16.msra.mxu0 %v397
    %418 = vmatprep.subr.bf16.mxu0 0
    %419 = vmatpush1.bf16.msra.mxu0 %v398
    %420 = vmatprep.subr.bf16.mxu0 0
    %421 = vmatpush1.bf16.msra.mxu0 %v399
    %422 = vmatprep.subr.bf16.mxu0 0
    %423 = vmatpush1.bf16.msra.mxu0 %v400
    %424 = vmatprep.subr.bf16.mxu0 0
    %425 = vmatpush1.bf16.msra.mxu0 %v401
    %426 = vmatprep.subr.bf16.mxu0 0
    %427 = vmatpush1.bf16.msra.mxu0 0
    %428 = vmatprep.subr.bf16.mxu0 0
    %429 = vmatpush1.bf16.msra.mxu0 0
    %430 = vmatprep.subr.bf16.mxu0 0
    %431 = vmatpush1.bf16.msra.mxu0 0
    %432 = vmatprep.subr.bf16.mxu0 0
    %433 = vmatpush1.bf16.msra.mxu0 0
    %434 = vmatprep.subr.bf16.mxu0 0
    %435 = vmatpush1.bf16.msra.mxu0 0
    %436 = vmatprep.subr.bf16.mxu0 0
    %437 = vmatpush1.bf16.msra.mxu0 0
    %438 = vmatprep.subr.bf16.mxu0 0
    %439 = vmatpush1.bf16.msra.mxu0 0
    %440 = vmatprep.subr.bf16.mxu0 0
    %441 = vmatpush1.bf16.msra.mxu0 0
    %442 = vmatprep.mubr.bf16.mxu0 0
    %443 = vmatmul.mubr.bf16.gmra.mrb[0].mxu0 %v38
    %v444 = vpop.f32.mrb[0].mxu0
    %v445 = vadd.f32 0.0, %v444
    %v446 = vpop.f32.mrb[0].mxu0
    %v447 = vpop.f32.mrb[0].mxu0
    %v448 = vadd.f32 0.0, %v447
    %v449 = vpop.f32.mrb[0].mxu0
    %450 = vmatprep.mubr.bf16.mxu0 0
    %451 = vmatmul.mubr.bf16.gmra.mrb[0].mxu0 %v39
    %v452 = vpop.f32.mrb[0].mxu0
    %v453 = vadd.f32 0.0, %v452
    %v454 = vpop.f32.mrb[0].mxu0
    %v455 = vpop.f32.mrb[0].mxu0
    %v456 = vadd.f32 0.0, %v455
    %v457 = vpop.f32.mrb[0].mxu0
    %458 = vdwg.mxu0
    %v475 = vunpack.c.l.b16 %v88
    %v476 = vunpack.c.l.b16 %v89
    %v477 = vunpack.c.l.b16 %v90
    %v478 = vunpack.c.l.b16 %v91
    %v479 = vunpack.c.l.b16 %v92
    %v480 = vunpack.c.l.b16 %v93
    %v481 = vunpack.c.l.b16 %v94
    %v482 = vunpack.c.l.b16 %v95
    %v483 = vunpack.c.l.b16 %v96
    %v484 = vunpack.c.l.b16 %v97
    %v485 = vunpack.c.l.b16 %v98
    %v486 = vunpack.c.l.b16 %v99
    %v487 = vunpack.c.l.b16 %v100
    %v488 = vunpack.c.l.b16 %v101
    %v489 = vunpack.c.l.b16 %v102
    %v490 = vunpack.c.l.b16 %v103
    %v491 = vpack.c.b16 %v476, %v475
    %v492 = vpack.c.b16 %v478, %v477
    %v493 = vpack.c.b16 %v480, %v479
    %v494 = vpack.c.b16 %v482, %v481
    %v495 = vpack.c.b16 %v484, %v483
    %v496 = vpack.c.b16 %v486, %v485
    %v497 = vpack.c.b16 %v488, %v487
    %v498 = vpack.c.b16 %v490, %v489
    %507 = vmatprep.subr.bf16.mxu0 0
    %508 = vmatpush1.bf16.msra.mxu0 %v491
    %509 = vmatprep.subr.bf16.mxu0 0
    %510 = vmatpush1.bf16.msra.mxu0 %v492
    %511 = vmatprep.subr.bf16.mxu0 0
    %512 = vmatpush1.bf16.msra.mxu0 %v493
    %513 = vmatprep.subr.bf16.mxu0 0
    %514 = vmatpush1.bf16.msra.mxu0 %v494
    %515 = vmatprep.subr.bf16.mxu0 0
    %516 = vmatpush1.bf16.msra.mxu0 %v495
    %517 = vmatprep.subr.bf16.mxu0 0
    %518 = vmatpush1.bf16.msra.mxu0 %v496
    %519 = vmatprep.subr.bf16.mxu0 0
    %520 = vmatpush1.bf16.msra.mxu0 %v497
    %521 = vmatprep.subr.bf16.mxu0 0
    %522 = vmatpush1.bf16.msra.mxu0 %v498
    %523 = vmatprep.subr.bf16.mxu0 0
    %524 = vmatpush1.bf16.msra.mxu0 0
    %525 = vmatprep.subr.bf16.mxu0 0
    %526 = vmatpush1.bf16.msra.mxu0 0
    %527 = vmatprep.subr.bf16.mxu0 0
    %528 = vmatpush1.bf16.msra.mxu0 0
    %529 = vmatprep.subr.bf16.mxu0 0
    %530 = vmatpush1.bf16.msra.mxu0 0
    %531 = vmatprep.subr.bf16.mxu0 0
    %532 = vmatpush1.bf16.msra.mxu0 0
    %533 = vmatprep.subr.bf16.mxu0 0
    %534 = vmatpush1.bf16.msra.mxu0 0
    %535 = vmatprep.subr.bf16.mxu0 0
    %536 = vmatpush1.bf16.msra.mxu0 0
    %537 = vmatprep.subr.bf16.mxu0 0
    %538 = vmatpush1.bf16.msra.mxu0 0
    %539 = vmatprep.mubr.bf16.mxu0 0
    %540 = vmatmul.mubr.bf16.gmra.mrb[0].mxu0 %v38
    %v541 = vpop.f32.mrb[0].mxu0
    %v542 = vadd.f32 0.0, %v541
    %v543 = vpop.f32.mrb[0].mxu0
    %v544 = vpop.f32.mrb[0].mxu0
    %v545 = vadd.f32 0.0, %v544
    %v546 = vpop.f32.mrb[0].mxu0
    %547 = vmatprep.mubr.bf16.mxu0 0
    %548 = vmatmul.mubr.bf16.gmra.mrb[0].mxu0 %v39
    %v549 = vpop.f32.mrb[0].mxu0
    %v550 = vadd.f32 0.0, %v549
    %v551 = vpop.f32.mrb[0].mxu0
    %v552 = vpop.f32.mrb[0].mxu0
    %v553 = vadd.f32 0.0, %v552
    %v554 = vpop.f32.mrb[0].mxu0
    %555 = vdwg.mxu0
    %v572 = vunpack.c.l.b16 %v104
    %v573 = vunpack.c.l.b16 %v105
    %v574 = vunpack.c.l.b16 %v106
    %v575 = vunpack.c.l.b16 %v107
    %v576 = vunpack.c.l.b16 %v108
    %v577 = vunpack.c.l.b16 %v109
    %v578 = vunpack.c.l.b16 %v110
    %v579 = vunpack.c.l.b16 %v111
    %v580 = vunpack.c.l.b16 %v112
    %v581 = vunpack.c.l.b16 %v113
    %v582 = vunpack.c.l.b16 %v114
    %v583 = vunpack.c.l.b16 %v115
    %v584 = vunpack.c.l.b16 %v116
    %v585 = vunpack.c.l.b16 %v117
    %v586 = vunpack.c.l.b16 %v118
    %v587 = vunpack.c.l.b16 %v119
    %v588 = vpack.c.b16 %v573, %v572
    %v589 = vpack.c.b16 %v575, %v574
    %v590 = vpack.c.b16 %v577, %v576
    %v591 = vpack.c.b16 %v579, %v578
    %v592 = vpack.c.b16 %v581, %v580
    %v593 = vpack.c.b16 %v583, %v582
    %v594 = vpack.c.b16 %v585, %v584
    %v595 = vpack.c.b16 %v587, %v586
    %604 = vmatprep.subr.bf16.mxu0 0
    %605 = vmatpush1.bf16.msra.mxu0 %v588
    %606 = vmatprep.subr.bf16.mxu0 0
    %607 = vmatpush1.bf16.msra.mxu0 %v589
    %608 = vmatprep.subr.bf16.mxu0 0
    %609 = vmatpush1.bf16.msra.mxu0 %v590
    %610 = vmatprep.subr.bf16.mxu0 0
    %611 = vmatpush1.bf16.msra.mxu0 %v591
    %612 = vmatprep.subr.bf16.mxu0 0
    %613 = vmatpush1.bf16.msra.mxu0 %v592
    %614 = vmatprep.subr.bf16.mxu0 0
    %615 = vmatpush1.bf16.msra.mxu0 %v593
    %616 = vmatprep.subr.bf16.mxu0 0
    %617 = vmatpush1.bf16.msra.mxu0 %v594
    %618 = vmatprep.subr.bf16.mxu0 0
    %619 = vmatpush1.bf16.msra.mxu0 %v595
    %620 = vmatprep.subr.bf16.mxu0 0
    %621 = vmatpush1.bf16.msra.mxu0 0
    %622 = vmatprep.subr.bf16.mxu0 0
    %623 = vmatpush1.bf16.msra.mxu0 0
    %624 = vmatprep.subr.bf16.mxu0 0
    %625 = vmatpush1.bf16.msra.mxu0 0
    %626 = vmatprep.subr.bf16.mxu0 0
    %627 = vmatpush1.bf16.msra.mxu0 0
    %628 = vmatprep.subr.bf16.mxu0 0
    %629 = vmatpush1.bf16.msra.mxu0 0
    %630 = vmatprep.subr.bf16.mxu0 0
    %631 = vmatpush1.bf16.msra.mxu0 0
    %632 = vmatprep.subr.bf16.mxu0 0
    %633 = vmatpush1.bf16.msra.mxu0 0
    %634 = vmatprep.subr.bf16.mxu0 0
    %635 = vmatpush1.bf16.msra.mxu0 0
    %636 = vmatprep.mubr.bf16.mxu0 0
    %637 = vmatmul.mubr.bf16.gmra.mrb[0].mxu0 %v38
    %v638 = vpop.f32.mrb[0].mxu0
    %v639 = vadd.f32 0.0, %v638
    %v640 = vpop.f32.mrb[0].mxu0
    %v641 = vpop.f32.mrb[0].mxu0
    %v642 = vadd.f32 0.0, %v641
    %v643 = vpop.f32.mrb[0].mxu0
    %644 = vmatprep.mubr.bf16.mxu0 0
    %645 = vmatmul.mubr.bf16.gmra.mrb[0].mxu0 %v39
    %v646 = vpop.f32.mrb[0].mxu0
    %v647 = vadd.f32 0.0, %v646
    %v648 = vpop.f32.mrb[0].mxu0
    %v649 = vpop.f32.mrb[0].mxu0
    %v650 = vadd.f32 0.0, %v649
    %v651 = vpop.f32.mrb[0].mxu0
    %652 = vdwg.mxu0
    %v669 = vunpack.c.l.b16 %v120
    %v670 = vunpack.c.l.b16 %v121
    %v671 = vunpack.c.l.b16 %v122
    %v672 = vunpack.c.l.b16 %v123
    %v673 = vunpack.c.l.b16 %v124
    %v674 = vunpack.c.l.b16 %v125
    %v675 = vunpack.c.l.b16 %v126
    %v676 = vunpack.c.l.b16 %v127
    %v677 = vunpack.c.l.b16 %v128
    %v678 = vunpack.c.l.b16 %v129
    %v679 = vunpack.c.l.b16 %v130
    %v680 = vunpack.c.l.b16 %v131
    %v681 = vunpack.c.l.b16 %v132
    %v682 = vunpack.c.l.b16 %v133
    %v683 = vunpack.c.l.b16 %v134
    %v684 = vunpack.c.l.b16 %v135
    %v685 = vpack.c.b16 %v670, %v669
    %v686 = vpack.c.b16 %v672, %v671
    %v687 = vpack.c.b16 %v674, %v673
    %v688 = vpack.c.b16 %v676, %v675
    %v689 = vpack.c.b16 %v678, %v677
    %v690 = vpack.c.b16 %v680, %v679
    %v691 = vpack.c.b16 %v682, %v681
    %v692 = vpack.c.b16 %v684, %v683
    %701 = vmatprep.subr.bf16.mxu0 0
    %702 = vmatpush1.bf16.msra.mxu0 %v685
    %703 = vmatprep.subr.bf16.mxu0 0
    %704 = vmatpush1.bf16.msra.mxu0 %v686
    %705 = vmatprep.subr.bf16.mxu0 0
    %706 = vmatpush1.bf16.msra.mxu0 %v687
    %707 = vmatprep.subr.bf16.mxu0 0
    %708 = vmatpush1.bf16.msra.mxu0 %v688
    %709 = vmatprep.subr.bf16.mxu0 0
    %710 = vmatpush1.bf16.msra.mxu0 %v689
    %711 = vmatprep.subr.bf16.mxu0 0
    %712 = vmatpush1.bf16.msra.mxu0 %v690
    %713 = vmatprep.subr.bf16.mxu0 0
    %714 = vmatpush1.bf16.msra.mxu0 %v691
    %715 = vmatprep.subr.bf16.mxu0 0
    %716 = vmatpush1.bf16.msra.mxu0 %v692
    %717 = vmatprep.subr.bf16.mxu0 0
    %718 = vmatpush1.bf16.msra.mxu0 0
    %719 = vmatprep.subr.bf16.mxu0 0
    %720 = vmatpush1.bf16.msra.mxu0 0
    %721 = vmatprep.subr.bf16.mxu0 0
    %722 = vmatpush1.bf16.msra.mxu0 0
    %723 = vmatprep.subr.bf16.mxu0 0
    %724 = vmatpush1.bf16.msra.mxu0 0
    %725 = vmatprep.subr.bf16.mxu0 0
    %726 = vmatpush1.bf16.msra.mxu0 0
    %727 = vmatprep.subr.bf16.mxu0 0
    %728 = vmatpush1.bf16.msra.mxu0 0
    %729 = vmatprep.subr.bf16.mxu0 0
    %730 = vmatpush1.bf16.msra.mxu0 0
    %731 = vmatprep.subr.bf16.mxu0 0
    %732 = vmatpush1.bf16.msra.mxu0 0
    %733 = vmatprep.mubr.bf16.mxu0 0
    %734 = vmatmul.mubr.bf16.gmra.mrb[0].mxu0 %v38
    %v735 = vpop.f32.mrb[0].mxu0
    %v736 = vadd.f32 0.0, %v735
    %v737 = vpop.f32.mrb[0].mxu0
    %v738 = vpop.f32.mrb[0].mxu0
    %v739 = vadd.f32 0.0, %v738
    %v740 = vpop.f32.mrb[0].mxu0
    %741 = vmatprep.mubr.bf16.mxu0 0
    %742 = vmatmul.mubr.bf16.gmra.mrb[0].mxu0 %v39
    %v743 = vpop.f32.mrb[0].mxu0
    %v744 = vadd.f32 0.0, %v743
    %v745 = vpop.f32.mrb[0].mxu0
    %v746 = vpop.f32.mrb[0].mxu0
    %v747 = vadd.f32 0.0, %v746
    %v748 = vpop.f32.mrb[0].mxu0
    %749 = vdwg.mxu0
    %v766 = vunpack.c.l.b16 %v136
    %v767 = vunpack.c.l.b16 %v137
    %v768 = vunpack.c.l.b16 %v138
    %v769 = vunpack.c.l.b16 %v139
    %v770 = vunpack.c.l.b16 %v140
    %v771 = vunpack.c.l.b16 %v141
    %v772 = vunpack.c.l.b16 %v142
    %v773 = vunpack.c.l.b16 %v143
    %v774 = vunpack.c.l.b16 %v144
    %v775 = vunpack.c.l.b16 %v145
    %v776 = vunpack.c.l.b16 %v146
    %v777 = vunpack.c.l.b16 %v147
    %v778 = vunpack.c.l.b16 %v148
    %v779 = vunpack.c.l.b16 %v149
    %v780 = vunpack.c.l.b16 %v150
    %v781 = vunpack.c.l.b16 %v151
    %v782 = vpack.c.b16 %v767, %v766
    %v783 = vpack.c.b16 %v769, %v768
    %v784 = vpack.c.b16 %v771, %v770
    %v785 = vpack.c.b16 %v773, %v772
    %v786 = vpack.c.b16 %v775, %v774
    %v787 = vpack.c.b16 %v777, %v776
    %v788 = vpack.c.b16 %v779, %v778
    %v789 = vpack.c.b16 %v781, %v780
    %798 = vmatprep.subr.bf16.mxu0 0
    %799 = vmatpush1.bf16.msra.mxu0 %v782
    %800 = vmatprep.subr.bf16.mxu0 0
    %801 = vmatpush1.bf16.msra.mxu0 %v783
    %802 = vmatprep.subr.bf16.mxu0 0
    %803 = vmatpush1.bf16.msra.mxu0 %v784
    %804 = vmatprep.subr.bf16.mxu0 0
    %805 = vmatpush1.bf16.msra.mxu0 %v785
    %806 = vmatprep.subr.bf16.mxu0 0
    %807 = vmatpush1.bf16.msra.mxu0 %v786
    %808 = vmatprep.subr.bf16.mxu0 0
    %809 = vmatpush1.bf16.msra.mxu0 %v787
    %810 = vmatprep.subr.bf16.mxu0 0
    %811 = vmatpush1.bf16.msra.mxu0 %v788
    %812 = vmatprep.subr.bf16.mxu0 0
    %813 = vmatpush1.bf16.msra.mxu0 %v789
    %814 = vmatprep.subr.bf16.mxu0 0
    %815 = vmatpush1.bf16.msra.mxu0 0
    %816 = vmatprep.subr.bf16.mxu0 0
    %817 = vmatpush1.bf16.msra.mxu0 0
    %818 = vmatprep.subr.bf16.mxu0 0
    %819 = vmatpush1.bf16.msra.mxu0 0
    %820 = vmatprep.subr.bf16.mxu0 0
    %821 = vmatpush1.bf16.msra.mxu0 0
    %822 = vmatprep.subr.bf16.mxu0 0
    %823 = vmatpush1.bf16.msra.mxu0 0
    %824 = vmatprep.subr.bf16.mxu0 0
    %825 = vmatpush1.bf16.msra.mxu0 0
    %826 = vmatprep.subr.bf16.mxu0 0
    %827 = vmatpush1.bf16.msra.mxu0 0
    %828 = vmatprep.subr.bf16.mxu0 0
    %829 = vmatpush1.bf16.msra.mxu0 0
    %830 = vmatprep.mubr.bf16.mxu0 0
    %831 = vmatmul.mubr.bf16.gmra.mrb[0].mxu0 %v38
    %v832 = vpop.f32.mrb[0].mxu0
    %v833 = vadd.f32 0.0, %v832
    %v834 = vpop.f32.mrb[0].mxu0
    %v835 = vpop.f32.mrb[0].mxu0
    %v836 = vadd.f32 0.0, %v835
    %v837 = vpop.f32.mrb[0].mxu0
    %838 = vmatprep.mubr.bf16.mxu0 0
    %839 = vmatmul.mubr.bf16.gmra.mrb[0].mxu0 %v39
    %v840 = vpop.f32.mrb[0].mxu0
    %v841 = vadd.f32 0.0, %v840
    %v842 = vpop.f32.mrb[0].mxu0
    %v843 = vpop.f32.mrb[0].mxu0
    %v844 = vadd.f32 0.0, %v843
    %v845 = vpop.f32.mrb[0].mxu0
    %846 = vdwg.mxu0
    %v863 = vunpack.c.l.b16 %v152
    %v864 = vunpack.c.l.b16 %v153
    %v865 = vunpack.c.l.b16 %v154
    %v866 = vunpack.c.l.b16 %v155
    %v867 = vunpack.c.l.b16 %v156
    %v868 = vunpack.c.l.b16 %v157
    %v869 = vunpack.c.l.b16 %v158
    %v870 = vunpack.c.l.b16 %v159
    %v871 = vunpack.c.l.b16 %v160
    %v872 = vunpack.c.l.b16 %v161
    %v873 = vunpack.c.l.b16 %v162
    %v874 = vunpack.c.l.b16 %v163
    %v875 = vunpack.c.l.b16 %v164
    %v876 = vunpack.c.l.b16 %v165
    %v877 = vunpack.c.l.b16 %v166
    %v878 = vunpack.c.l.b16 %v167
    %v879 = vpack.c.b16 %v864, %v863
    %v880 = vpack.c.b16 %v866, %v865
    %v881 = vpack.c.b16 %v868, %v867
    %v882 = vpack.c.b16 %v870, %v869
    %v883 = vpack.c.b16 %v872, %v871
    %v884 = vpack.c.b16 %v874, %v873
    %v885 = vpack.c.b16 %v876, %v875
    %v886 = vpack.c.b16 %v878, %v877
    %895 = vmatprep.subr.bf16.mxu0 0
    %896 = vmatpush1.bf16.msra.mxu0 %v879
    %897 = vmatprep.subr.bf16.mxu0 0
    %898 = vmatpush1.bf16.msra.mxu0 %v880
    %899 = vmatprep.subr.bf16.mxu0 0
    %900 = vmatpush1.bf16.msra.mxu0 %v881
    %901 = vmatprep.subr.bf16.mxu0 0
    %902 = vmatpush1.bf16.msra.mxu0 %v882
    %903 = vmatprep.subr.bf16.mxu0 0
    %904 = vmatpush1.bf16.msra.mxu0 %v883
    %905 = vmatprep.subr.bf16.mxu0 0
    %906 = vmatpush1.bf16.msra.mxu0 %v884
    %907 = vmatprep.subr.bf16.mxu0 0
    %908 = vmatpush1.bf16.msra.mxu0 %v885
    %909 = vmatprep.subr.bf16.mxu0 0
    %910 = vmatpush1.bf16.msra.mxu0 %v886
    %911 = vmatprep.subr.bf16.mxu0 0
    %912 = vmatpush1.bf16.msra.mxu0 0
    %913 = vmatprep.subr.bf16.mxu0 0
    %914 = vmatpush1.bf16.msra.mxu0 0
    %915 = vmatprep.subr.bf16.mxu0 0
    %916 = vmatpush1.bf16.msra.mxu0 0
    %917 = vmatprep.subr.bf16.mxu0 0
    %918 = vmatpush1.bf16.msra.mxu0 0
    %919 = vmatprep.subr.bf16.mxu0 0
    %920 = vmatpush1.bf16.msra.mxu0 0
    %921 = vmatprep.subr.bf16.mxu0 0
    %922 = vmatpush1.bf16.msra.mxu0 0
    %923 = vmatprep.subr.bf16.mxu0 0
    %924 = vmatpush1.bf16.msra.mxu0 0
    %925 = vmatprep.subr.bf16.mxu0 0
    %926 = vmatpush1.bf16.msra.mxu0 0
    %927 = vmatprep.mubr.bf16.mxu0 0
    %928 = vmatmul.mubr.bf16.gmra.mrb[0].mxu0 %v38
    %v929 = vpop.f32.mrb[0].mxu0
    %v930 = vadd.f32 0.0, %v929
    %v931 = vpop.f32.mrb[0].mxu0
    %v932 = vpop.f32.mrb[0].mxu0
    %v933 = vadd.f32 0.0, %v932
    %v934 = vpop.f32.mrb[0].mxu0
    %935 = vmatprep.mubr.bf16.mxu0 0
    %936 = vmatmul.mubr.bf16.gmra.mrb[0].mxu0 %v39
    %v937 = vpop.f32.mrb[0].mxu0
    %v938 = vadd.f32 0.0, %v937
    %v939 = vpop.f32.mrb[0].mxu0
    %v940 = vpop.f32.mrb[0].mxu0
    %v941 = vadd.f32 0.0, %v940
    %v942 = vpop.f32.mrb[0].mxu0
    %943 = vdwg.mxu0
    %v944 = vld [vmem:[%s3] sm:$0xf]
    %v945 = vld [vmem:[%s3 + $0x4] sm:$0xf]
    %v946 = vld [vmem:[%s3 + $0x8] sm:$0xf]
    %v947 = vld [vmem:[%s3 + $0xc] sm:$0xf]
    %v948 = vld [vmem:[%s3 + $0x10] sm:$0xf]
    %v949 = vld [vmem:[%s3 + $0x14] sm:$0xf]
    %v950 = vld [vmem:[%s3 + $0x18] sm:$0xf]
    %v951 = vld [vmem:[%s3 + $0x1c] sm:$0xf]
    %v952 = vld [vmem:[%s3 + $0x20] sm:$0xf]
    %v953 = vld [vmem:[%s3 + $0x24] sm:$0xf]
    %v954 = vld [vmem:[%s3 + $0x28] sm:$0xf]
    %v955 = vld [vmem:[%s3 + $0x2c] sm:$0xf]
    %v956 = vld [vmem:[%s3 + $0x30] sm:$0xf]
    %v957 = vld [vmem:[%s3 + $0x34] sm:$0xf]
    %v958 = vld [vmem:[%s3 + $0x38] sm:$0xf]
    %v959 = vld [vmem:[%s3 + $0x3c] sm:$0xf]
    %v960 = vld [vmem:[%s3 + $0x40] sm:$0xf]
    %v961 = vld [vmem:[%s3 + $0x44] sm:$0xf]
    %v962 = vld [vmem:[%s3 + $0x48] sm:$0xf]
    %v963 = vld [vmem:[%s3 + $0x4c] sm:$0xf]
    %v964 = vld [vmem:[%s3 + $0x50] sm:$0xf]
    %v965 = vld [vmem:[%s3 + $0x54] sm:$0xf]
    %v966 = vld [vmem:[%s3 + $0x58] sm:$0xf]
    %v967 = vld [vmem:[%s3 + $0x5c] sm:$0xf]
    %v968 = vld [vmem:[%s3 + $0x60] sm:$0xf]
    %v969 = vld [vmem:[%s3 + $0x64] sm:$0xf]
    %v970 = vld [vmem:[%s3 + $0x68] sm:$0xf]
    %v971 = vld [vmem:[%s3 + $0x6c] sm:$0xf]
    %v972 = vld [vmem:[%s3 + $0x70] sm:$0xf]
    %v973 = vld [vmem:[%s3 + $0x74] sm:$0xf]
    %v974 = vld [vmem:[%s3 + $0x78] sm:$0xf]
    %v975 = vld [vmem:[%s3 + $0x7c] sm:$0xf]
    %v976 = vld [vmem:[%s3 + $0x80] sm:$0xf]
    %v977 = vld [vmem:[%s3 + $0x84] sm:$0xf]
    %v978 = vld [vmem:[%s3 + $0x88] sm:$0xf]
    %v979 = vld [vmem:[%s3 + $0x8c] sm:$0xf]
    %v980 = vld [vmem:[%s3 + $0x90] sm:$0xf]
    %v981 = vld [vmem:[%s3 + $0x94] sm:$0xf]
    %v982 = vld [vmem:[%s3 + $0x98] sm:$0xf]
    %v983 = vld [vmem:[%s3 + $0x9c] sm:$0xf]
    %v984 = vld [vmem:[%s3 + $0xa0] sm:$0xf]
    %v985 = vld [vmem:[%s3 + $0xa4] sm:$0xf]
    %v986 = vld [vmem:[%s3 + $0xa8] sm:$0xf]
    %v987 = vld [vmem:[%s3 + $0xac] sm:$0xf]
    %v988 = vld [vmem:[%s3 + $0xb0] sm:$0xf]
    %v989 = vld [vmem:[%s3 + $0xb4] sm:$0xf]
    %v990 = vld [vmem:[%s3 + $0xb8] sm:$0xf]
    %v991 = vld [vmem:[%s3 + $0xbc] sm:$0xf]
    %v992 = vld [vmem:[%s3 + $0xc0] sm:$0xf]
    %v993 = vld [vmem:[%s3 + $0xc4] sm:$0xf]
    %v994 = vld [vmem:[%s3 + $0xc8] sm:$0xf]
    %v995 = vld [vmem:[%s3 + $0xcc] sm:$0xf]
    %v996 = vld [vmem:[%s3 + $0xd0] sm:$0xf]
    %v997 = vld [vmem:[%s3 + $0xd4] sm:$0xf]
    %v998 = vld [vmem:[%s3 + $0xd8] sm:$0xf]
    %v999 = vld [vmem:[%s3 + $0xdc] sm:$0xf]
    %v1000 = vld [vmem:[%s3 + $0xe0] sm:$0xf]
    %v1001 = vld [vmem:[%s3 + $0xe4] sm:$0xf]
    %v1002 = vld [vmem:[%s3 + $0xe8] sm:$0xf]
    %v1003 = vld [vmem:[%s3 + $0xec] sm:$0xf]
    %v1004 = vld [vmem:[%s3 + $0xf0] sm:$0xf]
    %v1005 = vld [vmem:[%s3 + $0xf4] sm:$0xf]
    %v1006 = vld [vmem:[%s3 + $0xf8] sm:$0xf]
    %v1007 = vld [vmem:[%s3 + $0xfc] sm:$0xf]
    %v1008 = vld [vmem:[%s3 + $0x100] sm:$0xf]
    %v1009 = vld [vmem:[%s3 + $0x104] sm:$0xf]
    %v1010 = vld [vmem:[%s3 + $0x108] sm:$0xf]
    %v1011 = vld [vmem:[%s3 + $0x10c] sm:$0xf]
    %v1012 = vld [vmem:[%s3 + $0x110] sm:$0xf]
    %v1013 = vld [vmem:[%s3 + $0x114] sm:$0xf]
    %v1014 = vld [vmem:[%s3 + $0x118] sm:$0xf]
    %v1015 = vld [vmem:[%s3 + $0x11c] sm:$0xf]
    %v1016 = vld [vmem:[%s3 + $0x120] sm:$0xf]
    %v1017 = vld [vmem:[%s3 + $0x124] sm:$0xf]
    %v1018 = vld [vmem:[%s3 + $0x128] sm:$0xf]
    %v1019 = vld [vmem:[%s3 + $0x12c] sm:$0xf]
    %v1020 = vld [vmem:[%s3 + $0x130] sm:$0xf]
    %v1021 = vld [vmem:[%s3 + $0x134] sm:$0xf]
    %v1022 = vld [vmem:[%s3 + $0x138] sm:$0xf]
    %v1023 = vld [vmem:[%s3 + $0x13c] sm:$0xf]
    %v1024 = vld [vmem:[%s3 + $0x140] sm:$0xf]
    %v1025 = vld [vmem:[%s3 + $0x144] sm:$0xf]
    %v1026 = vld [vmem:[%s3 + $0x148] sm:$0xf]
    %v1027 = vld [vmem:[%s3 + $0x14c] sm:$0xf]
    %v1028 = vld [vmem:[%s3 + $0x150] sm:$0xf]
    %v1029 = vld [vmem:[%s3 + $0x154] sm:$0xf]
    %v1030 = vld [vmem:[%s3 + $0x158] sm:$0xf]
    %v1031 = vld [vmem:[%s3 + $0x15c] sm:$0xf]
    %v1032 = vld [vmem:[%s3 + $0x160] sm:$0xf]
    %v1033 = vld [vmem:[%s3 + $0x164] sm:$0xf]
    %v1034 = vld [vmem:[%s3 + $0x168] sm:$0xf]
    %v1035 = vld [vmem:[%s3 + $0x16c] sm:$0xf]
    %v1036 = vld [vmem:[%s3 + $0x170] sm:$0xf]
    %v1037 = vld [vmem:[%s3 + $0x174] sm:$0xf]
    %v1038 = vld [vmem:[%s3 + $0x178] sm:$0xf]
    %v1039 = vld [vmem:[%s3 + $0x17c] sm:$0xf]
    %v1040 = vld [vmem:[%s3 + $0x180] sm:$0xf]
    %v1041 = vld [vmem:[%s3 + $0x184] sm:$0xf]
    %v1042 = vld [vmem:[%s3 + $0x188] sm:$0xf]
    %v1043 = vld [vmem:[%s3 + $0x18c] sm:$0xf]
    %v1044 = vld [vmem:[%s3 + $0x190] sm:$0xf]
    %v1045 = vld [vmem:[%s3 + $0x194] sm:$0xf]
    %v1046 = vld [vmem:[%s3 + $0x198] sm:$0xf]
    %v1047 = vld [vmem:[%s3 + $0x19c] sm:$0xf]
    %v1048 = vld [vmem:[%s3 + $0x1a0] sm:$0xf]
    %v1049 = vld [vmem:[%s3 + $0x1a4] sm:$0xf]
    %v1050 = vld [vmem:[%s3 + $0x1a8] sm:$0xf]
    %v1051 = vld [vmem:[%s3 + $0x1ac] sm:$0xf]
    %v1052 = vld [vmem:[%s3 + $0x1b0] sm:$0xf]
    %v1053 = vld [vmem:[%s3 + $0x1b4] sm:$0xf]
    %v1054 = vld [vmem:[%s3 + $0x1b8] sm:$0xf]
    %v1055 = vld [vmem:[%s3 + $0x1bc] sm:$0xf]
    %v1056 = vld [vmem:[%s3 + $0x1c0] sm:$0xf]
    %v1057 = vld [vmem:[%s3 + $0x1c4] sm:$0xf]
    %v1058 = vld [vmem:[%s3 + $0x1c8] sm:$0xf]
    %v1059 = vld [vmem:[%s3 + $0x1cc] sm:$0xf]
    %v1060 = vld [vmem:[%s3 + $0x1d0] sm:$0xf]
    %v1061 = vld [vmem:[%s3 + $0x1d4] sm:$0xf]
    %v1062 = vld [vmem:[%s3 + $0x1d8] sm:$0xf]
    %v1063 = vld [vmem:[%s3 + $0x1dc] sm:$0xf]
    %v1064 = vld [vmem:[%s3 + $0x1e0] sm:$0xf]
    %v1065 = vld [vmem:[%s3 + $0x1e4] sm:$0xf]
    %v1066 = vld [vmem:[%s3 + $0x1e8] sm:$0xf]
    %v1067 = vld [vmem:[%s3 + $0x1ec] sm:$0xf]
    %v1068 = vld [vmem:[%s3 + $0x1f0] sm:$0xf]
    %v1069 = vld [vmem:[%s3 + $0x1f4] sm:$0xf]
    %v1070 = vld [vmem:[%s3 + $0x1f8] sm:$0xf]
    %v1071 = vld [vmem:[%s3 + $0x1fc] sm:$0xf]
    %v1088 = vunpack.c.l.b16 %v944
    %v1089 = vunpack.c.l.b16 %v945
    %v1090 = vunpack.c.l.b16 %v946
    %v1091 = vunpack.c.l.b16 %v947
    %v1092 = vunpack.c.l.b16 %v948
    %v1093 = vunpack.c.l.b16 %v949
    %v1094 = vunpack.c.l.b16 %v950
    %v1095 = vunpack.c.l.b16 %v951
    %v1096 = vunpack.c.l.b16 %v952
    %v1097 = vunpack.c.l.b16 %v953
    %v1098 = vunpack.c.l.b16 %v954
    %v1099 = vunpack.c.l.b16 %v955
    %v1100 = vunpack.c.l.b16 %v956
    %v1101 = vunpack.c.l.b16 %v957
    %v1102 = vunpack.c.l.b16 %v958
    %v1103 = vunpack.c.l.b16 %v959
    %v1104 = vpack.c.b16 %v1089, %v1088
    %v1105 = vpack.c.b16 %v1091, %v1090
    %v1106 = vpack.c.b16 %v1093, %v1092
    %v1107 = vpack.c.b16 %v1095, %v1094
    %v1108 = vpack.c.b16 %v1097, %v1096
    %v1109 = vpack.c.b16 %v1099, %v1098
    %v1110 = vpack.c.b16 %v1101, %v1100
    %v1111 = vpack.c.b16 %v1103, %v1102
    %1120 = vmatprep.subr.bf16.mxu0 0
    %1121 = vmatpush1.bf16.msra.mxu0 %v1104
    %1122 = vmatprep.subr.bf16.mxu0 0
    %1123 = vmatpush1.bf16.msra.mxu0 %v1105
    %1124 = vmatprep.subr.bf16.mxu0 0
    %1125 = vmatpush1.bf16.msra.mxu0 %v1106
    %1126 = vmatprep.subr.bf16.mxu0 0
    %1127 = vmatpush1.bf16.msra.mxu0 %v1107
    %1128 = vmatprep.subr.bf16.mxu0 0
    %1129 = vmatpush1.bf16.msra.mxu0 %v1108
    %1130 = vmatprep.subr.bf16.mxu0 0
    %1131 = vmatpush1.bf16.msra.mxu0 %v1109
    %1132 = vmatprep.subr.bf16.mxu0 0
    %1133 = vmatpush1.bf16.msra.mxu0 %v1110
    %1134 = vmatprep.subr.bf16.mxu0 0
    %1135 = vmatpush1.bf16.msra.mxu0 %v1111
    %1136 = vmatprep.subr.bf16.mxu0 0
    %1137 = vmatpush1.bf16.msra.mxu0 0
    %1138 = vmatprep.subr.bf16.mxu0 0
    %1139 = vmatpush1.bf16.msra.mxu0 0
    %1140 = vmatprep.subr.bf16.mxu0 0
    %1141 = vmatpush1.bf16.msra.mxu0 0
    %1142 = vmatprep.subr.bf16.mxu0 0
    %1143 = vmatpush1.bf16.msra.mxu0 0
    %1144 = vmatprep.subr.bf16.mxu0 0
    %1145 = vmatpush1.bf16.msra.mxu0 0
    %1146 = vmatprep.subr.bf16.mxu0 0
    %1147 = vmatpush1.bf16.msra.mxu0 0
    %1148 = vmatprep.subr.bf16.mxu0 0
    %1149 = vmatpush1.bf16.msra.mxu0 0
    %1150 = vmatprep.subr.bf16.mxu0 0
    %1151 = vmatpush1.bf16.msra.mxu0 0
    %1152 = vmatprep.mubr.bf16.mxu0 0
    %1153 = vmatmul.mubr.bf16.gmra.mrb[0].mxu0 %v38
    %v1154 = vpop.f32.mrb[0].mxu0
    %v1155 = vadd.f32 0.0, %v1154
    %v1156 = vpop.f32.mrb[0].mxu0
    %v1157 = vpop.f32.mrb[0].mxu0
    %v1158 = vadd.f32 0.0, %v1157
    %v1159 = vpop.f32.mrb[0].mxu0
    %1160 = vmatprep.mubr.bf16.mxu0 0
    %1161 = vmatmul.mubr.bf16.gmra.mrb[0].mxu0 %v39
    %v1162 = vpop.f32.mrb[0].mxu0
    %v1163 = vadd.f32 0.0, %v1162
    %v1164 = vpop.f32.mrb[0].mxu0
    %v1165 = vpop.f32.mrb[0].mxu0
    %v1166 = vadd.f32 0.0, %v1165
    %v1167 = vpop.f32.mrb[0].mxu0
    %1168 = vdwg.mxu0
    %v1185 = vunpack.c.l.b16 %v960
    %v1186 = vunpack.c.l.b16 %v961
    %v1187 = vunpack.c.l.b16 %v962
    %v1188 = vunpack.c.l.b16 %v963
    %v1189 = vunpack.c.l.b16 %v964
    %v1190 = vunpack.c.l.b16 %v965
    %v1191 = vunpack.c.l.b16 %v966
    %v1192 = vunpack.c.l.b16 %v967
    %v1193 = vunpack.c.l.b16 %v968
    %v1194 = vunpack.c.l.b16 %v969
    %v1195 = vunpack.c.l.b16 %v970
    %v1196 = vunpack.c.l.b16 %v971
    %v1197 = vunpack.c.l.b16 %v972
    %v1198 = vunpack.c.l.b16 %v973
    %v1199 = vunpack.c.l.b16 %v974
    %v1200 = vunpack.c.l.b16 %v975
    %v1201 = vpack.c.b16 %v1186, %v1185
    %v1202 = vpack.c.b16 %v1188, %v1187
    %v1203 = vpack.c.b16 %v1190, %v1189
    %v1204 = vpack.c.b16 %v1192, %v1191
    %v1205 = vpack.c.b16 %v1194, %v1193
    %v1206 = vpack.c.b16 %v1196, %v1195
    %v1207 = vpack.c.b16 %v1198, %v1197
    %v1208 = vpack.c.b16 %v1200, %v1199
    %1217 = vmatprep.subr.bf16.mxu0 0
    %1218 = vmatpush1.bf16.msra.mxu0 %v1201
    %1219 = vmatprep.subr.bf16.mxu0 0
    %1220 = vmatpush1.bf16.msra.mxu0 %v1202
    %1221 = vmatprep.subr.bf16.mxu0 0
    %1222 = vmatpush1.bf16.msra.mxu0 %v1203
    %1223 = vmatprep.subr.bf16.mxu0 0
    %1224 = vmatpush1.bf16.msra.mxu0 %v1204
    %1225 = vmatprep.subr.bf16.mxu0 0
    %1226 = vmatpush1.bf16.msra.mxu0 %v1205
    %1227 = vmatprep.subr.bf16.mxu0 0
    %1228 = vmatpush1.bf16.msra.mxu0 %v1206
    %1229 = vmatprep.subr.bf16.mxu0 0
    %1230 = vmatpush1.bf16.msra.mxu0 %v1207
    %1231 = vmatprep.subr.bf16.mxu0 0
    %1232 = vmatpush1.bf16.msra.mxu0 %v1208
    %1233 = vmatprep.subr.bf16.mxu0 0
    %1234 = vmatpush1.bf16.msra.mxu0 0
    %1235 = vmatprep.subr.bf16.mxu0 0
    %1236 = vmatpush1.bf16.msra.mxu0 0
    %1237 = vmatprep.subr.bf16.mxu0 0
    %1238 = vmatpush1.bf16.msra.mxu0 0
    %1239 = vmatprep.subr.bf16.mxu0 0
    %1240 = vmatpush1.bf16.msra.mxu0 0
    %1241 = vmatprep.subr.bf16.mxu0 0
    %1242 = vmatpush1.bf16.msra.mxu0 0
    %1243 = vmatprep.subr.bf16.mxu0 0
    %1244 = vmatpush1.bf16.msra.mxu0 0
    %1245 = vmatprep.subr.bf16.mxu0 0
    %1246 = vmatpush1.bf16.msra.mxu0 0
    %1247 = vmatprep.subr.bf16.mxu0 0
    %1248 = vmatpush1.bf16.msra.mxu0 0
    %1249 = vmatprep.mubr.bf16.mxu0 0
    %1250 = vmatmul.mubr.bf16.gmra.mrb[0].mxu0 %v38
    %v1251 = vpop.f32.mrb[0].mxu0
    %v1252 = vadd.f32 0.0, %v1251
    %v1253 = vpop.f32.mrb[0].mxu0
    %v1254 = vpop.f32.mrb[0].mxu0
    %v1255 = vadd.f32 0.0, %v1254
    %v1256 = vpop.f32.mrb[0].mxu0
    %1257 = vmatprep.mubr.bf16.mxu0 0
    %1258 = vmatmul.mubr.bf16.gmra.mrb[0].mxu0 %v39
    %v1259 = vpop.f32.mrb[0].mxu0
    %v1260 = vadd.f32 0.0, %v1259
    %v1261 = vpop.f32.mrb[0].mxu0
    %v1262 = vpop.f32.mrb[0].mxu0
    %v1263 = vadd.f32 0.0, %v1262
    %v1264 = vpop.f32.mrb[0].mxu0
    %1265 = vdwg.mxu0
    %v1282 = vunpack.c.l.b16 %v976
    %v1283 = vunpack.c.l.b16 %v977
    %v1284 = vunpack.c.l.b16 %v978
    %v1285 = vunpack.c.l.b16 %v979
    %v1286 = vunpack.c.l.b16 %v980
    %v1287 = vunpack.c.l.b16 %v981
    %v1288 = vunpack.c.l.b16 %v982
    %v1289 = vunpack.c.l.b16 %v983
    %v1290 = vunpack.c.l.b16 %v984
    %v1291 = vunpack.c.l.b16 %v985
    %v1292 = vunpack.c.l.b16 %v986
    %v1293 = vunpack.c.l.b16 %v987
    %v1294 = vunpack.c.l.b16 %v988
    %v1295 = vunpack.c.l.b16 %v989
    %v1296 = vunpack.c.l.b16 %v990
    %v1297 = vunpack.c.l.b16 %v991
    %v1298 = vpack.c.b16 %v1283, %v1282
    %v1299 = vpack.c.b16 %v1285, %v1284
    %v1300 = vpack.c.b16 %v1287, %v1286
    %v1301 = vpack.c.b16 %v1289, %v1288
    %v1302 = vpack.c.b16 %v1291, %v1290
    %v1303 = vpack.c.b16 %v1293, %v1292
    %v1304 = vpack.c.b16 %v1295, %v1294
    %v1305 = vpack.c.b16 %v1297, %v1296
    %1314 = vmatprep.subr.bf16.mxu0 0
    %1315 = vmatpush1.bf16.msra.mxu0 %v1298
    %1316 = vmatprep.subr.bf16.mxu0 0
    %1317 = vmatpush1.bf16.msra.mxu0 %v1299
    %1318 = vmatprep.subr.bf16.mxu0 0
    %1319 = vmatpush1.bf16.msra.mxu0 %v1300
    %1320 = vmatprep.subr.bf16.mxu0 0
    %1321 = vmatpush1.bf16.msra.mxu0 %v1301
    %1322 = vmatprep.subr.bf16.mxu0 0
    %1323 = vmatpush1.bf16.msra.mxu0 %v1302
    %1324 = vmatprep.subr.bf16.mxu0 0
    %1325 = vmatpush1.bf16.msra.mxu0 %v1303
    %1326 = vmatprep.subr.bf16.mxu0 0
    %1327 = vmatpush1.bf16.msra.mxu0 %v1304
    %1328 = vmatprep.subr.bf16.mxu0 0
    %1329 = vmatpush1.bf16.msra.mxu0 %v1305
    %1330 = vmatprep.subr.bf16.mxu0 0
    %1331 = vmatpush1.bf16.msra.mxu0 0
    %1332 = vmatprep.subr.bf16.mxu0 0
    %1333 = vmatpush1.bf16.msra.mxu0 0
    %1334 = vmatprep.subr.bf16.mxu0 0
    %1335 = vmatpush1.bf16.msra.mxu0 0
    %1336 = vmatprep.subr.bf16.mxu0 0
    %1337 = vmatpush1.bf16.msra.mxu0 0
    %1338 = vmatprep.subr.bf16.mxu0 0
    %1339 = vmatpush1.bf16.msra.mxu0 0
    %1340 = vmatprep.subr.bf16.mxu0 0
    %1341 = vmatpush1.bf16.msra.mxu0 0
    %1342 = vmatprep.subr.bf16.mxu0 0
    %1343 = vmatpush1.bf16.msra.mxu0 0
    %1344 = vmatprep.subr.bf16.mxu0 0
    %1345 = vmatpush1.bf16.msra.mxu0 0
    %1346 = vmatprep.mubr.bf16.mxu0 0
    %1347 = vmatmul.mubr.bf16.gmra.mrb[0].mxu0 %v38
    %v1348 = vpop.f32.mrb[0].mxu0
    %v1349 = vadd.f32 0.0, %v1348
    %v1350 = vpop.f32.mrb[0].mxu0
    %v1351 = vpop.f32.mrb[0].mxu0
    %v1352 = vadd.f32 0.0, %v1351
    %v1353 = vpop.f32.mrb[0].mxu0
    %1354 = vmatprep.mubr.bf16.mxu0 0
    %1355 = vmatmul.mubr.bf16.gmra.mrb[0].mxu0 %v39
    %v1356 = vpop.f32.mrb[0].mxu0
    %v1357 = vadd.f32 0.0, %v1356
    %v1358 = vpop.f32.mrb[0].mxu0
    %v1359 = vpop.f32.mrb[0].mxu0
    %v1360 = vadd.f32 0.0, %v1359
    %v1361 = vpop.f32.mrb[0].mxu0
    %1362 = vdwg.mxu0
    %v1379 = vunpack.c.l.b16 %v992
    %v1380 = vunpack.c.l.b16 %v993
    %v1381 = vunpack.c.l.b16 %v994
    %v1382 = vunpack.c.l.b16 %v995
    %v1383 = vunpack.c.l.b16 %v996
    %v1384 = vunpack.c.l.b16 %v997
    %v1385 = vunpack.c.l.b16 %v998
    %v1386 = vunpack.c.l.b16 %v999
    %v1387 = vunpack.c.l.b16 %v1000
    %v1388 = vunpack.c.l.b16 %v1001
    %v1389 = vunpack.c.l.b16 %v1002
    %v1390 = vunpack.c.l.b16 %v1003
    %v1391 = vunpack.c.l.b16 %v1004
    %v1392 = vunpack.c.l.b16 %v1005
    %v1393 = vunpack.c.l.b16 %v1006
    %v1394 = vunpack.c.l.b16 %v1007
    %v1395 = vpack.c.b16 %v1380, %v1379
    %v1396 = vpack.c.b16 %v1382, %v1381
    %v1397 = vpack.c.b16 %v1384, %v1383
    %v1398 = vpack.c.b16 %v1386, %v1385
    %v1399 = vpack.c.b16 %v1388, %v1387
    %v1400 = vpack.c.b16 %v1390, %v1389
    %v1401 = vpack.c.b16 %v1392, %v1391
    %v1402 = vpack.c.b16 %v1394, %v1393
    %1411 = vmatprep.subr.bf16.mxu0 0
    %1412 = vmatpush1.bf16.msra.mxu0 %v1395
    %1413 = vmatprep.subr.bf16.mxu0 0
    %1414 = vmatpush1.bf16.msra.mxu0 %v1396
    %1415 = vmatprep.subr.bf16.mxu0 0
    %1416 = vmatpush1.bf16.msra.mxu0 %v1397
    %1417 = vmatprep.subr.bf16.mxu0 0
    %1418 = vmatpush1.bf16.msra.mxu0 %v1398
    %1419 = vmatprep.subr.bf16.mxu0 0
    %1420 = vmatpush1.bf16.msra.mxu0 %v1399
    %1421 = vmatprep.subr.bf16.mxu0 0
    %1422 = vmatpush1.bf16.msra.mxu0 %v1400
    %1423 = vmatprep.subr.bf16.mxu0 0
    %1424 = vmatpush1.bf16.msra.mxu0 %v1401
    %1425 = vmatprep.subr.bf16.mxu0 0
    %1426 = vmatpush1.bf16.msra.mxu0 %v1402
    %1427 = vmatprep.subr.bf16.mxu0 0
    %1428 = vmatpush1.bf16.msra.mxu0 0
    %1429 = vmatprep.subr.bf16.mxu0 0
    %1430 = vmatpush1.bf16.msra.mxu0 0
    %1431 = vmatprep.subr.bf16.mxu0 0
    %1432 = vmatpush1.bf16.msra.mxu0 0
    %1433 = vmatprep.subr.bf16.mxu0 0
    %1434 = vmatpush1.bf16.msra.mxu0 0
    %1435 = vmatprep.subr.bf16.mxu0 0
    %1436 = vmatpush1.bf16.msra.mxu0 0
    %1437 = vmatprep.subr.bf16.mxu0 0
    %1438 = vmatpush1.bf16.msra.mxu0 0
    %1439 = vmatprep.subr.bf16.mxu0 0
    %1440 = vmatpush1.bf16.msra.mxu0 0
    %1441 = vmatprep.subr.bf16.mxu0 0
    %1442 = vmatpush1.bf16.msra.mxu0 0
    %1443 = vmatprep.mubr.bf16.mxu0 0
    %1444 = vmatmul.mubr.bf16.gmra.mrb[0].mxu0 %v38
    %v1445 = vpop.f32.mrb[0].mxu0
    %v1446 = vadd.f32 0.0, %v1445
    %v1447 = vpop.f32.mrb[0].mxu0
    %v1448 = vpop.f32.mrb[0].mxu0
    %v1449 = vadd.f32 0.0, %v1448
    %v1450 = vpop.f32.mrb[0].mxu0
    %1451 = vmatprep.mubr.bf16.mxu0 0
    %1452 = vmatmul.mubr.bf16.gmra.mrb[0].mxu0 %v39
    %v1453 = vpop.f32.mrb[0].mxu0
    %v1454 = vadd.f32 0.0, %v1453
    %v1455 = vpop.f32.mrb[0].mxu0
    %v1456 = vpop.f32.mrb[0].mxu0
    %v1457 = vadd.f32 0.0, %v1456
    %v1458 = vpop.f32.mrb[0].mxu0
    %1459 = vdwg.mxu0
    %v1476 = vunpack.c.l.b16 %v1008
    %v1477 = vunpack.c.l.b16 %v1009
    %v1478 = vunpack.c.l.b16 %v1010
    %v1479 = vunpack.c.l.b16 %v1011
    %v1480 = vunpack.c.l.b16 %v1012
    %v1481 = vunpack.c.l.b16 %v1013
    %v1482 = vunpack.c.l.b16 %v1014
    %v1483 = vunpack.c.l.b16 %v1015
    %v1484 = vunpack.c.l.b16 %v1016
    %v1485 = vunpack.c.l.b16 %v1017
    %v1486 = vunpack.c.l.b16 %v1018
    %v1487 = vunpack.c.l.b16 %v1019
    %v1488 = vunpack.c.l.b16 %v1020
    %v1489 = vunpack.c.l.b16 %v1021
    %v1490 = vunpack.c.l.b16 %v1022
    %v1491 = vunpack.c.l.b16 %v1023
    %v1492 = vpack.c.b16 %v1477, %v1476
    %v1493 = vpack.c.b16 %v1479, %v1478
    %v1494 = vpack.c.b16 %v1481, %v1480
    %v1495 = vpack.c.b16 %v1483, %v1482
    %v1496 = vpack.c.b16 %v1485, %v1484
    %v1497 = vpack.c.b16 %v1487, %v1486
    %v1498 = vpack.c.b16 %v1489, %v1488
    %v1499 = vpack.c.b16 %v1491, %v1490
    %1508 = vmatprep.subr.bf16.mxu0 0
    %1509 = vmatpush1.bf16.msra.mxu0 %v1492
    %1510 = vmatprep.subr.bf16.mxu0 0
    %1511 = vmatpush1.bf16.msra.mxu0 %v1493
    %1512 = vmatprep.subr.bf16.mxu0 0
    %1513 = vmatpush1.bf16.msra.mxu0 %v1494
    %1514 = vmatprep.subr.bf16.mxu0 0
    %1515 = vmatpush1.bf16.msra.mxu0 %v1495
    %1516 = vmatprep.subr.bf16.mxu0 0
    %1517 = vmatpush1.bf16.msra.mxu0 %v1496
    %1518 = vmatprep.subr.bf16.mxu0 0
    %1519 = vmatpush1.bf16.msra.mxu0 %v1497
    %1520 = vmatprep.subr.bf16.mxu0 0
    %1521 = vmatpush1.bf16.msra.mxu0 %v1498
    %1522 = vmatprep.subr.bf16.mxu0 0
    %1523 = vmatpush1.bf16.msra.mxu0 %v1499
    %1524 = vmatprep.subr.bf16.mxu0 0
    %1525 = vmatpush1.bf16.msra.mxu0 0
    %1526 = vmatprep.subr.bf16.mxu0 0
    %1527 = vmatpush1.bf16.msra.mxu0 0
    %1528 = vmatprep.subr.bf16.mxu0 0
    %1529 = vmatpush1.bf16.msra.mxu0 0
    %1530 = vmatprep.subr.bf16.mxu0 0
    %1531 = vmatpush1.bf16.msra.mxu0 0
    %1532 = vmatprep.subr.bf16.mxu0 0
    %1533 = vmatpush1.bf16.msra.mxu0 0
    %1534 = vmatprep.subr.bf16.mxu0 0
    %1535 = vmatpush1.bf16.msra.mxu0 0
    %1536 = vmatprep.subr.bf16.mxu0 0
    %1537 = vmatpush1.bf16.msra.mxu0 0
    %1538 = vmatprep.subr.bf16.mxu0 0
    %1539 = vmatpush1.bf16.msra.mxu0 0
    %1540 = vmatprep.mubr.bf16.mxu0 0
    %1541 = vmatmul.mubr.bf16.gmra.mrb[0].mxu0 %v38
    %v1542 = vpop.f32.mrb[0].mxu0
    %v1543 = vadd.f32 0.0, %v1542
    %v1544 = vpop.f32.mrb[0].mxu0
    %v1545 = vpop.f32.mrb[0].mxu0
    %v1546 = vadd.f32 0.0, %v1545
    %v1547 = vpop.f32.mrb[0].mxu0
    %1548 = vmatprep.mubr.bf16.mxu0 0
    %1549 = vmatmul.mubr.bf16.gmra.mrb[0].mxu0 %v39
    %v1550 = vpop.f32.mrb[0].mxu0
    %v1551 = vadd.f32 0.0, %v1550
    %v1552 = vpop.f32.mrb[0].mxu0
    %v1553 = vpop.f32.mrb[0].mxu0
    %v1554 = vadd.f32 0.0, %v1553
    %v1555 = vpop.f32.mrb[0].mxu0
    %1556 = vdwg.mxu0
    %v1573 = vunpack.c.l.b16 %v1024
    %v1574 = vunpack.c.l.b16 %v1025
    %v1575 = vunpack.c.l.b16 %v1026
    %v1576 = vunpack.c.l.b16 %v1027
    %v1577 = vunpack.c.l.b16 %v1028
    %v1578 = vunpack.c.l.b16 %v1029
    %v1579 = vunpack.c.l.b16 %v1030
    %v1580 = vunpack.c.l.b16 %v1031
    %v1581 = vunpack.c.l.b16 %v1032
    %v1582 = vunpack.c.l.b16 %v1033
    %v1583 = vunpack.c.l.b16 %v1034
    %v1584 = vunpack.c.l.b16 %v1035
    %v1585 = vunpack.c.l.b16 %v1036
    %v1586 = vunpack.c.l.b16 %v1037
    %v1587 = vunpack.c.l.b16 %v1038
    %v1588 = vunpack.c.l.b16 %v1039
    %v1589 = vpack.c.b16 %v1574, %v1573
    %v1590 = vpack.c.b16 %v1576, %v1575
    %v1591 = vpack.c.b16 %v1578, %v1577
    %v1592 = vpack.c.b16 %v1580, %v1579
    %v1593 = vpack.c.b16 %v1582, %v1581
    %v1594 = vpack.c.b16 %v1584, %v1583
    %v1595 = vpack.c.b16 %v1586, %v1585
    %v1596 = vpack.c.b16 %v1588, %v1587
    %1605 = vmatprep.subr.bf16.mxu0 0
    %1606 = vmatpush1.bf16.msra.mxu0 %v1589
    %1607 = vmatprep.subr.bf16.mxu0 0
    %1608 = vmatpush1.bf16.msra.mxu0 %v1590
    %1609 = vmatprep.subr.bf16.mxu0 0
    %1610 = vmatpush1.bf16.msra.mxu0 %v1591
    %1611 = vmatprep.subr.bf16.mxu0 0
    %1612 = vmatpush1.bf16.msra.mxu0 %v1592
    %1613 = vmatprep.subr.bf16.mxu0 0
    %1614 = vmatpush1.bf16.msra.mxu0 %v1593
    %1615 = vmatprep.subr.bf16.mxu0 0
    %1616 = vmatpush1.bf16.msra.mxu0 %v1594
    %1617 = vmatprep.subr.bf16.mxu0 0
    %1618 = vmatpush1.bf16.msra.mxu0 %v1595
    %1619 = vmatprep.subr.bf16.mxu0 0
    %1620 = vmatpush1.bf16.msra.mxu0 %v1596
    %1621 = vmatprep.subr.bf16.mxu0 0
    %1622 = vmatpush1.bf16.msra.mxu0 0
    %1623 = vmatprep.subr.bf16.mxu0 0
    %1624 = vmatpush1.bf16.msra.mxu0 0
    %1625 = vmatprep.subr.bf16.mxu0 0
    %1626 = vmatpush1.bf16.msra.mxu0 0
    %1627 = vmatprep.subr.bf16.mxu0 0
    %1628 = vmatpush1.bf16.msra.mxu0 0
    %1629 = vmatprep.subr.bf16.mxu0 0
    %1630 = vmatpush1.bf16.msra.mxu0 0
    %1631 = vmatprep.subr.bf16.mxu0 0
    %1632 = vmatpush1.bf16.msra.mxu0 0
    %1633 = vmatprep.subr.bf16.mxu0 0
    %1634 = vmatpush1.bf16.msra.mxu0 0
    %1635 = vmatprep.subr.bf16.mxu0 0
    %1636 = vmatpush1.bf16.msra.mxu0 0
    %1637 = vmatprep.mubr.bf16.mxu0 0
    %1638 = vmatmul.mubr.bf16.gmra.mrb[0].mxu0 %v38
    %v1639 = vpop.f32.mrb[0].mxu0
    %v1640 = vadd.f32 0.0, %v1639
    %v1641 = vpop.f32.mrb[0].mxu0
    %v1642 = vpop.f32.mrb[0].mxu0
    %v1643 = vadd.f32 0.0, %v1642
    %v1644 = vpop.f32.mrb[0].mxu0
    %1645 = vmatprep.mubr.bf16.mxu0 0
    %1646 = vmatmul.mubr.bf16.gmra.mrb[0].mxu0 %v39
    %v1647 = vpop.f32.mrb[0].mxu0
    %v1648 = vadd.f32 0.0, %v1647
    %v1649 = vpop.f32.mrb[0].mxu0
    %v1650 = vpop.f32.mrb[0].mxu0
    %v1651 = vadd.f32 0.0, %v1650
    %v1652 = vpop.f32.mrb[0].mxu0
    %1653 = vdwg.mxu0
    %v1670 = vunpack.c.l.b16 %v1040
    %v1671 = vunpack.c.l.b16 %v1041
    %v1672 = vunpack.c.l.b16 %v1042
    %v1673 = vunpack.c.l.b16 %v1043
    %v1674 = vunpack.c.l.b16 %v1044
    %v1675 = vunpack.c.l.b16 %v1045
    %v1676 = vunpack.c.l.b16 %v1046
    %v1677 = vunpack.c.l.b16 %v1047
    %v1678 = vunpack.c.l.b16 %v1048
    %v1679 = vunpack.c.l.b16 %v1049
    %v1680 = vunpack.c.l.b16 %v1050
    %v1681 = vunpack.c.l.b16 %v1051
    %v1682 = vunpack.c.l.b16 %v1052
    %v1683 = vunpack.c.l.b16 %v1053
    %v1684 = vunpack.c.l.b16 %v1054
    %v1685 = vunpack.c.l.b16 %v1055
    %v1686 = vpack.c.b16 %v1671, %v1670
    %v1687 = vpack.c.b16 %v1673, %v1672
    %v1688 = vpack.c.b16 %v1675, %v1674
    %v1689 = vpack.c.b16 %v1677, %v1676
    %v1690 = vpack.c.b16 %v1679, %v1678
    %v1691 = vpack.c.b16 %v1681, %v1680
    %v1692 = vpack.c.b16 %v1683, %v1682
    %v1693 = vpack.c.b16 %v1685, %v1684
    %1702 = vmatprep.subr.bf16.mxu0 0
    %1703 = vmatpush1.bf16.msra.mxu0 %v1686
    %1704 = vmatprep.subr.bf16.mxu0 0
    %1705 = vmatpush1.bf16.msra.mxu0 %v1687
    %1706 = vmatprep.subr.bf16.mxu0 0
    %1707 = vmatpush1.bf16.msra.mxu0 %v1688
    %1708 = vmatprep.subr.bf16.mxu0 0
    %1709 = vmatpush1.bf16.msra.mxu0 %v1689
    %1710 = vmatprep.subr.bf16.mxu0 0
    %1711 = vmatpush1.bf16.msra.mxu0 %v1690
    %1712 = vmatprep.subr.bf16.mxu0 0
    %1713 = vmatpush1.bf16.msra.mxu0 %v1691
    %1714 = vmatprep.subr.bf16.mxu0 0
    %1715 = vmatpush1.bf16.msra.mxu0 %v1692
    %1716 = vmatprep.subr.bf16.mxu0 0
    %1717 = vmatpush1.bf16.msra.mxu0 %v1693
    %1718 = vmatprep.subr.bf16.mxu0 0
    %1719 = vmatpush1.bf16.msra.mxu0 0
    %1720 = vmatprep.subr.bf16.mxu0 0
    %1721 = vmatpush1.bf16.msra.mxu0 0
    %1722 = vmatprep.subr.bf16.mxu0 0
    %1723 = vmatpush1.bf16.msra.mxu0 0
    %1724 = vmatprep.subr.bf16.mxu0 0
    %1725 = vmatpush1.bf16.msra.mxu0 0
    %1726 = vmatprep.subr.bf16.mxu0 0
    %1727 = vmatpush1.bf16.msra.mxu0 0
    %1728 = vmatprep.subr.bf16.mxu0 0
    %1729 = vmatpush1.bf16.msra.mxu0 0
    %1730 = vmatprep.subr.bf16.mxu0 0
    %1731 = vmatpush1.bf16.msra.mxu0 0
    %1732 = vmatprep.subr.bf16.mxu0 0
    %1733 = vmatpush1.bf16.msra.mxu0 0
    %1734 = vmatprep.mubr.bf16.mxu0 0
    %1735 = vmatmul.mubr.bf16.gmra.mrb[0].mxu0 %v38
    %v1736 = vpop.f32.mrb[0].mxu0
    %v1737 = vadd.f32 0.0, %v1736
    %v1738 = vpop.f32.mrb[0].mxu0
    %v1739 = vpop.f32.mrb[0].mxu0
    %v1740 = vadd.f32 0.0, %v1739
    %v1741 = vpop.f32.mrb[0].mxu0
    %1742 = vmatprep.mubr.bf16.mxu0 0
    %1743 = vmatmul.mubr.bf16.gmra.mrb[0].mxu0 %v39
    %v1744 = vpop.f32.mrb[0].mxu0
    %v1745 = vadd.f32 0.0, %v1744
    %v1746 = vpop.f32.mrb[0].mxu0
    %v1747 = vpop.f32.mrb[0].mxu0
    %v1748 = vadd.f32 0.0, %v1747
    %v1749 = vpop.f32.mrb[0].mxu0
    %1750 = vdwg.mxu0
    %v1767 = vunpack.c.l.b16 %v1056
    %v1768 = vunpack.c.l.b16 %v1057
    %v1769 = vunpack.c.l.b16 %v1058
    %v1770 = vunpack.c.l.b16 %v1059
    %v1771 = vunpack.c.l.b16 %v1060
    %v1772 = vunpack.c.l.b16 %v1061
    %v1773 = vunpack.c.l.b16 %v1062
    %v1774 = vunpack.c.l.b16 %v1063
    %v1775 = vunpack.c.l.b16 %v1064
    %v1776 = vunpack.c.l.b16 %v1065
    %v1777 = vunpack.c.l.b16 %v1066
    %v1778 = vunpack.c.l.b16 %v1067
    %v1779 = vunpack.c.l.b16 %v1068
    %v1780 = vunpack.c.l.b16 %v1069
    %v1781 = vunpack.c.l.b16 %v1070
    %v1782 = vunpack.c.l.b16 %v1071
    %v1783 = vpack.c.b16 %v1768, %v1767
    %v1784 = vpack.c.b16 %v1770, %v1769
    %v1785 = vpack.c.b16 %v1772, %v1771
    %v1786 = vpack.c.b16 %v1774, %v1773
    %v1787 = vpack.c.b16 %v1776, %v1775
    %v1788 = vpack.c.b16 %v1778, %v1777
    %v1789 = vpack.c.b16 %v1780, %v1779
    %v1790 = vpack.c.b16 %v1782, %v1781
    %1799 = vmatprep.subr.bf16.mxu0 0
    %1800 = vmatpush1.bf16.msra.mxu0 %v1783
    %1801 = vmatprep.subr.bf16.mxu0 0
    %1802 = vmatpush1.bf16.msra.mxu0 %v1784
    %1803 = vmatprep.subr.bf16.mxu0 0
    %1804 = vmatpush1.bf16.msra.mxu0 %v1785
    %1805 = vmatprep.subr.bf16.mxu0 0
    %1806 = vmatpush1.bf16.msra.mxu0 %v1786
    %1807 = vmatprep.subr.bf16.mxu0 0
    %1808 = vmatpush1.bf16.msra.mxu0 %v1787
    %1809 = vmatprep.subr.bf16.mxu0 0
    %1810 = vmatpush1.bf16.msra.mxu0 %v1788
    %1811 = vmatprep.subr.bf16.mxu0 0
    %1812 = vmatpush1.bf16.msra.mxu0 %v1789
    %1813 = vmatprep.subr.bf16.mxu0 0
    %1814 = vmatpush1.bf16.msra.mxu0 %v1790
    %1815 = vmatprep.subr.bf16.mxu0 0
    %1816 = vmatpush1.bf16.msra.mxu0 0
    %1817 = vmatprep.subr.bf16.mxu0 0
    %1818 = vmatpush1.bf16.msra.mxu0 0
    %1819 = vmatprep.subr.bf16.mxu0 0
    %1820 = vmatpush1.bf16.msra.mxu0 0
    %1821 = vmatprep.subr.bf16.mxu0 0
    %1822 = vmatpush1.bf16.msra.mxu0 0
    %1823 = vmatprep.subr.bf16.mxu0 0
    %1824 = vmatpush1.bf16.msra.mxu0 0
    %1825 = vmatprep.subr.bf16.mxu0 0
    %1826 = vmatpush1.bf16.msra.mxu0 0
    %1827 = vmatprep.subr.bf16.mxu0 0
    %1828 = vmatpush1.bf16.msra.mxu0 0
    %1829 = vmatprep.subr.bf16.mxu0 0
    %1830 = vmatpush1.bf16.msra.mxu0 0
    %1831 = vmatprep.mubr.bf16.mxu0 0
    %1832 = vmatmul.mubr.bf16.gmra.mrb[0].mxu0 %v38
    %v1833 = vpop.f32.mrb[0].mxu0
    %v1834 = vadd.f32 0.0, %v1833
    %v1835 = vpop.f32.mrb[0].mxu0
    %v1836 = vpop.f32.mrb[0].mxu0
    %v1837 = vadd.f32 0.0, %v1836
    %v1838 = vpop.f32.mrb[0].mxu0
    %1839 = vmatprep.mubr.bf16.mxu0 0
    %1840 = vmatmul.mubr.bf16.gmra.mrb[0].mxu0 %v39
    %v1841 = vpop.f32.mrb[0].mxu0
    %v1842 = vadd.f32 0.0, %v1841
    %v1843 = vpop.f32.mrb[0].mxu0
    %v1844 = vpop.f32.mrb[0].mxu0
    %v1845 = vadd.f32 0.0, %v1844
    %v1846 = vpop.f32.mrb[0].mxu0
    %1847 = vdwg.mxu0
    %v1848 = vld [vmem:[%s4] sm:$0xf]
    %v1849 = vld [vmem:[%s4 + $0x4] sm:$0xf]
    %v1850 = vld [vmem:[%s4 + $0x8] sm:$0xf]
    %v1851 = vld [vmem:[%s4 + $0xc] sm:$0xf]
    %v1852 = vld [vmem:[%s4 + $0x10] sm:$0xf]
    %v1853 = vld [vmem:[%s4 + $0x14] sm:$0xf]
    %v1854 = vld [vmem:[%s4 + $0x18] sm:$0xf]
    %v1855 = vld [vmem:[%s4 + $0x1c] sm:$0xf]
    %v1856 = vld [vmem:[%s4 + $0x20] sm:$0xf]
    %v1857 = vld [vmem:[%s4 + $0x24] sm:$0xf]
    %v1858 = vld [vmem:[%s4 + $0x28] sm:$0xf]
    %v1859 = vld [vmem:[%s4 + $0x2c] sm:$0xf]
    %v1860 = vld [vmem:[%s4 + $0x30] sm:$0xf]
    %v1861 = vld [vmem:[%s4 + $0x34] sm:$0xf]
    %v1862 = vld [vmem:[%s4 + $0x38] sm:$0xf]
    %v1863 = vld [vmem:[%s4 + $0x3c] sm:$0xf]
    %v1864 = vld [vmem:[%s4 + $0x40] sm:$0xf]
    %v1865 = vld [vmem:[%s4 + $0x44] sm:$0xf]
    %v1866 = vld [vmem:[%s4 + $0x48] sm:$0xf]
    %v1867 = vld [vmem:[%s4 + $0x4c] sm:$0xf]
    %v1868 = vld [vmem:[%s4 + $0x50] sm:$0xf]
    %v1869 = vld [vmem:[%s4 + $0x54] sm:$0xf]
    %v1870 = vld [vmem:[%s4 + $0x58] sm:$0xf]
    %v1871 = vld [vmem:[%s4 + $0x5c] sm:$0xf]
    %v1872 = vld [vmem:[%s4 + $0x60] sm:$0xf]
    %v1873 = vld [vmem:[%s4 + $0x64] sm:$0xf]
    %v1874 = vld [vmem:[%s4 + $0x68] sm:$0xf]
    %v1875 = vld [vmem:[%s4 + $0x6c] sm:$0xf]
    %v1876 = vld [vmem:[%s4 + $0x70] sm:$0xf]
    %v1877 = vld [vmem:[%s4 + $0x74] sm:$0xf]
    %v1878 = vld [vmem:[%s4 + $0x78] sm:$0xf]
    %v1879 = vld [vmem:[%s4 + $0x7c] sm:$0xf]
    %v1880 = vld [vmem:[%s4 + $0x80] sm:$0xf]
    %v1881 = vld [vmem:[%s4 + $0x84] sm:$0xf]
    %v1882 = vld [vmem:[%s4 + $0x88] sm:$0xf]
    %v1883 = vld [vmem:[%s4 + $0x8c] sm:$0xf]
    %v1884 = vld [vmem:[%s4 + $0x90] sm:$0xf]
    %v1885 = vld [vmem:[%s4 + $0x94] sm:$0xf]
    %v1886 = vld [vmem:[%s4 + $0x98] sm:$0xf]
    %v1887 = vld [vmem:[%s4 + $0x9c] sm:$0xf]
    %v1888 = vld [vmem:[%s4 + $0xa0] sm:$0xf]
    %v1889 = vld [vmem:[%s4 + $0xa4] sm:$0xf]
    %v1890 = vld [vmem:[%s4 + $0xa8] sm:$0xf]
    %v1891 = vld [vmem:[%s4 + $0xac] sm:$0xf]
    %v1892 = vld [vmem:[%s4 + $0xb0] sm:$0xf]
    %v1893 = vld [vmem:[%s4 + $0xb4] sm:$0xf]
    %v1894 = vld [vmem:[%s4 + $0xb8] sm:$0xf]
    %v1895 = vld [vmem:[%s4 + $0xbc] sm:$0xf]
    %v1896 = vld [vmem:[%s4 + $0xc0] sm:$0xf]
    %v1897 = vld [vmem:[%s4 + $0xc4] sm:$0xf]
    %v1898 = vld [vmem:[%s4 + $0xc8] sm:$0xf]
    %v1899 = vld [vmem:[%s4 + $0xcc] sm:$0xf]
    %v1900 = vld [vmem:[%s4 + $0xd0] sm:$0xf]
    %v1901 = vld [vmem:[%s4 + $0xd4] sm:$0xf]
    %v1902 = vld [vmem:[%s4 + $0xd8] sm:$0xf]
    %v1903 = vld [vmem:[%s4 + $0xdc] sm:$0xf]
    %v1904 = vld [vmem:[%s4 + $0xe0] sm:$0xf]
    %v1905 = vld [vmem:[%s4 + $0xe4] sm:$0xf]
    %v1906 = vld [vmem:[%s4 + $0xe8] sm:$0xf]
    %v1907 = vld [vmem:[%s4 + $0xec] sm:$0xf]
    %v1908 = vld [vmem:[%s4 + $0xf0] sm:$0xf]
    %v1909 = vld [vmem:[%s4 + $0xf4] sm:$0xf]
    %v1910 = vld [vmem:[%s4 + $0xf8] sm:$0xf]
    %v1911 = vld [vmem:[%s4 + $0xfc] sm:$0xf]
    %v1912 = vld [vmem:[%s4 + $0x100] sm:$0xf]
    %v1913 = vld [vmem:[%s4 + $0x104] sm:$0xf]
    %v1914 = vld [vmem:[%s4 + $0x108] sm:$0xf]
    %v1915 = vld [vmem:[%s4 + $0x10c] sm:$0xf]
    %v1916 = vld [vmem:[%s4 + $0x110] sm:$0xf]
    %v1917 = vld [vmem:[%s4 + $0x114] sm:$0xf]
    %v1918 = vld [vmem:[%s4 + $0x118] sm:$0xf]
    %v1919 = vld [vmem:[%s4 + $0x11c] sm:$0xf]
    %v1920 = vld [vmem:[%s4 + $0x120] sm:$0xf]
    %v1921 = vld [vmem:[%s4 + $0x124] sm:$0xf]
    %v1922 = vld [vmem:[%s4 + $0x128] sm:$0xf]
    %v1923 = vld [vmem:[%s4 + $0x12c] sm:$0xf]
    %v1924 = vld [vmem:[%s4 + $0x130] sm:$0xf]
    %v1925 = vld [vmem:[%s4 + $0x134] sm:$0xf]
    %v1926 = vld [vmem:[%s4 + $0x138] sm:$0xf]
    %v1927 = vld [vmem:[%s4 + $0x13c] sm:$0xf]
    %v1928 = vld [vmem:[%s4 + $0x140] sm:$0xf]
    %v1929 = vld [vmem:[%s4 + $0x144] sm:$0xf]
    %v1930 = vld [vmem:[%s4 + $0x148] sm:$0xf]
    %v1931 = vld [vmem:[%s4 + $0x14c] sm:$0xf]
    %v1932 = vld [vmem:[%s4 + $0x150] sm:$0xf]
    %v1933 = vld [vmem:[%s4 + $0x154] sm:$0xf]
    %v1934 = vld [vmem:[%s4 + $0x158] sm:$0xf]
    %v1935 = vld [vmem:[%s4 + $0x15c] sm:$0xf]
    %v1936 = vld [vmem:[%s4 + $0x160] sm:$0xf]
    %v1937 = vld [vmem:[%s4 + $0x164] sm:$0xf]
    %v1938 = vld [vmem:[%s4 + $0x168] sm:$0xf]
    %v1939 = vld [vmem:[%s4 + $0x16c] sm:$0xf]
    %v1940 = vld [vmem:[%s4 + $0x170] sm:$0xf]
    %v1941 = vld [vmem:[%s4 + $0x174] sm:$0xf]
    %v1942 = vld [vmem:[%s4 + $0x178] sm:$0xf]
    %v1943 = vld [vmem:[%s4 + $0x17c] sm:$0xf]
    %v1944 = vld [vmem:[%s4 + $0x180] sm:$0xf]
    %v1945 = vld [vmem:[%s4 + $0x184] sm:$0xf]
    %v1946 = vld [vmem:[%s4 + $0x188] sm:$0xf]
    %v1947 = vld [vmem:[%s4 + $0x18c] sm:$0xf]
    %v1948 = vld [vmem:[%s4 + $0x190] sm:$0xf]
    %v1949 = vld [vmem:[%s4 + $0x194] sm:$0xf]
    %v1950 = vld [vmem:[%s4 + $0x198] sm:$0xf]
    %v1951 = vld [vmem:[%s4 + $0x19c] sm:$0xf]
    %v1952 = vld [vmem:[%s4 + $0x1a0] sm:$0xf]
    %v1953 = vld [vmem:[%s4 + $0x1a4] sm:$0xf]
    %v1954 = vld [vmem:[%s4 + $0x1a8] sm:$0xf]
    %v1955 = vld [vmem:[%s4 + $0x1ac] sm:$0xf]
    %v1956 = vld [vmem:[%s4 + $0x1b0] sm:$0xf]
    %v1957 = vld [vmem:[%s4 + $0x1b4] sm:$0xf]
    %v1958 = vld [vmem:[%s4 + $0x1b8] sm:$0xf]
    %v1959 = vld [vmem:[%s4 + $0x1bc] sm:$0xf]
    %v1960 = vld [vmem:[%s4 + $0x1c0] sm:$0xf]
    %v1961 = vld [vmem:[%s4 + $0x1c4] sm:$0xf]
    %v1962 = vld [vmem:[%s4 + $0x1c8] sm:$0xf]
    %v1963 = vld [vmem:[%s4 + $0x1cc] sm:$0xf]
    %v1964 = vld [vmem:[%s4 + $0x1d0] sm:$0xf]
    %v1965 = vld [vmem:[%s4 + $0x1d4] sm:$0xf]
    %v1966 = vld [vmem:[%s4 + $0x1d8] sm:$0xf]
    %v1967 = vld [vmem:[%s4 + $0x1dc] sm:$0xf]
    %v1968 = vld [vmem:[%s4 + $0x1e0] sm:$0xf]
    %v1969 = vld [vmem:[%s4 + $0x1e4] sm:$0xf]
    %v1970 = vld [vmem:[%s4 + $0x1e8] sm:$0xf]
    %v1971 = vld [vmem:[%s4 + $0x1ec] sm:$0xf]
    %v1972 = vld [vmem:[%s4 + $0x1f0] sm:$0xf]
    %v1973 = vld [vmem:[%s4 + $0x1f4] sm:$0xf]
    %v1974 = vld [vmem:[%s4 + $0x1f8] sm:$0xf]
    %v1975 = vld [vmem:[%s4 + $0x1fc] sm:$0xf]
    %v1992 = vunpack.c.l.b16 %v1848
    %v1993 = vunpack.c.l.b16 %v1849
    %v1994 = vunpack.c.l.b16 %v1850
    %v1995 = vunpack.c.l.b16 %v1851
    %v1996 = vunpack.c.l.b16 %v1852
    %v1997 = vunpack.c.l.b16 %v1853
    %v1998 = vunpack.c.l.b16 %v1854
    %v1999 = vunpack.c.l.b16 %v1855
    %v2000 = vunpack.c.l.b16 %v1856
    %v2001 = vunpack.c.l.b16 %v1857
    %v2002 = vunpack.c.l.b16 %v1858
    %v2003 = vunpack.c.l.b16 %v1859
    %v2004 = vunpack.c.l.b16 %v1860
    %v2005 = vunpack.c.l.b16 %v1861
    %v2006 = vunpack.c.l.b16 %v1862
    %v2007 = vunpack.c.l.b16 %v1863
    %v2008 = vpack.c.b16 %v1993, %v1992
    %v2009 = vpack.c.b16 %v1995, %v1994
    %v2010 = vpack.c.b16 %v1997, %v1996
    %v2011 = vpack.c.b16 %v1999, %v1998
    %v2012 = vpack.c.b16 %v2001, %v2000
    %v2013 = vpack.c.b16 %v2003, %v2002
    %v2014 = vpack.c.b16 %v2005, %v2004
    %v2015 = vpack.c.b16 %v2007, %v2006
    %2024 = vmatprep.subr.bf16.mxu0 0
    %2025 = vmatpush1.bf16.msra.mxu0 %v2008
    %2026 = vmatprep.subr.bf16.mxu0 0
    %2027 = vmatpush1.bf16.msra.mxu0 %v2009
    %2028 = vmatprep.subr.bf16.mxu0 0
    %2029 = vmatpush1.bf16.msra.mxu0 %v2010
    %2030 = vmatprep.subr.bf16.mxu0 0
    %2031 = vmatpush1.bf16.msra.mxu0 %v2011
    %2032 = vmatprep.subr.bf16.mxu0 0
    %2033 = vmatpush1.bf16.msra.mxu0 %v2012
    %2034 = vmatprep.subr.bf16.mxu0 0
    %2035 = vmatpush1.bf16.msra.mxu0 %v2013
    %2036 = vmatprep.subr.bf16.mxu0 0
    %2037 = vmatpush1.bf16.msra.mxu0 %v2014
    %2038 = vmatprep.subr.bf16.mxu0 0
    %2039 = vmatpush1.bf16.msra.mxu0 %v2015
    %2040 = vmatprep.subr.bf16.mxu0 0
    %2041 = vmatpush1.bf16.msra.mxu0 0
    %2042 = vmatprep.subr.bf16.mxu0 0
    %2043 = vmatpush1.bf16.msra.mxu0 0
    %2044 = vmatprep.subr.bf16.mxu0 0
    %2045 = vmatpush1.bf16.msra.mxu0 0
    %2046 = vmatprep.subr.bf16.mxu0 0
    %2047 = vmatpush1.bf16.msra.mxu0 0
    %2048 = vmatprep.subr.bf16.mxu0 0
    %2049 = vmatpush1.bf16.msra.mxu0 0
    %2050 = vmatprep.subr.bf16.mxu0 0
    %2051 = vmatpush1.bf16.msra.mxu0 0
    %2052 = vmatprep.subr.bf16.mxu0 0
    %2053 = vmatpush1.bf16.msra.mxu0 0
    %2054 = vmatprep.subr.bf16.mxu0 0
    %2055 = vmatpush1.bf16.msra.mxu0 0
    %2056 = vmatprep.mubr.bf16.mxu0 0
    %2057 = vmatmul.mubr.bf16.gmra.mrb[0].mxu0 %v38
    %v2058 = vpop.f32.mrb[0].mxu0
    %v2059 = vadd.f32 0.0, %v2058
    %v2060 = vpop.f32.mrb[0].mxu0
    %v2061 = vpop.f32.mrb[0].mxu0
    %v2062 = vadd.f32 0.0, %v2061
    %v2063 = vpop.f32.mrb[0].mxu0
    %2064 = vmatprep.mubr.bf16.mxu0 0
    %2065 = vmatmul.mubr.bf16.gmra.mrb[0].mxu0 %v39
    %v2066 = vpop.f32.mrb[0].mxu0
    %v2067 = vadd.f32 0.0, %v2066
    %v2068 = vpop.f32.mrb[0].mxu0
    %v2069 = vpop.f32.mrb[0].mxu0
    %v2070 = vadd.f32 0.0, %v2069
    %v2071 = vpop.f32.mrb[0].mxu0
    %2072 = vdwg.mxu0
    %v2089 = vunpack.c.l.b16 %v1864
    %v2090 = vunpack.c.l.b16 %v1865
    %v2091 = vunpack.c.l.b16 %v1866
    %v2092 = vunpack.c.l.b16 %v1867
    %v2093 = vunpack.c.l.b16 %v1868
    %v2094 = vunpack.c.l.b16 %v1869
    %v2095 = vunpack.c.l.b16 %v1870
    %v2096 = vunpack.c.l.b16 %v1871
    %v2097 = vunpack.c.l.b16 %v1872
    %v2098 = vunpack.c.l.b16 %v1873
    %v2099 = vunpack.c.l.b16 %v1874
    %v2100 = vunpack.c.l.b16 %v1875
    %v2101 = vunpack.c.l.b16 %v1876
    %v2102 = vunpack.c.l.b16 %v1877
    %v2103 = vunpack.c.l.b16 %v1878
    %v2104 = vunpack.c.l.b16 %v1879
    %v2105 = vpack.c.b16 %v2090, %v2089
    %v2106 = vpack.c.b16 %v2092, %v2091
    %v2107 = vpack.c.b16 %v2094, %v2093
    %v2108 = vpack.c.b16 %v2096, %v2095
    %v2109 = vpack.c.b16 %v2098, %v2097
    %v2110 = vpack.c.b16 %v2100, %v2099
    %v2111 = vpack.c.b16 %v2102, %v2101
    %v2112 = vpack.c.b16 %v2104, %v2103
    %2121 = vmatprep.subr.bf16.mxu0 0
    %2122 = vmatpush1.bf16.msra.mxu0 %v2105
    %2123 = vmatprep.subr.bf16.mxu0 0
    %2124 = vmatpush1.bf16.msra.mxu0 %v2106
    %2125 = vmatprep.subr.bf16.mxu0 0
    %2126 = vmatpush1.bf16.msra.mxu0 %v2107
    %2127 = vmatprep.subr.bf16.mxu0 0
    %2128 = vmatpush1.bf16.msra.mxu0 %v2108
    %2129 = vmatprep.subr.bf16.mxu0 0
    %2130 = vmatpush1.bf16.msra.mxu0 %v2109
    %2131 = vmatprep.subr.bf16.mxu0 0
    %2132 = vmatpush1.bf16.msra.mxu0 %v2110
    %2133 = vmatprep.subr.bf16.mxu0 0
    %2134 = vmatpush1.bf16.msra.mxu0 %v2111
    %2135 = vmatprep.subr.bf16.mxu0 0
    %2136 = vmatpush1.bf16.msra.mxu0 %v2112
    %2137 = vmatprep.subr.bf16.mxu0 0
    %2138 = vmatpush1.bf16.msra.mxu0 0
    %2139 = vmatprep.subr.bf16.mxu0 0
    %2140 = vmatpush1.bf16.msra.mxu0 0
    %2141 = vmatprep.subr.bf16.mxu0 0
    %2142 = vmatpush1.bf16.msra.mxu0 0
    %2143 = vmatprep.subr.bf16.mxu0 0
    %2144 = vmatpush1.bf16.msra.mxu0 0
    %2145 = vmatprep.subr.bf16.mxu0 0
    %2146 = vmatpush1.bf16.msra.mxu0 0
    %2147 = vmatprep.subr.bf16.mxu0 0
    %2148 = vmatpush1.bf16.msra.mxu0 0
    %2149 = vmatprep.subr.bf16.mxu0 0
    %2150 = vmatpush1.bf16.msra.mxu0 0
    %2151 = vmatprep.subr.bf16.mxu0 0
    %2152 = vmatpush1.bf16.msra.mxu0 0
    %2153 = vmatprep.mubr.bf16.mxu0 0
    %2154 = vmatmul.mubr.bf16.gmra.mrb[0].mxu0 %v38
    %v2155 = vpop.f32.mrb[0].mxu0
    %v2156 = vadd.f32 0.0, %v2155
    %v2157 = vpop.f32.mrb[0].mxu0
    %v2158 = vpop.f32.mrb[0].mxu0
    %v2159 = vadd.f32 0.0, %v2158
    %v2160 = vpop.f32.mrb[0].mxu0
    %2161 = vmatprep.mubr.bf16.mxu0 0
    %2162 = vmatmul.mubr.bf16.gmra.mrb[0].mxu0 %v39
    %v2163 = vpop.f32.mrb[0].mxu0
    %v2164 = vadd.f32 0.0, %v2163
    %v2165 = vpop.f32.mrb[0].mxu0
    %v2166 = vpop.f32.mrb[0].mxu0
    %v2167 = vadd.f32 0.0, %v2166
    %v2168 = vpop.f32.mrb[0].mxu0
    %2169 = vdwg.mxu0
    %v2186 = vunpack.c.l.b16 %v1880
    %v2187 = vunpack.c.l.b16 %v1881
    %v2188 = vunpack.c.l.b16 %v1882
    %v2189 = vunpack.c.l.b16 %v1883
    %v2190 = vunpack.c.l.b16 %v1884
    %v2191 = vunpack.c.l.b16 %v1885
    %v2192 = vunpack.c.l.b16 %v1886
    %v2193 = vunpack.c.l.b16 %v1887
    %v2194 = vunpack.c.l.b16 %v1888
    %v2195 = vunpack.c.l.b16 %v1889
    %v2196 = vunpack.c.l.b16 %v1890
    %v2197 = vunpack.c.l.b16 %v1891
    %v2198 = vunpack.c.l.b16 %v1892
    %v2199 = vunpack.c.l.b16 %v1893
    %v2200 = vunpack.c.l.b16 %v1894
    %v2201 = vunpack.c.l.b16 %v1895
    %v2202 = vpack.c.b16 %v2187, %v2186
    %v2203 = vpack.c.b16 %v2189, %v2188
    %v2204 = vpack.c.b16 %v2191, %v2190
    %v2205 = vpack.c.b16 %v2193, %v2192
    %v2206 = vpack.c.b16 %v2195, %v2194
    %v2207 = vpack.c.b16 %v2197, %v2196
    %v2208 = vpack.c.b16 %v2199, %v2198
    %v2209 = vpack.c.b16 %v2201, %v2200
    %2218 = vmatprep.subr.bf16.mxu0 0
    %2219 = vmatpush1.bf16.msra.mxu0 %v2202
    %2220 = vmatprep.subr.bf16.mxu0 0
    %2221 = vmatpush1.bf16.msra.mxu0 %v2203
    %2222 = vmatprep.subr.bf16.mxu0 0
    %2223 = vmatpush1.bf16.msra.mxu0 %v2204
    %2224 = vmatprep.subr.bf16.mxu0 0
    %2225 = vmatpush1.bf16.msra.mxu0 %v2205
    %2226 = vmatprep.subr.bf16.mxu0 0
    %2227 = vmatpush1.bf16.msra.mxu0 %v2206
    %2228 = vmatprep.subr.bf16.mxu0 0
    %2229 = vmatpush1.bf16.msra.mxu0 %v2207
    %2230 = vmatprep.subr.bf16.mxu0 0
    %2231 = vmatpush1.bf16.msra.mxu0 %v2208
    %2232 = vmatprep.subr.bf16.mxu0 0
    %2233 = vmatpush1.bf16.msra.mxu0 %v2209
    %2234 = vmatprep.subr.bf16.mxu0 0
    %2235 = vmatpush1.bf16.msra.mxu0 0
    %2236 = vmatprep.subr.bf16.mxu0 0
    %2237 = vmatpush1.bf16.msra.mxu0 0
    %2238 = vmatprep.subr.bf16.mxu0 0
    %2239 = vmatpush1.bf16.msra.mxu0 0
    %2240 = vmatprep.subr.bf16.mxu0 0
    %2241 = vmatpush1.bf16.msra.mxu0 0
    %2242 = vmatprep.subr.bf16.mxu0 0
    %2243 = vmatpush1.bf16.msra.mxu0 0
    %2244 = vmatprep.subr.bf16.mxu0 0
    %2245 = vmatpush1.bf16.msra.mxu0 0
    %2246 = vmatprep.subr.bf16.mxu0 0
    %2247 = vmatpush1.bf16.msra.mxu0 0
    %2248 = vmatprep.subr.bf16.mxu0 0
    %2249 = vmatpush1.bf16.msra.mxu0 0
    %2250 = vmatprep.mubr.bf16.mxu0 0
    %2251 = vmatmul.mubr.bf16.gmra.mrb[0].mxu0 %v38
    %v2252 = vpop.f32.mrb[0].mxu0
    %v2253 = vadd.f32 0.0, %v2252
    %v2254 = vpop.f32.mrb[0].mxu0
    %v2255 = vpop.f32.mrb[0].mxu0
    %v2256 = vadd.f32 0.0, %v2255
    %v2257 = vpop.f32.mrb[0].mxu0
    %2258 = vmatprep.mubr.bf16.mxu0 0
    %2259 = vmatmul.mubr.bf16.gmra.mrb[0].mxu0 %v39
    %v2260 = vpop.f32.mrb[0].mxu0
    %v2261 = vadd.f32 0.0, %v2260
    %v2262 = vpop.f32.mrb[0].mxu0
    %v2263 = vpop.f32.mrb[0].mxu0
    %v2264 = vadd.f32 0.0, %v2263
    %v2265 = vpop.f32.mrb[0].mxu0
    %2266 = vdwg.mxu0
    %v2283 = vunpack.c.l.b16 %v1896
    %v2284 = vunpack.c.l.b16 %v1897
    %v2285 = vunpack.c.l.b16 %v1898
    %v2286 = vunpack.c.l.b16 %v1899
    %v2287 = vunpack.c.l.b16 %v1900
    %v2288 = vunpack.c.l.b16 %v1901
    %v2289 = vunpack.c.l.b16 %v1902
    %v2290 = vunpack.c.l.b16 %v1903
    %v2291 = vunpack.c.l.b16 %v1904
    %v2292 = vunpack.c.l.b16 %v1905
    %v2293 = vunpack.c.l.b16 %v1906
    %v2294 = vunpack.c.l.b16 %v1907
    %v2295 = vunpack.c.l.b16 %v1908
    %v2296 = vunpack.c.l.b16 %v1909
    %v2297 = vunpack.c.l.b16 %v1910
    %v2298 = vunpack.c.l.b16 %v1911
    %v2299 = vpack.c.b16 %v2284, %v2283
    %v2300 = vpack.c.b16 %v2286, %v2285
    %v2301 = vpack.c.b16 %v2288, %v2287
    %v2302 = vpack.c.b16 %v2290, %v2289
    %v2303 = vpack.c.b16 %v2292, %v2291
    %v2304 = vpack.c.b16 %v2294, %v2293
    %v2305 = vpack.c.b16 %v2296, %v2295
    %v2306 = vpack.c.b16 %v2298, %v2297
    %2315 = vmatprep.subr.bf16.mxu0 0
    %2316 = vmatpush1.bf16.msra.mxu0 %v2299
    %2317 = vmatprep.subr.bf16.mxu0 0
    %2318 = vmatpush1.bf16.msra.mxu0 %v2300
    %2319 = vmatprep.subr.bf16.mxu0 0
    %2320 = vmatpush1.bf16.msra.mxu0 %v2301
    %2321 = vmatprep.subr.bf16.mxu0 0
    %2322 = vmatpush1.bf16.msra.mxu0 %v2302
    %2323 = vmatprep.subr.bf16.mxu0 0
    %2324 = vmatpush1.bf16.msra.mxu0 %v2303
    %2325 = vmatprep.subr.bf16.mxu0 0
    %2326 = vmatpush1.bf16.msra.mxu0 %v2304
    %2327 = vmatprep.subr.bf16.mxu0 0
    %2328 = vmatpush1.bf16.msra.mxu0 %v2305
    %2329 = vmatprep.subr.bf16.mxu0 0
    %2330 = vmatpush1.bf16.msra.mxu0 %v2306
    %2331 = vmatprep.subr.bf16.mxu0 0
    %2332 = vmatpush1.bf16.msra.mxu0 0
    %2333 = vmatprep.subr.bf16.mxu0 0
    %2334 = vmatpush1.bf16.msra.mxu0 0
    %2335 = vmatprep.subr.bf16.mxu0 0
    %2336 = vmatpush1.bf16.msra.mxu0 0
    %2337 = vmatprep.subr.bf16.mxu0 0
    %2338 = vmatpush1.bf16.msra.mxu0 0
    %2339 = vmatprep.subr.bf16.mxu0 0
    %2340 = vmatpush1.bf16.msra.mxu0 0
    %2341 = vmatprep.subr.bf16.mxu0 0
    %2342 = vmatpush1.bf16.msra.mxu0 0
    %2343 = vmatprep.subr.bf16.mxu0 0
    %2344 = vmatpush1.bf16.msra.mxu0 0
    %2345 = vmatprep.subr.bf16.mxu0 0
    %2346 = vmatpush1.bf16.msra.mxu0 0
    %2347 = vmatprep.mubr.bf16.mxu0 0
    %2348 = vmatmul.mubr.bf16.gmra.mrb[0].mxu0 %v38
    %v2349 = vpop.f32.mrb[0].mxu0
    %v2350 = vadd.f32 0.0, %v2349
    %v2351 = vpop.f32.mrb[0].mxu0
    %v2352 = vpop.f32.mrb[0].mxu0
    %v2353 = vadd.f32 0.0, %v2352
    %v2354 = vpop.f32.mrb[0].mxu0
    %2355 = vmatprep.mubr.bf16.mxu0 0
    %2356 = vmatmul.mubr.bf16.gmra.mrb[0].mxu0 %v39
    %v2357 = vpop.f32.mrb[0].mxu0
    %v2358 = vadd.f32 0.0, %v2357
    %v2359 = vpop.f32.mrb[0].mxu0
    %v2360 = vpop.f32.mrb[0].mxu0
    %v2361 = vadd.f32 0.0, %v2360
    %v2362 = vpop.f32.mrb[0].mxu0
    %2363 = vdwg.mxu0
    %v2380 = vunpack.c.l.b16 %v1912
    %v2381 = vunpack.c.l.b16 %v1913
    %v2382 = vunpack.c.l.b16 %v1914
    %v2383 = vunpack.c.l.b16 %v1915
    %v2384 = vunpack.c.l.b16 %v1916
    %v2385 = vunpack.c.l.b16 %v1917
    %v2386 = vunpack.c.l.b16 %v1918
    %v2387 = vunpack.c.l.b16 %v1919
    %v2388 = vunpack.c.l.b16 %v1920
    %v2389 = vunpack.c.l.b16 %v1921
    %v2390 = vunpack.c.l.b16 %v1922
    %v2391 = vunpack.c.l.b16 %v1923
    %v2392 = vunpack.c.l.b16 %v1924
    %v2393 = vunpack.c.l.b16 %v1925
    %v2394 = vunpack.c.l.b16 %v1926
    %v2395 = vunpack.c.l.b16 %v1927
    %v2396 = vpack.c.b16 %v2381, %v2380
    %v2397 = vpack.c.b16 %v2383, %v2382
    %v2398 = vpack.c.b16 %v2385, %v2384
    %v2399 = vpack.c.b16 %v2387, %v2386
    %v2400 = vpack.c.b16 %v2389, %v2388
    %v2401 = vpack.c.b16 %v2391, %v2390
    %v2402 = vpack.c.b16 %v2393, %v2392
    %v2403 = vpack.c.b16 %v2395, %v2394
    %2412 = vmatprep.subr.bf16.mxu0 0
    %2413 = vmatpush1.bf16.msra.mxu0 %v2396
    %2414 = vmatprep.subr.bf16.mxu0 0
    %2415 = vmatpush1.bf16.msra.mxu0 %v2397
    %2416 = vmatprep.subr.bf16.mxu0 0
    %2417 = vmatpush1.bf16.msra.mxu0 %v2398
    %2418 = vmatprep.subr.bf16.mxu0 0
    %2419 = vmatpush1.bf16.msra.mxu0 %v2399
    %2420 = vmatprep.subr.bf16.mxu0 0
    %2421 = vmatpush1.bf16.msra.mxu0 %v2400
    %2422 = vmatprep.subr.bf16.mxu0 0
    %2423 = vmatpush1.bf16.msra.mxu0 %v2401
    %2424 = vmatprep.subr.bf16.mxu0 0
    %2425 = vmatpush1.bf16.msra.mxu0 %v2402
    %2426 = vmatprep.subr.bf16.mxu0 0
    %2427 = vmatpush1.bf16.msra.mxu0 %v2403
    %2428 = vmatprep.subr.bf16.mxu0 0
    %2429 = vmatpush1.bf16.msra.mxu0 0
    %2430 = vmatprep.subr.bf16.mxu0 0
    %2431 = vmatpush1.bf16.msra.mxu0 0
    %2432 = vmatprep.subr.bf16.mxu0 0
    %2433 = vmatpush1.bf16.msra.mxu0 0
    %2434 = vmatprep.subr.bf16.mxu0 0
    %2435 = vmatpush1.bf16.msra.mxu0 0
    %2436 = vmatprep.subr.bf16.mxu0 0
    %2437 = vmatpush1.bf16.msra.mxu0 0
    %2438 = vmatprep.subr.bf16.mxu0 0
    %2439 = vmatpush1.bf16.msra.mxu0 0
    %2440 = vmatprep.subr.bf16.mxu0 0
    %2441 = vmatpush1.bf16.msra.mxu0 0
    %2442 = vmatprep.subr.bf16.mxu0 0
    %2443 = vmatpush1.bf16.msra.mxu0 0
    %2444 = vmatprep.mubr.bf16.mxu0 0
    %2445 = vmatmul.mubr.bf16.gmra.mrb[0].mxu0 %v38
    %v2446 = vpop.f32.mrb[0].mxu0
    %v2447 = vadd.f32 0.0, %v2446
    %v2448 = vpop.f32.mrb[0].mxu0
    %v2449 = vpop.f32.mrb[0].mxu0
    %v2450 = vadd.f32 0.0, %v2449
    %v2451 = vpop.f32.mrb[0].mxu0
    %2452 = vmatprep.mubr.bf16.mxu0 0
    %2453 = vmatmul.mubr.bf16.gmra.mrb[0].mxu0 %v39
    %v2454 = vpop.f32.mrb[0].mxu0
    %v2455 = vadd.f32 0.0, %v2454
    %v2456 = vpop.f32.mrb[0].mxu0
    %v2457 = vpop.f32.mrb[0].mxu0
    %v2458 = vadd.f32 0.0, %v2457
    %v2459 = vpop.f32.mrb[0].mxu0
    %2460 = vdwg.mxu0
    %v2477 = vunpack.c.l.b16 %v1928
    %v2478 = vunpack.c.l.b16 %v1929
    %v2479 = vunpack.c.l.b16 %v1930
    %v2480 = vunpack.c.l.b16 %v1931
    %v2481 = vunpack.c.l.b16 %v1932
    %v2482 = vunpack.c.l.b16 %v1933
    %v2483 = vunpack.c.l.b16 %v1934
    %v2484 = vunpack.c.l.b16 %v1935
    %v2485 = vunpack.c.l.b16 %v1936
    %v2486 = vunpack.c.l.b16 %v1937
    %v2487 = vunpack.c.l.b16 %v1938
    %v2488 = vunpack.c.l.b16 %v1939
    %v2489 = vunpack.c.l.b16 %v1940
    %v2490 = vunpack.c.l.b16 %v1941
    %v2491 = vunpack.c.l.b16 %v1942
    %v2492 = vunpack.c.l.b16 %v1943
    %v2493 = vpack.c.b16 %v2478, %v2477
    %v2494 = vpack.c.b16 %v2480, %v2479
    %v2495 = vpack.c.b16 %v2482, %v2481
    %v2496 = vpack.c.b16 %v2484, %v2483
    %v2497 = vpack.c.b16 %v2486, %v2485
    %v2498 = vpack.c.b16 %v2488, %v2487
    %v2499 = vpack.c.b16 %v2490, %v2489
    %v2500 = vpack.c.b16 %v2492, %v2491
    %2509 = vmatprep.subr.bf16.mxu0 0
    %2510 = vmatpush1.bf16.msra.mxu0 %v2493
    %2511 = vmatprep.subr.bf16.mxu0 0
    %2512 = vmatpush1.bf16.msra.mxu0 %v2494
    %2513 = vmatprep.subr.bf16.mxu0 0
    %2514 = vmatpush1.bf16.msra.mxu0 %v2495
    %2515 = vmatprep.subr.bf16.mxu0 0
    %2516 = vmatpush1.bf16.msra.mxu0 %v2496
    %2517 = vmatprep.subr.bf16.mxu0 0
    %2518 = vmatpush1.bf16.msra.mxu0 %v2497
    %2519 = vmatprep.subr.bf16.mxu0 0
    %2520 = vmatpush1.bf16.msra.mxu0 %v2498
    %2521 = vmatprep.subr.bf16.mxu0 0
    %2522 = vmatpush1.bf16.msra.mxu0 %v2499
    %2523 = vmatprep.subr.bf16.mxu0 0
    %2524 = vmatpush1.bf16.msra.mxu0 %v2500
    %2525 = vmatprep.subr.bf16.mxu0 0
    %2526 = vmatpush1.bf16.msra.mxu0 0
    %2527 = vmatprep.subr.bf16.mxu0 0
    %2528 = vmatpush1.bf16.msra.mxu0 0
    %2529 = vmatprep.subr.bf16.mxu0 0
    %2530 = vmatpush1.bf16.msra.mxu0 0
    %2531 = vmatprep.subr.bf16.mxu0 0
    %2532 = vmatpush1.bf16.msra.mxu0 0
    %2533 = vmatprep.subr.bf16.mxu0 0
    %2534 = vmatpush1.bf16.msra.mxu0 0
    %2535 = vmatprep.subr.bf16.mxu0 0
    %2536 = vmatpush1.bf16.msra.mxu0 0
    %2537 = vmatprep.subr.bf16.mxu0 0
    %2538 = vmatpush1.bf16.msra.mxu0 0
    %2539 = vmatprep.subr.bf16.mxu0 0
    %2540 = vmatpush1.bf16.msra.mxu0 0
    %2541 = vmatprep.mubr.bf16.mxu0 0
    %2542 = vmatmul.mubr.bf16.gmra.mrb[0].mxu0 %v38
    %v2543 = vpop.f32.mrb[0].mxu0
    %v2544 = vadd.f32 0.0, %v2543
    %v2545 = vpop.f32.mrb[0].mxu0
    %v2546 = vpop.f32.mrb[0].mxu0
    %v2547 = vadd.f32 0.0, %v2546
    %v2548 = vpop.f32.mrb[0].mxu0
    %2549 = vmatprep.mubr.bf16.mxu0 0
    %2550 = vmatmul.mubr.bf16.gmra.mrb[0].mxu0 %v39
    %v2551 = vpop.f32.mrb[0].mxu0
    %v2552 = vadd.f32 0.0, %v2551
    %v2553 = vpop.f32.mrb[0].mxu0
    %v2554 = vpop.f32.mrb[0].mxu0
    %v2555 = vadd.f32 0.0, %v2554
    %v2556 = vpop.f32.mrb[0].mxu0
    %2557 = vdwg.mxu0
    %v2574 = vunpack.c.l.b16 %v1944
    %v2575 = vunpack.c.l.b16 %v1945
    %v2576 = vunpack.c.l.b16 %v1946
    %v2577 = vunpack.c.l.b16 %v1947
    %v2578 = vunpack.c.l.b16 %v1948
    %v2579 = vunpack.c.l.b16 %v1949
    %v2580 = vunpack.c.l.b16 %v1950
    %v2581 = vunpack.c.l.b16 %v1951
    %v2582 = vunpack.c.l.b16 %v1952
    %v2583 = vunpack.c.l.b16 %v1953
    %v2584 = vunpack.c.l.b16 %v1954
    %v2585 = vunpack.c.l.b16 %v1955
    %v2586 = vunpack.c.l.b16 %v1956
    %v2587 = vunpack.c.l.b16 %v1957
    %v2588 = vunpack.c.l.b16 %v1958
    %v2589 = vunpack.c.l.b16 %v1959
    %v2590 = vpack.c.b16 %v2575, %v2574
    %v2591 = vpack.c.b16 %v2577, %v2576
    %v2592 = vpack.c.b16 %v2579, %v2578
    %v2593 = vpack.c.b16 %v2581, %v2580
    %v2594 = vpack.c.b16 %v2583, %v2582
    %v2595 = vpack.c.b16 %v2585, %v2584
    %v2596 = vpack.c.b16 %v2587, %v2586
    %v2597 = vpack.c.b16 %v2589, %v2588
    %2606 = vmatprep.subr.bf16.mxu0 0
    %2607 = vmatpush1.bf16.msra.mxu0 %v2590
    %2608 = vmatprep.subr.bf16.mxu0 0
    %2609 = vmatpush1.bf16.msra.mxu0 %v2591
    %2610 = vmatprep.subr.bf16.mxu0 0
    %2611 = vmatpush1.bf16.msra.mxu0 %v2592
    %2612 = vmatprep.subr.bf16.mxu0 0
    %2613 = vmatpush1.bf16.msra.mxu0 %v2593
    %2614 = vmatprep.subr.bf16.mxu0 0
    %2615 = vmatpush1.bf16.msra.mxu0 %v2594
    %2616 = vmatprep.subr.bf16.mxu0 0
    %2617 = vmatpush1.bf16.msra.mxu0 %v2595
    %2618 = vmatprep.subr.bf16.mxu0 0
    %2619 = vmatpush1.bf16.msra.mxu0 %v2596
    %2620 = vmatprep.subr.bf16.mxu0 0
    %2621 = vmatpush1.bf16.msra.mxu0 %v2597
    %2622 = vmatprep.subr.bf16.mxu0 0
    %2623 = vmatpush1.bf16.msra.mxu0 0
    %2624 = vmatprep.subr.bf16.mxu0 0
    %2625 = vmatpush1.bf16.msra.mxu0 0
    %2626 = vmatprep.subr.bf16.mxu0 0
    %2627 = vmatpush1.bf16.msra.mxu0 0
    %2628 = vmatprep.subr.bf16.mxu0 0
    %2629 = vmatpush1.bf16.msra.mxu0 0
    %2630 = vmatprep.subr.bf16.mxu0 0
    %2631 = vmatpush1.bf16.msra.mxu0 0
    %2632 = vmatprep.subr.bf16.mxu0 0
    %2633 = vmatpush1.bf16.msra.mxu0 0
    %2634 = vmatprep.subr.bf16.mxu0 0
    %2635 = vmatpush1.bf16.msra.mxu0 0
    %2636 = vmatprep.subr.bf16.mxu0 0
    %2637 = vmatpush1.bf16.msra.mxu0 0
    %2638 = vmatprep.mubr.bf16.mxu0 0
    %2639 = vmatmul.mubr.bf16.gmra.mrb[0].mxu0 %v38
    %v2640 = vpop.f32.mrb[0].mxu0
    %v2641 = vadd.f32 0.0, %v2640
    %v2642 = vpop.f32.mrb[0].mxu0
    %v2643 = vpop.f32.mrb[0].mxu0
    %v2644 = vadd.f32 0.0, %v2643
    %v2645 = vpop.f32.mrb[0].mxu0
    %2646 = vmatprep.mubr.bf16.mxu0 0
    %2647 = vmatmul.mubr.bf16.gmra.mrb[0].mxu0 %v39
    %v2648 = vpop.f32.mrb[0].mxu0
    %v2649 = vadd.f32 0.0, %v2648
    %v2650 = vpop.f32.mrb[0].mxu0
    %v2651 = vpop.f32.mrb[0].mxu0
    %v2652 = vadd.f32 0.0, %v2651
    %v2653 = vpop.f32.mrb[0].mxu0
    %2654 = vdwg.mxu0
    %v2671 = vunpack.c.l.b16 %v1960
    %v2672 = vunpack.c.l.b16 %v1961
    %v2673 = vunpack.c.l.b16 %v1962
    %v2674 = vunpack.c.l.b16 %v1963
    %v2675 = vunpack.c.l.b16 %v1964
    %v2676 = vunpack.c.l.b16 %v1965
    %v2677 = vunpack.c.l.b16 %v1966
    %v2678 = vunpack.c.l.b16 %v1967
    %v2679 = vunpack.c.l.b16 %v1968
    %v2680 = vunpack.c.l.b16 %v1969
    %v2681 = vunpack.c.l.b16 %v1970
    %v2682 = vunpack.c.l.b16 %v1971
    %v2683 = vunpack.c.l.b16 %v1972
    %v2684 = vunpack.c.l.b16 %v1973
    %v2685 = vunpack.c.l.b16 %v1974
    %v2686 = vunpack.c.l.b16 %v1975
    %v2687 = vpack.c.b16 %v2672, %v2671
    %v2688 = vpack.c.b16 %v2674, %v2673
    %v2689 = vpack.c.b16 %v2676, %v2675
    %v2690 = vpack.c.b16 %v2678, %v2677
    %v2691 = vpack.c.b16 %v2680, %v2679
    %v2692 = vpack.c.b16 %v2682, %v2681
    %v2693 = vpack.c.b16 %v2684, %v2683
    %v2694 = vpack.c.b16 %v2686, %v2685
    %2703 = vmatprep.subr.bf16.mxu0 0
    %2704 = vmatpush1.bf16.msra.mxu0 %v2687
    %2705 = vmatprep.subr.bf16.mxu0 0
    %2706 = vmatpush1.bf16.msra.mxu0 %v2688
    %2707 = vmatprep.subr.bf16.mxu0 0
    %2708 = vmatpush1.bf16.msra.mxu0 %v2689
    %2709 = vmatprep.subr.bf16.mxu0 0
    %2710 = vmatpush1.bf16.msra.mxu0 %v2690
    %2711 = vmatprep.subr.bf16.mxu0 0
    %2712 = vmatpush1.bf16.msra.mxu0 %v2691
    %2713 = vmatprep.subr.bf16.mxu0 0
    %2714 = vmatpush1.bf16.msra.mxu0 %v2692
    %2715 = vmatprep.subr.bf16.mxu0 0
    %2716 = vmatpush1.bf16.msra.mxu0 %v2693
    %2717 = vmatprep.subr.bf16.mxu0 0
    %2718 = vmatpush1.bf16.msra.mxu0 %v2694
    %2719 = vmatprep.subr.bf16.mxu0 0
    %2720 = vmatpush1.bf16.msra.mxu0 0
    %2721 = vmatprep.subr.bf16.mxu0 0
    %2722 = vmatpush1.bf16.msra.mxu0 0
    %2723 = vmatprep.subr.bf16.mxu0 0
    %2724 = vmatpush1.bf16.msra.mxu0 0
    %2725 = vmatprep.subr.bf16.mxu0 0
    %2726 = vmatpush1.bf16.msra.mxu0 0
    %2727 = vmatprep.subr.bf16.mxu0 0
    %2728 = vmatpush1.bf16.msra.mxu0 0
    %2729 = vmatprep.subr.bf16.mxu0 0
    %2730 = vmatpush1.bf16.msra.mxu0 0
    %2731 = vmatprep.subr.bf16.mxu0 0
    %2732 = vmatpush1.bf16.msra.mxu0 0
    %2733 = vmatprep.subr.bf16.mxu0 0
    %2734 = vmatpush1.bf16.msra.mxu0 0
    %2735 = vmatprep.mubr.bf16.mxu0 0
    %2736 = vmatmul.mubr.bf16.gmra.mrb[0].mxu0 %v38
    %v2737 = vpop.f32.mrb[0].mxu0
    %v2738 = vadd.f32 0.0, %v2737
    %v2739 = vpop.f32.mrb[0].mxu0
    %v2740 = vpop.f32.mrb[0].mxu0
    %v2741 = vadd.f32 0.0, %v2740
    %v2742 = vpop.f32.mrb[0].mxu0
    %2743 = vmatprep.mubr.bf16.mxu0 0
    %2744 = vmatmul.mubr.bf16.gmra.mrb[0].mxu0 %v39
    %v2745 = vpop.f32.mrb[0].mxu0
    %v2746 = vadd.f32 0.0, %v2745
    %v2747 = vpop.f32.mrb[0].mxu0
    %v2748 = vpop.f32.mrb[0].mxu0
    %v2749 = vadd.f32 0.0, %v2748
    %v2750 = vpop.f32.mrb[0].mxu0
    %2751 = vdwg.mxu0
    %v2752 = vmul.f32 %v251, 0.25
    %v2753 = vmul.f32 %v254, 0.25
    %v2754 = vmul.f32 %v259, 0.25
    %v2755 = vmul.f32 %v262, 0.25
    %v2756 = vmul.f32 %v348, 0.25
    %v2757 = vmul.f32 %v351, 0.25
    %v2758 = vmul.f32 %v356, 0.25
    %v2759 = vmul.f32 %v359, 0.25
    %v2760 = vmul.f32 %v445, 0.25
    %v2761 = vmul.f32 %v448, 0.25
    %v2762 = vmul.f32 %v453, 0.25
    %v2763 = vmul.f32 %v456, 0.25
    %v2764 = vmul.f32 %v542, 0.25
    %v2765 = vmul.f32 %v545, 0.25
    %v2766 = vmul.f32 %v550, 0.25
    %v2767 = vmul.f32 %v553, 0.25
    %v2768 = vmul.f32 %v639, 0.25
    %v2769 = vmul.f32 %v642, 0.25
    %v2770 = vmul.f32 %v647, 0.25
    %v2771 = vmul.f32 %v650, 0.25
    %v2772 = vmul.f32 %v736, 0.25
    %v2773 = vmul.f32 %v739, 0.25
    %v2774 = vmul.f32 %v744, 0.25
    %v2775 = vmul.f32 %v747, 0.25
    %v2776 = vmul.f32 %v833, 0.25
    %v2777 = vmul.f32 %v836, 0.25
    %v2778 = vmul.f32 %v841, 0.25
    %v2779 = vmul.f32 %v844, 0.25
    %v2780 = vmul.f32 %v930, 0.25
    %v2781 = vmul.f32 %v933, 0.25
    %v2782 = vmul.f32 %v938, 0.25
    %v2783 = vmul.f32 %v941, 0.25
    %v2784 = vpack.c.bf16 %v2753, %v2752
    %v2785 = vpack.c.bf16 %v2755, %v2754
    %v2786 = vpack.c.bf16 %v2757, %v2756
    %v2787 = vpack.c.bf16 %v2759, %v2758
    %v2788 = vpack.c.bf16 %v2761, %v2760
    %v2789 = vpack.c.bf16 %v2763, %v2762
    %v2790 = vpack.c.bf16 %v2765, %v2764
    %v2791 = vpack.c.bf16 %v2767, %v2766
    %v2792 = vpack.c.bf16 %v2769, %v2768
    %v2793 = vpack.c.bf16 %v2771, %v2770
    %v2794 = vpack.c.bf16 %v2773, %v2772
    %v2795 = vpack.c.bf16 %v2775, %v2774
    %v2796 = vpack.c.bf16 %v2777, %v2776
    %v2797 = vpack.c.bf16 %v2779, %v2778
    %v2798 = vpack.c.bf16 %v2781, %v2780
    %v2799 = vpack.c.bf16 %v2783, %v2782
    %v2800 = vpack.c.bf16 %v1158, %v1155
    %v2801 = vpack.c.bf16 %v1166, %v1163
    %v2802 = vpack.c.bf16 %v1255, %v1252
    %v2803 = vpack.c.bf16 %v1263, %v1260
    %v2804 = vpack.c.bf16 %v1352, %v1349
    %v2805 = vpack.c.bf16 %v1360, %v1357
    %v2806 = vpack.c.bf16 %v1449, %v1446
    %v2807 = vpack.c.bf16 %v1457, %v1454
    %v2808 = vpack.c.bf16 %v1546, %v1543
    %v2809 = vpack.c.bf16 %v1554, %v1551
    %v2810 = vpack.c.bf16 %v1643, %v1640
    %v2811 = vpack.c.bf16 %v1651, %v1648
    %v2812 = vpack.c.bf16 %v1740, %v1737
    %v2813 = vpack.c.bf16 %v1748, %v1745
    %v2814 = vpack.c.bf16 %v1837, %v1834
    %v2815 = vpack.c.bf16 %v1845, %v1842
    %vm2816 = vcmask 130048
    %v2818 = vsel %vm2816, %v2784, 0
    %v2821 = vsel %vm2816, %v2800, 0
    %2823 = vmatprep.subr.bf16.mxu0 0
    %2824 = vmatpush1.bf16.xpose.msra.mxu0 %v2821
    %2825 = vmatprep.subr.bf16.mxu0 0
    %2826 = vmatpush1.bf16.xpose.msra.mxu0 0
    %2827 = vmatprep.subr.bf16.mxu0 0
    %2828 = vmatpush1.bf16.xpose.msra.mxu0 0
    %2829 = vmatprep.subr.bf16.mxu0 0
    %2830 = vmatpush1.bf16.xpose.msra.mxu0 0
    %2831 = vmatprep.subr.bf16.mxu0 0
    %2832 = vmatpush1.bf16.xpose.msra.mxu0 0
    %2833 = vmatprep.subr.bf16.mxu0 0
    %2834 = vmatpush1.bf16.xpose.msra.mxu0 0
    %2835 = vmatprep.subr.bf16.mxu0 0
    %2836 = vmatpush1.bf16.xpose.msra.mxu0 0
    %2837 = vmatprep.subr.bf16.mxu0 0
    %2838 = vmatpush1.bf16.xpose.msra.mxu0 0
    %2839 = vmatprep.subr.bf16.mxu0 0
    %2840 = vmatpush1.bf16.xpose.msra.mxu0 0
    %2841 = vmatprep.subr.bf16.mxu0 0
    %2842 = vmatpush1.bf16.xpose.msra.mxu0 0
    %2843 = vmatprep.subr.bf16.mxu0 0
    %2844 = vmatpush1.bf16.xpose.msra.mxu0 0
    %2845 = vmatprep.subr.bf16.mxu0 0
    %2846 = vmatpush1.bf16.xpose.msra.mxu0 0
    %2847 = vmatprep.subr.bf16.mxu0 0
    %2848 = vmatpush1.bf16.xpose.msra.mxu0 0
    %2849 = vmatprep.subr.bf16.mxu0 0
    %2850 = vmatpush1.bf16.xpose.msra.mxu0 0
    %2851 = vmatprep.subr.bf16.mxu0 0
    %2852 = vmatpush1.bf16.xpose.msra.mxu0 0
    %2853 = vmatprep.subr.bf16.mxu0 0
    %2854 = vmatpush1.bf16.xpose.msra.mxu0 0
    %2855 = vmatprep.mubr.bf16.mxu0 0
    %2856 = vmatmul.mubr.bf16.gmra.mrb[0].mxu0 %v2818
    %v2857 = vpop.f32.mrb[0].mxu0
    %v2858 = vadd.f32 0.0, %v2857
    %v2859 = vpop.f32.mrb[0].mxu0
    %v2860 = vpop.f32.mrb[0].mxu0
    %v2861 = vadd.f32 0.0, %v2860
    %v2862 = vpop.f32.mrb[0].mxu0
    %2863 = vdwg.mxu0
    %v2865 = vsel %vm2816, %v2785, 0
    %v2868 = vsel %vm2816, %v2801, 0
    %2870 = vmatprep.subr.bf16.mxu0 0
    %2871 = vmatpush1.bf16.xpose.msra.mxu0 %v2868
    %2872 = vmatprep.subr.bf16.mxu0 0
    %2873 = vmatpush1.bf16.xpose.msra.mxu0 0
    %2874 = vmatprep.subr.bf16.mxu0 0
    %2875 = vmatpush1.bf16.xpose.msra.mxu0 0
    %2876 = vmatprep.subr.bf16.mxu0 0
    %2877 = vmatpush1.bf16.xpose.msra.mxu0 0
    %2878 = vmatprep.subr.bf16.mxu0 0
    %2879 = vmatpush1.bf16.xpose.msra.mxu0 0
    %2880 = vmatprep.subr.bf16.mxu0 0
    %2881 = vmatpush1.bf16.xpose.msra.mxu0 0
    %2882 = vmatprep.subr.bf16.mxu0 0
    %2883 = vmatpush1.bf16.xpose.msra.mxu0 0
    %2884 = vmatprep.subr.bf16.mxu0 0
    %2885 = vmatpush1.bf16.xpose.msra.mxu0 0
    %2886 = vmatprep.subr.bf16.mxu0 0
    %2887 = vmatpush1.bf16.xpose.msra.mxu0 0
    %2888 = vmatprep.subr.bf16.mxu0 0
    %2889 = vmatpush1.bf16.xpose.msra.mxu0 0
    %2890 = vmatprep.subr.bf16.mxu0 0
    %2891 = vmatpush1.bf16.xpose.msra.mxu0 0
    %2892 = vmatprep.subr.bf16.mxu0 0
    %2893 = vmatpush1.bf16.xpose.msra.mxu0 0
    %2894 = vmatprep.subr.bf16.mxu0 0
    %2895 = vmatpush1.bf16.xpose.msra.mxu0 0
    %2896 = vmatprep.subr.bf16.mxu0 0
    %2897 = vmatpush1.bf16.xpose.msra.mxu0 0
    %2898 = vmatprep.subr.bf16.mxu0 0
    %2899 = vmatpush1.bf16.xpose.msra.mxu0 0
    %2900 = vmatprep.subr.bf16.mxu0 0
    %2901 = vmatpush1.bf16.xpose.msra.mxu0 0
    %2902 = vmatprep.mubr.bf16.mxu0 0
    %2903 = vmatmul.mubr.bf16.gmra.mrb[0].mxu0 %v2865
    %v2904 = vpop.f32.mrb[0].mxu0
    %v2905 = vadd.f32 0.0, %v2904
    %v2906 = vpop.f32.mrb[0].mxu0
    %v2907 = vpop.f32.mrb[0].mxu0
    %v2908 = vadd.f32 0.0, %v2907
    %v2909 = vpop.f32.mrb[0].mxu0
    %2910 = vdwg.mxu0
    %v2912 = vsel %vm2816, %v2786, 0
    %v2915 = vsel %vm2816, %v2802, 0
    %2917 = vmatprep.subr.bf16.mxu0 0
    %2918 = vmatpush1.bf16.xpose.msra.mxu0 %v2915
    %2919 = vmatprep.subr.bf16.mxu0 0
    %2920 = vmatpush1.bf16.xpose.msra.mxu0 0
    %2921 = vmatprep.subr.bf16.mxu0 0
    %2922 = vmatpush1.bf16.xpose.msra.mxu0 0
    %2923 = vmatprep.subr.bf16.mxu0 0
    %2924 = vmatpush1.bf16.xpose.msra.mxu0 0
    %2925 = vmatprep.subr.bf16.mxu0 0
    %2926 = vmatpush1.bf16.xpose.msra.mxu0 0
    %2927 = vmatprep.subr.bf16.mxu0 0
    %2928 = vmatpush1.bf16.xpose.msra.mxu0 0
    %2929 = vmatprep.subr.bf16.mxu0 0
    %2930 = vmatpush1.bf16.xpose.msra.mxu0 0
    %2931 = vmatprep.subr.bf16.mxu0 0
    %2932 = vmatpush1.bf16.xpose.msra.mxu0 0
    %2933 = vmatprep.subr.bf16.mxu0 0
    %2934 = vmatpush1.bf16.xpose.msra.mxu0 0
    %2935 = vmatprep.subr.bf16.mxu0 0
    %2936 = vmatpush1.bf16.xpose.msra.mxu0 0
    %2937 = vmatprep.subr.bf16.mxu0 0
    %2938 = vmatpush1.bf16.xpose.msra.mxu0 0
    %2939 = vmatprep.subr.bf16.mxu0 0
    %2940 = vmatpush1.bf16.xpose.msra.mxu0 0
    %2941 = vmatprep.subr.bf16.mxu0 0
    %2942 = vmatpush1.bf16.xpose.msra.mxu0 0
    %2943 = vmatprep.subr.bf16.mxu0 0
    %2944 = vmatpush1.bf16.xpose.msra.mxu0 0
    %2945 = vmatprep.subr.bf16.mxu0 0
    %2946 = vmatpush1.bf16.xpose.msra.mxu0 0
    %2947 = vmatprep.subr.bf16.mxu0 0
    %2948 = vmatpush1.bf16.xpose.msra.mxu0 0
    %2949 = vmatprep.mubr.bf16.mxu0 0
    %2950 = vmatmul.mubr.bf16.gmra.mrb[0].mxu0 %v2912
    %v2951 = vpop.f32.mrb[0].mxu0
    %v2952 = vadd.f32 0.0, %v2951
    %v2953 = vpop.f32.mrb[0].mxu0
    %v2954 = vpop.f32.mrb[0].mxu0
    %v2955 = vadd.f32 0.0, %v2954
    %v2956 = vpop.f32.mrb[0].mxu0
    %2957 = vdwg.mxu0
    %v2959 = vsel %vm2816, %v2787, 0
    %v2962 = vsel %vm2816, %v2803, 0
    %2964 = vmatprep.subr.bf16.mxu0 0
    %2965 = vmatpush1.bf16.xpose.msra.mxu0 %v2962
    %2966 = vmatprep.subr.bf16.mxu0 0
    %2967 = vmatpush1.bf16.xpose.msra.mxu0 0
    %2968 = vmatprep.subr.bf16.mxu0 0
    %2969 = vmatpush1.bf16.xpose.msra.mxu0 0
    %2970 = vmatprep.subr.bf16.mxu0 0
    %2971 = vmatpush1.bf16.xpose.msra.mxu0 0
    %2972 = vmatprep.subr.bf16.mxu0 0
    %2973 = vmatpush1.bf16.xpose.msra.mxu0 0
    %2974 = vmatprep.subr.bf16.mxu0 0
    %2975 = vmatpush1.bf16.xpose.msra.mxu0 0
    %2976 = vmatprep.subr.bf16.mxu0 0
    %2977 = vmatpush1.bf16.xpose.msra.mxu0 0
    %2978 = vmatprep.subr.bf16.mxu0 0
    %2979 = vmatpush1.bf16.xpose.msra.mxu0 0
    %2980 = vmatprep.subr.bf16.mxu0 0
    %2981 = vmatpush1.bf16.xpose.msra.mxu0 0
    %2982 = vmatprep.subr.bf16.mxu0 0
    %2983 = vmatpush1.bf16.xpose.msra.mxu0 0
    %2984 = vmatprep.subr.bf16.mxu0 0
    %2985 = vmatpush1.bf16.xpose.msra.mxu0 0
    %2986 = vmatprep.subr.bf16.mxu0 0
    %2987 = vmatpush1.bf16.xpose.msra.mxu0 0
    %2988 = vmatprep.subr.bf16.mxu0 0
    %2989 = vmatpush1.bf16.xpose.msra.mxu0 0
    %2990 = vmatprep.subr.bf16.mxu0 0
    %2991 = vmatpush1.bf16.xpose.msra.mxu0 0
    %2992 = vmatprep.subr.bf16.mxu0 0
    %2993 = vmatpush1.bf16.xpose.msra.mxu0 0
    %2994 = vmatprep.subr.bf16.mxu0 0
    %2995 = vmatpush1.bf16.xpose.msra.mxu0 0
    %2996 = vmatprep.mubr.bf16.mxu0 0
    %2997 = vmatmul.mubr.bf16.gmra.mrb[0].mxu0 %v2959
    %v2998 = vpop.f32.mrb[0].mxu0
    %v2999 = vadd.f32 0.0, %v2998
    %v3000 = vpop.f32.mrb[0].mxu0
    %v3001 = vpop.f32.mrb[0].mxu0
    %v3002 = vadd.f32 0.0, %v3001
    %v3003 = vpop.f32.mrb[0].mxu0
    %3004 = vdwg.mxu0
    %v3006 = vsel %vm2816, %v2788, 0
    %v3009 = vsel %vm2816, %v2804, 0
    %3011 = vmatprep.subr.bf16.mxu0 0
    %3012 = vmatpush1.bf16.xpose.msra.mxu0 %v3009
    %3013 = vmatprep.subr.bf16.mxu0 0
    %3014 = vmatpush1.bf16.xpose.msra.mxu0 0
    %3015 = vmatprep.subr.bf16.mxu0 0
    %3016 = vmatpush1.bf16.xpose.msra.mxu0 0
    %3017 = vmatprep.subr.bf16.mxu0 0
    %3018 = vmatpush1.bf16.xpose.msra.mxu0 0
    %3019 = vmatprep.subr.bf16.mxu0 0
    %3020 = vmatpush1.bf16.xpose.msra.mxu0 0
    %3021 = vmatprep.subr.bf16.mxu0 0
    %3022 = vmatpush1.bf16.xpose.msra.mxu0 0
    %3023 = vmatprep.subr.bf16.mxu0 0
    %3024 = vmatpush1.bf16.xpose.msra.mxu0 0
    %3025 = vmatprep.subr.bf16.mxu0 0
    %3026 = vmatpush1.bf16.xpose.msra.mxu0 0
    %3027 = vmatprep.subr.bf16.mxu0 0
    %3028 = vmatpush1.bf16.xpose.msra.mxu0 0
    %3029 = vmatprep.subr.bf16.mxu0 0
    %3030 = vmatpush1.bf16.xpose.msra.mxu0 0
    %3031 = vmatprep.subr.bf16.mxu0 0
    %3032 = vmatpush1.bf16.xpose.msra.mxu0 0
    %3033 = vmatprep.subr.bf16.mxu0 0
    %3034 = vmatpush1.bf16.xpose.msra.mxu0 0
    %3035 = vmatprep.subr.bf16.mxu0 0
    %3036 = vmatpush1.bf16.xpose.msra.mxu0 0
    %3037 = vmatprep.subr.bf16.mxu0 0
    %3038 = vmatpush1.bf16.xpose.msra.mxu0 0
    %3039 = vmatprep.subr.bf16.mxu0 0
    %3040 = vmatpush1.bf16.xpose.msra.mxu0 0
    %3041 = vmatprep.subr.bf16.mxu0 0
    %3042 = vmatpush1.bf16.xpose.msra.mxu0 0
    %3043 = vmatprep.mubr.bf16.mxu0 0
    %3044 = vmatmul.mubr.bf16.gmra.mrb[0].mxu0 %v3006
    %v3045 = vpop.f32.mrb[0].mxu0
    %v3046 = vadd.f32 0.0, %v3045
    %v3047 = vpop.f32.mrb[0].mxu0
    %v3048 = vpop.f32.mrb[0].mxu0
    %v3049 = vadd.f32 0.0, %v3048
    %v3050 = vpop.f32.mrb[0].mxu0
    %3051 = vdwg.mxu0
    %v3053 = vsel %vm2816, %v2789, 0
    %v3056 = vsel %vm2816, %v2805, 0
    %3058 = vmatprep.subr.bf16.mxu0 0
    %3059 = vmatpush1.bf16.xpose.msra.mxu0 %v3056
    %3060 = vmatprep.subr.bf16.mxu0 0
    %3061 = vmatpush1.bf16.xpose.msra.mxu0 0
    %3062 = vmatprep.subr.bf16.mxu0 0
    %3063 = vmatpush1.bf16.xpose.msra.mxu0 0
    %3064 = vmatprep.subr.bf16.mxu0 0
    %3065 = vmatpush1.bf16.xpose.msra.mxu0 0
    %3066 = vmatprep.subr.bf16.mxu0 0
    %3067 = vmatpush1.bf16.xpose.msra.mxu0 0
    %3068 = vmatprep.subr.bf16.mxu0 0
    %3069 = vmatpush1.bf16.xpose.msra.mxu0 0
    %3070 = vmatprep.subr.bf16.mxu0 0
    %3071 = vmatpush1.bf16.xpose.msra.mxu0 0
    %3072 = vmatprep.subr.bf16.mxu0 0
    %3073 = vmatpush1.bf16.xpose.msra.mxu0 0
    %3074 = vmatprep.subr.bf16.mxu0 0
    %3075 = vmatpush1.bf16.xpose.msra.mxu0 0
    %3076 = vmatprep.subr.bf16.mxu0 0
    %3077 = vmatpush1.bf16.xpose.msra.mxu0 0
    %3078 = vmatprep.subr.bf16.mxu0 0
    %3079 = vmatpush1.bf16.xpose.msra.mxu0 0
    %3080 = vmatprep.subr.bf16.mxu0 0
    %3081 = vmatpush1.bf16.xpose.msra.mxu0 0
    %3082 = vmatprep.subr.bf16.mxu0 0
    %3083 = vmatpush1.bf16.xpose.msra.mxu0 0
    %3084 = vmatprep.subr.bf16.mxu0 0
    %3085 = vmatpush1.bf16.xpose.msra.mxu0 0
    %3086 = vmatprep.subr.bf16.mxu0 0
    %3087 = vmatpush1.bf16.xpose.msra.mxu0 0
    %3088 = vmatprep.subr.bf16.mxu0 0
    %3089 = vmatpush1.bf16.xpose.msra.mxu0 0
    %3090 = vmatprep.mubr.bf16.mxu0 0
    %3091 = vmatmul.mubr.bf16.gmra.mrb[0].mxu0 %v3053
    %v3092 = vpop.f32.mrb[0].mxu0
    %v3093 = vadd.f32 0.0, %v3092
    %v3094 = vpop.f32.mrb[0].mxu0
    %v3095 = vpop.f32.mrb[0].mxu0
    %v3096 = vadd.f32 0.0, %v3095
    %v3097 = vpop.f32.mrb[0].mxu0
    %3098 = vdwg.mxu0
    %v3100 = vsel %vm2816, %v2790, 0
    %v3103 = vsel %vm2816, %v2806, 0
    %3105 = vmatprep.subr.bf16.mxu0 0
    %3106 = vmatpush1.bf16.xpose.msra.mxu0 %v3103
    %3107 = vmatprep.subr.bf16.mxu0 0
    %3108 = vmatpush1.bf16.xpose.msra.mxu0 0
    %3109 = vmatprep.subr.bf16.mxu0 0
    %3110 = vmatpush1.bf16.xpose.msra.mxu0 0
    %3111 = vmatprep.subr.bf16.mxu0 0
    %3112 = vmatpush1.bf16.xpose.msra.mxu0 0
    %3113 = vmatprep.subr.bf16.mxu0 0
    %3114 = vmatpush1.bf16.xpose.msra.mxu0 0
    %3115 = vmatprep.subr.bf16.mxu0 0
    %3116 = vmatpush1.bf16.xpose.msra.mxu0 0
    %3117 = vmatprep.subr.bf16.mxu0 0
    %3118 = vmatpush1.bf16.xpose.msra.mxu0 0
    %3119 = vmatprep.subr.bf16.mxu0 0
    %3120 = vmatpush1.bf16.xpose.msra.mxu0 0
    %3121 = vmatprep.subr.bf16.mxu0 0
    %3122 = vmatpush1.bf16.xpose.msra.mxu0 0
    %3123 = vmatprep.subr.bf16.mxu0 0
    %3124 = vmatpush1.bf16.xpose.msra.mxu0 0
    %3125 = vmatprep.subr.bf16.mxu0 0
    %3126 = vmatpush1.bf16.xpose.msra.mxu0 0
    %3127 = vmatprep.subr.bf16.mxu0 0
    %3128 = vmatpush1.bf16.xpose.msra.mxu0 0
    %3129 = vmatprep.subr.bf16.mxu0 0
    %3130 = vmatpush1.bf16.xpose.msra.mxu0 0
    %3131 = vmatprep.subr.bf16.mxu0 0
    %3132 = vmatpush1.bf16.xpose.msra.mxu0 0
    %3133 = vmatprep.subr.bf16.mxu0 0
    %3134 = vmatpush1.bf16.xpose.msra.mxu0 0
    %3135 = vmatprep.subr.bf16.mxu0 0
    %3136 = vmatpush1.bf16.xpose.msra.mxu0 0
    %3137 = vmatprep.mubr.bf16.mxu0 0
    %3138 = vmatmul.mubr.bf16.gmra.mrb[0].mxu0 %v3100
    %v3139 = vpop.f32.mrb[0].mxu0
    %v3140 = vadd.f32 0.0, %v3139
    %v3141 = vpop.f32.mrb[0].mxu0
    %v3142 = vpop.f32.mrb[0].mxu0
    %v3143 = vadd.f32 0.0, %v3142
    %v3144 = vpop.f32.mrb[0].mxu0
    %3145 = vdwg.mxu0
    %v3147 = vsel %vm2816, %v2791, 0
    %v3150 = vsel %vm2816, %v2807, 0
    %3152 = vmatprep.subr.bf16.mxu0 0
    %3153 = vmatpush1.bf16.xpose.msra.mxu0 %v3150
    %3154 = vmatprep.subr.bf16.mxu0 0
    %3155 = vmatpush1.bf16.xpose.msra.mxu0 0
    %3156 = vmatprep.subr.bf16.mxu0 0
    %3157 = vmatpush1.bf16.xpose.msra.mxu0 0
    %3158 = vmatprep.subr.bf16.mxu0 0
    %3159 = vmatpush1.bf16.xpose.msra.mxu0 0
    %3160 = vmatprep.subr.bf16.mxu0 0
    %3161 = vmatpush1.bf16.xpose.msra.mxu0 0
    %3162 = vmatprep.subr.bf16.mxu0 0
    %3163 = vmatpush1.bf16.xpose.msra.mxu0 0
    %3164 = vmatprep.subr.bf16.mxu0 0
    %3165 = vmatpush1.bf16.xpose.msra.mxu0 0
    %3166 = vmatprep.subr.bf16.mxu0 0
    %3167 = vmatpush1.bf16.xpose.msra.mxu0 0
    %3168 = vmatprep.subr.bf16.mxu0 0
    %3169 = vmatpush1.bf16.xpose.msra.mxu0 0
    %3170 = vmatprep.subr.bf16.mxu0 0
    %3171 = vmatpush1.bf16.xpose.msra.mxu0 0
    %3172 = vmatprep.subr.bf16.mxu0 0
    %3173 = vmatpush1.bf16.xpose.msra.mxu0 0
    %3174 = vmatprep.subr.bf16.mxu0 0
    %3175 = vmatpush1.bf16.xpose.msra.mxu0 0
    %3176 = vmatprep.subr.bf16.mxu0 0
    %3177 = vmatpush1.bf16.xpose.msra.mxu0 0
    %3178 = vmatprep.subr.bf16.mxu0 0
    %3179 = vmatpush1.bf16.xpose.msra.mxu0 0
    %3180 = vmatprep.subr.bf16.mxu0 0
    %3181 = vmatpush1.bf16.xpose.msra.mxu0 0
    %3182 = vmatprep.subr.bf16.mxu0 0
    %3183 = vmatpush1.bf16.xpose.msra.mxu0 0
    %3184 = vmatprep.mubr.bf16.mxu0 0
    %3185 = vmatmul.mubr.bf16.gmra.mrb[0].mxu0 %v3147
    %v3186 = vpop.f32.mrb[0].mxu0
    %v3187 = vadd.f32 0.0, %v3186
    %v3188 = vpop.f32.mrb[0].mxu0
    %v3189 = vpop.f32.mrb[0].mxu0
    %v3190 = vadd.f32 0.0, %v3189
    %v3191 = vpop.f32.mrb[0].mxu0
    %3192 = vdwg.mxu0
    %v3194 = vsel %vm2816, %v2792, 0
    %v3197 = vsel %vm2816, %v2808, 0
    %3199 = vmatprep.subr.bf16.mxu0 0
    %3200 = vmatpush1.bf16.xpose.msra.mxu0 %v3197
    %3201 = vmatprep.subr.bf16.mxu0 0
    %3202 = vmatpush1.bf16.xpose.msra.mxu0 0
    %3203 = vmatprep.subr.bf16.mxu0 0
    %3204 = vmatpush1.bf16.xpose.msra.mxu0 0
    %3205 = vmatprep.subr.bf16.mxu0 0
    %3206 = vmatpush1.bf16.xpose.msra.mxu0 0
    %3207 = vmatprep.subr.bf16.mxu0 0
    %3208 = vmatpush1.bf16.xpose.msra.mxu0 0
    %3209 = vmatprep.subr.bf16.mxu0 0
    %3210 = vmatpush1.bf16.xpose.msra.mxu0 0
    %3211 = vmatprep.subr.bf16.mxu0 0
    %3212 = vmatpush1.bf16.xpose.msra.mxu0 0
    %3213 = vmatprep.subr.bf16.mxu0 0
    %3214 = vmatpush1.bf16.xpose.msra.mxu0 0
    %3215 = vmatprep.subr.bf16.mxu0 0
    %3216 = vmatpush1.bf16.xpose.msra.mxu0 0
    %3217 = vmatprep.subr.bf16.mxu0 0
    %3218 = vmatpush1.bf16.xpose.msra.mxu0 0
    %3219 = vmatprep.subr.bf16.mxu0 0
    %3220 = vmatpush1.bf16.xpose.msra.mxu0 0
    %3221 = vmatprep.subr.bf16.mxu0 0
    %3222 = vmatpush1.bf16.xpose.msra.mxu0 0
    %3223 = vmatprep.subr.bf16.mxu0 0
    %3224 = vmatpush1.bf16.xpose.msra.mxu0 0
    %3225 = vmatprep.subr.bf16.mxu0 0
    %3226 = vmatpush1.bf16.xpose.msra.mxu0 0
    %3227 = vmatprep.subr.bf16.mxu0 0
    %3228 = vmatpush1.bf16.xpose.msra.mxu0 0
    %3229 = vmatprep.subr.bf16.mxu0 0
    %3230 = vmatpush1.bf16.xpose.msra.mxu0 0
    %3231 = vmatprep.mubr.bf16.mxu0 0
    %3232 = vmatmul.mubr.bf16.gmra.mrb[0].mxu0 %v3194
    %v3233 = vpop.f32.mrb[0].mxu0
    %v3234 = vadd.f32 0.0, %v3233
    %v3235 = vpop.f32.mrb[0].mxu0
    %v3236 = vpop.f32.mrb[0].mxu0
    %v3237 = vadd.f32 0.0, %v3236
    %v3238 = vpop.f32.mrb[0].mxu0
    %3239 = vdwg.mxu0
    %v3241 = vsel %vm2816, %v2793, 0
    %v3244 = vsel %vm2816, %v2809, 0
    %3246 = vmatprep.subr.bf16.mxu0 0
    %3247 = vmatpush1.bf16.xpose.msra.mxu0 %v3244
    %3248 = vmatprep.subr.bf16.mxu0 0
    %3249 = vmatpush1.bf16.xpose.msra.mxu0 0
    %3250 = vmatprep.subr.bf16.mxu0 0
    %3251 = vmatpush1.bf16.xpose.msra.mxu0 0
    %3252 = vmatprep.subr.bf16.mxu0 0
    %3253 = vmatpush1.bf16.xpose.msra.mxu0 0
    %3254 = vmatprep.subr.bf16.mxu0 0
    %3255 = vmatpush1.bf16.xpose.msra.mxu0 0
    %3256 = vmatprep.subr.bf16.mxu0 0
    %3257 = vmatpush1.bf16.xpose.msra.mxu0 0
    %3258 = vmatprep.subr.bf16.mxu0 0
    %3259 = vmatpush1.bf16.xpose.msra.mxu0 0
    %3260 = vmatprep.subr.bf16.mxu0 0
    %3261 = vmatpush1.bf16.xpose.msra.mxu0 0
    %3262 = vmatprep.subr.bf16.mxu0 0
    %3263 = vmatpush1.bf16.xpose.msra.mxu0 0
    %3264 = vmatprep.subr.bf16.mxu0 0
    %3265 = vmatpush1.bf16.xpose.msra.mxu0 0
    %3266 = vmatprep.subr.bf16.mxu0 0
    %3267 = vmatpush1.bf16.xpose.msra.mxu0 0
    %3268 = vmatprep.subr.bf16.mxu0 0
    %3269 = vmatpush1.bf16.xpose.msra.mxu0 0
    %3270 = vmatprep.subr.bf16.mxu0 0
    %3271 = vmatpush1.bf16.xpose.msra.mxu0 0
    %3272 = vmatprep.subr.bf16.mxu0 0
    %3273 = vmatpush1.bf16.xpose.msra.mxu0 0
    %3274 = vmatprep.subr.bf16.mxu0 0
    %3275 = vmatpush1.bf16.xpose.msra.mxu0 0
    %3276 = vmatprep.subr.bf16.mxu0 0
    %3277 = vmatpush1.bf16.xpose.msra.mxu0 0
    %3278 = vmatprep.mubr.bf16.mxu0 0
    %3279 = vmatmul.mubr.bf16.gmra.mrb[0].mxu0 %v3241
    %v3280 = vpop.f32.mrb[0].mxu0
    %v3281 = vadd.f32 0.0, %v3280
    %v3282 = vpop.f32.mrb[0].mxu0
    %v3283 = vpop.f32.mrb[0].mxu0
    %v3284 = vadd.f32 0.0, %v3283
    %v3285 = vpop.f32.mrb[0].mxu0
    %3286 = vdwg.mxu0
    %v3288 = vsel %vm2816, %v2794, 0
    %v3291 = vsel %vm2816, %v2810, 0
    %3293 = vmatprep.subr.bf16.mxu0 0
    %3294 = vmatpush1.bf16.xpose.msra.mxu0 %v3291
    %3295 = vmatprep.subr.bf16.mxu0 0
    %3296 = vmatpush1.bf16.xpose.msra.mxu0 0
    %3297 = vmatprep.subr.bf16.mxu0 0
    %3298 = vmatpush1.bf16.xpose.msra.mxu0 0
    %3299 = vmatprep.subr.bf16.mxu0 0
    %3300 = vmatpush1.bf16.xpose.msra.mxu0 0
    %3301 = vmatprep.subr.bf16.mxu0 0
    %3302 = vmatpush1.bf16.xpose.msra.mxu0 0
    %3303 = vmatprep.subr.bf16.mxu0 0
    %3304 = vmatpush1.bf16.xpose.msra.mxu0 0
    %3305 = vmatprep.subr.bf16.mxu0 0
    %3306 = vmatpush1.bf16.xpose.msra.mxu0 0
    %3307 = vmatprep.subr.bf16.mxu0 0
    %3308 = vmatpush1.bf16.xpose.msra.mxu0 0
    %3309 = vmatprep.subr.bf16.mxu0 0
    %3310 = vmatpush1.bf16.xpose.msra.mxu0 0
    %3311 = vmatprep.subr.bf16.mxu0 0
    %3312 = vmatpush1.bf16.xpose.msra.mxu0 0
    %3313 = vmatprep.subr.bf16.mxu0 0
    %3314 = vmatpush1.bf16.xpose.msra.mxu0 0
    %3315 = vmatprep.subr.bf16.mxu0 0
    %3316 = vmatpush1.bf16.xpose.msra.mxu0 0
    %3317 = vmatprep.subr.bf16.mxu0 0
    %3318 = vmatpush1.bf16.xpose.msra.mxu0 0
    %3319 = vmatprep.subr.bf16.mxu0 0
    %3320 = vmatpush1.bf16.xpose.msra.mxu0 0
    %3321 = vmatprep.subr.bf16.mxu0 0
    %3322 = vmatpush1.bf16.xpose.msra.mxu0 0
    %3323 = vmatprep.subr.bf16.mxu0 0
    %3324 = vmatpush1.bf16.xpose.msra.mxu0 0
    %3325 = vmatprep.mubr.bf16.mxu0 0
    %3326 = vmatmul.mubr.bf16.gmra.mrb[0].mxu0 %v3288
    %v3327 = vpop.f32.mrb[0].mxu0
    %v3328 = vadd.f32 0.0, %v3327
    %v3329 = vpop.f32.mrb[0].mxu0
    %v3330 = vpop.f32.mrb[0].mxu0
    %v3331 = vadd.f32 0.0, %v3330
    %v3332 = vpop.f32.mrb[0].mxu0
    %3333 = vdwg.mxu0
    %v3335 = vsel %vm2816, %v2795, 0
    %v3338 = vsel %vm2816, %v2811, 0
    %3340 = vmatprep.subr.bf16.mxu0 0
    %3341 = vmatpush1.bf16.xpose.msra.mxu0 %v3338
    %3342 = vmatprep.subr.bf16.mxu0 0
    %3343 = vmatpush1.bf16.xpose.msra.mxu0 0
    %3344 = vmatprep.subr.bf16.mxu0 0
    %3345 = vmatpush1.bf16.xpose.msra.mxu0 0
    %3346 = vmatprep.subr.bf16.mxu0 0
    %3347 = vmatpush1.bf16.xpose.msra.mxu0 0
    %3348 = vmatprep.subr.bf16.mxu0 0
    %3349 = vmatpush1.bf16.xpose.msra.mxu0 0
    %3350 = vmatprep.subr.bf16.mxu0 0
    %3351 = vmatpush1.bf16.xpose.msra.mxu0 0
    %3352 = vmatprep.subr.bf16.mxu0 0
    %3353 = vmatpush1.bf16.xpose.msra.mxu0 0
    %3354 = vmatprep.subr.bf16.mxu0 0
    %3355 = vmatpush1.bf16.xpose.msra.mxu0 0
    %3356 = vmatprep.subr.bf16.mxu0 0
    %3357 = vmatpush1.bf16.xpose.msra.mxu0 0
    %3358 = vmatprep.subr.bf16.mxu0 0
    %3359 = vmatpush1.bf16.xpose.msra.mxu0 0
    %3360 = vmatprep.subr.bf16.mxu0 0
    %3361 = vmatpush1.bf16.xpose.msra.mxu0 0
    %3362 = vmatprep.subr.bf16.mxu0 0
    %3363 = vmatpush1.bf16.xpose.msra.mxu0 0
    %3364 = vmatprep.subr.bf16.mxu0 0
    %3365 = vmatpush1.bf16.xpose.msra.mxu0 0
    %3366 = vmatprep.subr.bf16.mxu0 0
    %3367 = vmatpush1.bf16.xpose.msra.mxu0 0
    %3368 = vmatprep.subr.bf16.mxu0 0
    %3369 = vmatpush1.bf16.xpose.msra.mxu0 0
    %3370 = vmatprep.subr.bf16.mxu0 0
    %3371 = vmatpush1.bf16.xpose.msra.mxu0 0
    %3372 = vmatprep.mubr.bf16.mxu0 0
    %3373 = vmatmul.mubr.bf16.gmra.mrb[0].mxu0 %v3335
    %v3374 = vpop.f32.mrb[0].mxu0
    %v3375 = vadd.f32 0.0, %v3374
    %v3376 = vpop.f32.mrb[0].mxu0
    %v3377 = vpop.f32.mrb[0].mxu0
    %v3378 = vadd.f32 0.0, %v3377
    %v3379 = vpop.f32.mrb[0].mxu0
    %3380 = vdwg.mxu0
    %v3382 = vsel %vm2816, %v2796, 0
    %v3385 = vsel %vm2816, %v2812, 0
    %3387 = vmatprep.subr.bf16.mxu0 0
    %3388 = vmatpush1.bf16.xpose.msra.mxu0 %v3385
    %3389 = vmatprep.subr.bf16.mxu0 0
    %3390 = vmatpush1.bf16.xpose.msra.mxu0 0
    %3391 = vmatprep.subr.bf16.mxu0 0
    %3392 = vmatpush1.bf16.xpose.msra.mxu0 0
    %3393 = vmatprep.subr.bf16.mxu0 0
    %3394 = vmatpush1.bf16.xpose.msra.mxu0 0
    %3395 = vmatprep.subr.bf16.mxu0 0
    %3396 = vmatpush1.bf16.xpose.msra.mxu0 0
    %3397 = vmatprep.subr.bf16.mxu0 0
    %3398 = vmatpush1.bf16.xpose.msra.mxu0 0
    %3399 = vmatprep.subr.bf16.mxu0 0
    %3400 = vmatpush1.bf16.xpose.msra.mxu0 0
    %3401 = vmatprep.subr.bf16.mxu0 0
    %3402 = vmatpush1.bf16.xpose.msra.mxu0 0
    %3403 = vmatprep.subr.bf16.mxu0 0
    %3404 = vmatpush1.bf16.xpose.msra.mxu0 0
    %3405 = vmatprep.subr.bf16.mxu0 0
    %3406 = vmatpush1.bf16.xpose.msra.mxu0 0
    %3407 = vmatprep.subr.bf16.mxu0 0
    %3408 = vmatpush1.bf16.xpose.msra.mxu0 0
    %3409 = vmatprep.subr.bf16.mxu0 0
    %3410 = vmatpush1.bf16.xpose.msra.mxu0 0
    %3411 = vmatprep.subr.bf16.mxu0 0
    %3412 = vmatpush1.bf16.xpose.msra.mxu0 0
    %3413 = vmatprep.subr.bf16.mxu0 0
    %3414 = vmatpush1.bf16.xpose.msra.mxu0 0
    %3415 = vmatprep.subr.bf16.mxu0 0
    %3416 = vmatpush1.bf16.xpose.msra.mxu0 0
    %3417 = vmatprep.subr.bf16.mxu0 0
    %3418 = vmatpush1.bf16.xpose.msra.mxu0 0
    %3419 = vmatprep.mubr.bf16.mxu0 0
    %3420 = vmatmul.mubr.bf16.gmra.mrb[0].mxu0 %v3382
    %v3421 = vpop.f32.mrb[0].mxu0
    %v3422 = vadd.f32 0.0, %v3421
    %v3423 = vpop.f32.mrb[0].mxu0
    %v3424 = vpop.f32.mrb[0].mxu0
    %v3425 = vadd.f32 0.0, %v3424
    %v3426 = vpop.f32.mrb[0].mxu0
    %3427 = vdwg.mxu0
    %v3429 = vsel %vm2816, %v2797, 0
    %v3432 = vsel %vm2816, %v2813, 0
    %3434 = vmatprep.subr.bf16.mxu0 0
    %3435 = vmatpush1.bf16.xpose.msra.mxu0 %v3432
    %3436 = vmatprep.subr.bf16.mxu0 0
    %3437 = vmatpush1.bf16.xpose.msra.mxu0 0
    %3438 = vmatprep.subr.bf16.mxu0 0
    %3439 = vmatpush1.bf16.xpose.msra.mxu0 0
    %3440 = vmatprep.subr.bf16.mxu0 0
    %3441 = vmatpush1.bf16.xpose.msra.mxu0 0
    %3442 = vmatprep.subr.bf16.mxu0 0
    %3443 = vmatpush1.bf16.xpose.msra.mxu0 0
    %3444 = vmatprep.subr.bf16.mxu0 0
    %3445 = vmatpush1.bf16.xpose.msra.mxu0 0
    %3446 = vmatprep.subr.bf16.mxu0 0
    %3447 = vmatpush1.bf16.xpose.msra.mxu0 0
    %3448 = vmatprep.subr.bf16.mxu0 0
    %3449 = vmatpush1.bf16.xpose.msra.mxu0 0
    %3450 = vmatprep.subr.bf16.mxu0 0
    %3451 = vmatpush1.bf16.xpose.msra.mxu0 0
    %3452 = vmatprep.subr.bf16.mxu0 0
    %3453 = vmatpush1.bf16.xpose.msra.mxu0 0
    %3454 = vmatprep.subr.bf16.mxu0 0
    %3455 = vmatpush1.bf16.xpose.msra.mxu0 0
    %3456 = vmatprep.subr.bf16.mxu0 0
    %3457 = vmatpush1.bf16.xpose.msra.mxu0 0
    %3458 = vmatprep.subr.bf16.mxu0 0
    %3459 = vmatpush1.bf16.xpose.msra.mxu0 0
    %3460 = vmatprep.subr.bf16.mxu0 0
    %3461 = vmatpush1.bf16.xpose.msra.mxu0 0
    %3462 = vmatprep.subr.bf16.mxu0 0
    %3463 = vmatpush1.bf16.xpose.msra.mxu0 0
    %3464 = vmatprep.subr.bf16.mxu0 0
    %3465 = vmatpush1.bf16.xpose.msra.mxu0 0
    %3466 = vmatprep.mubr.bf16.mxu0 0
    %3467 = vmatmul.mubr.bf16.gmra.mrb[0].mxu0 %v3429
    %v3468 = vpop.f32.mrb[0].mxu0
    %v3469 = vadd.f32 0.0, %v3468
    %v3470 = vpop.f32.mrb[0].mxu0
    %v3471 = vpop.f32.mrb[0].mxu0
    %v3472 = vadd.f32 0.0, %v3471
    %v3473 = vpop.f32.mrb[0].mxu0
    %3474 = vdwg.mxu0
    %v3476 = vsel %vm2816, %v2798, 0
    %v3479 = vsel %vm2816, %v2814, 0
    %3481 = vmatprep.subr.bf16.mxu0 0
    %3482 = vmatpush1.bf16.xpose.msra.mxu0 %v3479
    %3483 = vmatprep.subr.bf16.mxu0 0
    %3484 = vmatpush1.bf16.xpose.msra.mxu0 0
    %3485 = vmatprep.subr.bf16.mxu0 0
    %3486 = vmatpush1.bf16.xpose.msra.mxu0 0
    %3487 = vmatprep.subr.bf16.mxu0 0
    %3488 = vmatpush1.bf16.xpose.msra.mxu0 0
    %3489 = vmatprep.subr.bf16.mxu0 0
    %3490 = vmatpush1.bf16.xpose.msra.mxu0 0
    %3491 = vmatprep.subr.bf16.mxu0 0
    %3492 = vmatpush1.bf16.xpose.msra.mxu0 0
    %3493 = vmatprep.subr.bf16.mxu0 0
    %3494 = vmatpush1.bf16.xpose.msra.mxu0 0
    %3495 = vmatprep.subr.bf16.mxu0 0
    %3496 = vmatpush1.bf16.xpose.msra.mxu0 0
    %3497 = vmatprep.subr.bf16.mxu0 0
    %3498 = vmatpush1.bf16.xpose.msra.mxu0 0
    %3499 = vmatprep.subr.bf16.mxu0 0
    %3500 = vmatpush1.bf16.xpose.msra.mxu0 0
    %3501 = vmatprep.subr.bf16.mxu0 0
    %3502 = vmatpush1.bf16.xpose.msra.mxu0 0
    %3503 = vmatprep.subr.bf16.mxu0 0
    %3504 = vmatpush1.bf16.xpose.msra.mxu0 0
    %3505 = vmatprep.subr.bf16.mxu0 0
    %3506 = vmatpush1.bf16.xpose.msra.mxu0 0
    %3507 = vmatprep.subr.bf16.mxu0 0
    %3508 = vmatpush1.bf16.xpose.msra.mxu0 0
    %3509 = vmatprep.subr.bf16.mxu0 0
    %3510 = vmatpush1.bf16.xpose.msra.mxu0 0
    %3511 = vmatprep.subr.bf16.mxu0 0
    %3512 = vmatpush1.bf16.xpose.msra.mxu0 0
    %3513 = vmatprep.mubr.bf16.mxu0 0
    %3514 = vmatmul.mubr.bf16.gmra.mrb[0].mxu0 %v3476
    %v3515 = vpop.f32.mrb[0].mxu0
    %v3516 = vadd.f32 0.0, %v3515
    %v3517 = vpop.f32.mrb[0].mxu0
    %v3518 = vpop.f32.mrb[0].mxu0
    %v3519 = vadd.f32 0.0, %v3518
    %v3520 = vpop.f32.mrb[0].mxu0
    %3521 = vdwg.mxu0
    %v3523 = vsel %vm2816, %v2799, 0
    %v3526 = vsel %vm2816, %v2815, 0
    %3528 = vmatprep.subr.bf16.mxu0 0
    %3529 = vmatpush1.bf16.xpose.msra.mxu0 %v3526
    %3530 = vmatprep.subr.bf16.mxu0 0
    %3531 = vmatpush1.bf16.xpose.msra.mxu0 0
    %3532 = vmatprep.subr.bf16.mxu0 0
    %3533 = vmatpush1.bf16.xpose.msra.mxu0 0
    %3534 = vmatprep.subr.bf16.mxu0 0
    %3535 = vmatpush1.bf16.xpose.msra.mxu0 0
    %3536 = vmatprep.subr.bf16.mxu0 0
    %3537 = vmatpush1.bf16.xpose.msra.mxu0 0
    %3538 = vmatprep.subr.bf16.mxu0 0
    %3539 = vmatpush1.bf16.xpose.msra.mxu0 0
    %3540 = vmatprep.subr.bf16.mxu0 0
    %3541 = vmatpush1.bf16.xpose.msra.mxu0 0
    %3542 = vmatprep.subr.bf16.mxu0 0
    %3543 = vmatpush1.bf16.xpose.msra.mxu0 0
    %3544 = vmatprep.subr.bf16.mxu0 0
    %3545 = vmatpush1.bf16.xpose.msra.mxu0 0
    %3546 = vmatprep.subr.bf16.mxu0 0
    %3547 = vmatpush1.bf16.xpose.msra.mxu0 0
    %3548 = vmatprep.subr.bf16.mxu0 0
    %3549 = vmatpush1.bf16.xpose.msra.mxu0 0
    %3550 = vmatprep.subr.bf16.mxu0 0
    %3551 = vmatpush1.bf16.xpose.msra.mxu0 0
    %3552 = vmatprep.subr.bf16.mxu0 0
    %3553 = vmatpush1.bf16.xpose.msra.mxu0 0
    %3554 = vmatprep.subr.bf16.mxu0 0
    %3555 = vmatpush1.bf16.xpose.msra.mxu0 0
    %3556 = vmatprep.subr.bf16.mxu0 0
    %3557 = vmatpush1.bf16.xpose.msra.mxu0 0
    %3558 = vmatprep.subr.bf16.mxu0 0
    %3559 = vmatpush1.bf16.xpose.msra.mxu0 0
    %3560 = vmatprep.mubr.bf16.mxu0 0
    %3561 = vmatmul.mubr.bf16.gmra.mrb[0].mxu0 %v3523
    %v3562 = vpop.f32.mrb[0].mxu0
    %v3563 = vadd.f32 0.0, %v3562
    %v3564 = vpop.f32.mrb[0].mxu0
    %v3565 = vpop.f32.mrb[0].mxu0
    %v3566 = vadd.f32 0.0, %v3565
    %v3567 = vpop.f32.mrb[0].mxu0
    %3568 = vdwg.mxu0
    %v3569 = vld [vmem:[%s1] sm:$0xff]
    %v3570 = vld [vmem:[%s1 + $0x8] sm:$0xff]
    %v3571 = vld [vmem:[%s1 + $0x10] sm:$0xff]
    %v3572 = vld [vmem:[%s1 + $0x18] sm:$0xff]
    %vm3573 = vcmp.ne.f32.partialorder %v3569, 0.0
    %vm3574 = vcmp.ne.f32.partialorder %v3570, 0.0
    %vm3575 = vcmp.ne.f32.partialorder %v3571, 0.0
    %vm3576 = vcmp.ne.f32.partialorder %v3572, 0.0
    %v3577 = vsel %vm3573, 1, 0
    %v3578 = vsel %vm3574, 1, 0
    %v3579 = vsel %vm3575, 1, 0
    %v3580 = vsel %vm3576, 1, 0
    %vm3581 = vcmp.eq.s32.totalorder %v3577, 1
    %vm3582 = vcmp.eq.s32.totalorder %v3578, 1
    %vm3583 = vcmp.eq.s32.totalorder %v3579, 1
    %vm3584 = vcmp.eq.s32.totalorder %v3580, 1
    %v3585 = vsel %vm3581, -65504.0, %v2858
    %v3586 = vsel %vm3582, -65504.0, %v2861
    %v3587 = vsel %vm3583, -65504.0, %v2905
    %v3588 = vsel %vm3584, -65504.0, %v2908
    %v3589 = vsel %vm3581, -65504.0, %v2952
    %v3590 = vsel %vm3582, -65504.0, %v2955
    %v3591 = vsel %vm3583, -65504.0, %v2999
    %v3592 = vsel %vm3584, -65504.0, %v3002
    %v3593 = vsel %vm3581, -65504.0, %v3046
    %v3594 = vsel %vm3582, -65504.0, %v3049
    %v3595 = vsel %vm3583, -65504.0, %v3093
    %v3596 = vsel %vm3584, -65504.0, %v3096
    %v3597 = vsel %vm3581, -65504.0, %v3140
    %v3598 = vsel %vm3582, -65504.0, %v3143
    %v3599 = vsel %vm3583, -65504.0, %v3187
    %v3600 = vsel %vm3584, -65504.0, %v3190
    %v3601 = vsel %vm3581, -65504.0, %v3234
    %v3602 = vsel %vm3582, -65504.0, %v3237
    %v3603 = vsel %vm3583, -65504.0, %v3281
    %v3604 = vsel %vm3584, -65504.0, %v3284
    %v3605 = vsel %vm3581, -65504.0, %v3328
    %v3606 = vsel %vm3582, -65504.0, %v3331
    %v3607 = vsel %vm3583, -65504.0, %v3375
    %v3608 = vsel %vm3584, -65504.0, %v3378
    %v3609 = vsel %vm3581, -65504.0, %v3422
    %v3610 = vsel %vm3582, -65504.0, %v3425
    %v3611 = vsel %vm3583, -65504.0, %v3469
    %v3612 = vsel %vm3584, -65504.0, %v3472
    %v3613 = vsel %vm3581, -65504.0, %v3516
    %v3614 = vsel %vm3582, -65504.0, %v3519
    %v3615 = vsel %vm3583, -65504.0, %v3563
    %v3616 = vsel %vm3584, -65504.0, %v3566
    %v3617 = vsel %vm2816, %v3585, -inf
    %3618 = vmax.xlane.f32.xlu0 %v3617
    %v3619 = vpop.xlane.xlu0 %3618
    %v3620 = vsel %vm2816, %v3586, -inf
    %3621 = vmax.xlane.f32.xlu0 %v3620
    %v3622 = vpop.xlane.xlu0 %3621
    %v3623 = vsel %vm2816, %v3587, -inf
    %3624 = vmax.xlane.f32.xlu0 %v3623
    %v3625 = vpop.xlane.xlu0 %3624
    %v3626 = vsel %vm2816, %v3588, -inf
    %3627 = vmax.xlane.f32.xlu0 %v3626
    %v3628 = vpop.xlane.xlu0 %3627
    %v3629 = vsel %vm2816, %v3589, -inf
    %3630 = vmax.xlane.f32.xlu0 %v3629
    %v3631 = vpop.xlane.xlu0 %3630
    %v3632 = vsel %vm2816, %v3590, -inf
    %3633 = vmax.xlane.f32.xlu0 %v3632
    %v3634 = vpop.xlane.xlu0 %3633
    %v3635 = vsel %vm2816, %v3591, -inf
    %3636 = vmax.xlane.f32.xlu0 %v3635
    %v3637 = vpop.xlane.xlu0 %3636
    %v3638 = vsel %vm2816, %v3592, -inf
    %3639 = vmax.xlane.f32.xlu0 %v3638
    %v3640 = vpop.xlane.xlu0 %3639
    %v3641 = vsel %vm2816, %v3593, -inf
    %3642 = vmax.xlane.f32.xlu0 %v3641
    %v3643 = vpop.xlane.xlu0 %3642
    %v3644 = vsel %vm2816, %v3594, -inf
    %3645 = vmax.xlane.f32.xlu0 %v3644
    %v3646 = vpop.xlane.xlu0 %3645
    %v3647 = vsel %vm2816, %v3595, -inf
    %3648 = vmax.xlane.f32.xlu0 %v3647
    %v3649 = vpop.xlane.xlu0 %3648
    %v3650 = vsel %vm2816, %v3596, -inf
    %3651 = vmax.xlane.f32.xlu0 %v3650
    %v3652 = vpop.xlane.xlu0 %3651
    %v3653 = vsel %vm2816, %v3597, -inf
    %3654 = vmax.xlane.f32.xlu0 %v3653
    %v3655 = vpop.xlane.xlu0 %3654
    %v3656 = vsel %vm2816, %v3598, -inf
    %3657 = vmax.xlane.f32.xlu0 %v3656
    %v3658 = vpop.xlane.xlu0 %3657
    %v3659 = vsel %vm2816, %v3599, -inf
    %3660 = vmax.xlane.f32.xlu0 %v3659
    %v3661 = vpop.xlane.xlu0 %3660
    %v3662 = vsel %vm2816, %v3600, -inf
    %3663 = vmax.xlane.f32.xlu0 %v3662
    %v3664 = vpop.xlane.xlu0 %3663
    %v3665 = vsel %vm2816, %v3601, -inf
    %3666 = vmax.xlane.f32.xlu0 %v3665
    %v3667 = vpop.xlane.xlu0 %3666
    %v3668 = vsel %vm2816, %v3602, -inf
    %3669 = vmax.xlane.f32.xlu0 %v3668
    %v3670 = vpop.xlane.xlu0 %3669
    %v3671 = vsel %vm2816, %v3603, -inf
    %3672 = vmax.xlane.f32.xlu0 %v3671
    %v3673 = vpop.xlane.xlu0 %3672
    %v3674 = vsel %vm2816, %v3604, -inf
    %3675 = vmax.xlane.f32.xlu0 %v3674
    %v3676 = vpop.xlane.xlu0 %3675
    %v3677 = vsel %vm2816, %v3605, -inf
    %3678 = vmax.xlane.f32.xlu0 %v3677
    %v3679 = vpop.xlane.xlu0 %3678
    %v3680 = vsel %vm2816, %v3606, -inf
    %3681 = vmax.xlane.f32.xlu0 %v3680
    %v3682 = vpop.xlane.xlu0 %3681
    %v3683 = vsel %vm2816, %v3607, -inf
    %3684 = vmax.xlane.f32.xlu0 %v3683
    %v3685 = vpop.xlane.xlu0 %3684
    %v3686 = vsel %vm2816, %v3608, -inf
    %3687 = vmax.xlane.f32.xlu0 %v3686
    %v3688 = vpop.xlane.xlu0 %3687
    %v3689 = vsel %vm2816, %v3609, -inf
    %3690 = vmax.xlane.f32.xlu0 %v3689
    %v3691 = vpop.xlane.xlu0 %3690
    %v3692 = vsel %vm2816, %v3610, -inf
    %3693 = vmax.xlane.f32.xlu0 %v3692
    %v3694 = vpop.xlane.xlu0 %3693
    %v3695 = vsel %vm2816, %v3611, -inf
    %3696 = vmax.xlane.f32.xlu0 %v3695
    %v3697 = vpop.xlane.xlu0 %3696
    %v3698 = vsel %vm2816, %v3612, -inf
    %3699 = vmax.xlane.f32.xlu0 %v3698
    %v3700 = vpop.xlane.xlu0 %3699
    %v3701 = vsel %vm2816, %v3613, -inf
    %3702 = vmax.xlane.f32.xlu0 %v3701
    %v3703 = vpop.xlane.xlu0 %3702
    %v3704 = vsel %vm2816, %v3614, -inf
    %3705 = vmax.xlane.f32.xlu0 %v3704
    %v3706 = vpop.xlane.xlu0 %3705
    %v3707 = vsel %vm2816, %v3615, -inf
    %3708 = vmax.xlane.f32.xlu0 %v3707
    %v3709 = vpop.xlane.xlu0 %3708
    %v3710 = vsel %vm2816, %v3616, -inf
    %3711 = vmax.xlane.f32.xlu0 %v3710
    %v3712 = vpop.xlane.xlu0 %3711
    %v3713 = vsub.f32 %v3585, %v3619
    %v3714 = vsub.f32 %v3586, %v3622
    %v3715 = vsub.f32 %v3587, %v3625
    %v3716 = vsub.f32 %v3588, %v3628
    %v3717 = vsub.f32 %v3589, %v3631
    %v3718 = vsub.f32 %v3590, %v3634
    %v3719 = vsub.f32 %v3591, %v3637
    %v3720 = vsub.f32 %v3592, %v3640
    %v3721 = vsub.f32 %v3593, %v3643
    %v3722 = vsub.f32 %v3594, %v3646
    %v3723 = vsub.f32 %v3595, %v3649
    %v3724 = vsub.f32 %v3596, %v3652
    %v3725 = vsub.f32 %v3597, %v3655
    %v3726 = vsub.f32 %v3598, %v3658
    %v3727 = vsub.f32 %v3599, %v3661
    %v3728 = vsub.f32 %v3600, %v3664
    %v3729 = vsub.f32 %v3601, %v3667
    %v3730 = vsub.f32 %v3602, %v3670
    %v3731 = vsub.f32 %v3603, %v3673
    %v3732 = vsub.f32 %v3604, %v3676
    %v3733 = vsub.f32 %v3605, %v3679
    %v3734 = vsub.f32 %v3606, %v3682
    %v3735 = vsub.f32 %v3607, %v3685
    %v3736 = vsub.f32 %v3608, %v3688
    %v3737 = vsub.f32 %v3609, %v3691
    %v3738 = vsub.f32 %v3610, %v3694
    %v3739 = vsub.f32 %v3611, %v3697
    %v3740 = vsub.f32 %v3612, %v3700
    %v3741 = vsub.f32 %v3613, %v3703
    %v3742 = vsub.f32 %v3614, %v3706
    %v3743 = vsub.f32 %v3615, %v3709
    %v3744 = vsub.f32 %v3616, %v3712
    %v3745 = vmul.f32 %v3713, 1.442695
    %v3746 = vpow.pop %v3745
    %v3747 = vmul.f32 %v3714, 1.442695
    %v3748 = vpow.pop %v3747
    %v3749 = vmul.f32 %v3715, 1.442695
    %v3750 = vpow.pop %v3749
    %v3751 = vmul.f32 %v3716, 1.442695
    %v3752 = vpow.pop %v3751
    %v3753 = vmul.f32 %v3717, 1.442695
    %v3754 = vpow.pop %v3753
    %v3755 = vmul.f32 %v3718, 1.442695
    %v3756 = vpow.pop %v3755
    %v3757 = vmul.f32 %v3719, 1.442695
    %v3758 = vpow.pop %v3757
    %v3759 = vmul.f32 %v3720, 1.442695
    %v3760 = vpow.pop %v3759
    %v3761 = vmul.f32 %v3721, 1.442695
    %v3762 = vpow.pop %v3761
    %v3763 = vmul.f32 %v3722, 1.442695
    %v3764 = vpow.pop %v3763
    %v3765 = vmul.f32 %v3723, 1.442695
    %v3766 = vpow.pop %v3765
    %v3767 = vmul.f32 %v3724, 1.442695
    %v3768 = vpow.pop %v3767
    %v3769 = vmul.f32 %v3725, 1.442695
    %v3770 = vpow.pop %v3769
    %v3771 = vmul.f32 %v3726, 1.442695
    %v3772 = vpow.pop %v3771
    %v3773 = vmul.f32 %v3727, 1.442695
    %v3774 = vpow.pop %v3773
    %v3775 = vmul.f32 %v3728, 1.442695
    %v3776 = vpow.pop %v3775
    %v3777 = vmul.f32 %v3729, 1.442695
    %v3778 = vpow.pop %v3777
    %v3779 = vmul.f32 %v3730, 1.442695
    %v3780 = vpow.pop %v3779
    %v3781 = vmul.f32 %v3731, 1.442695
    %v3782 = vpow.pop %v3781
    %v3783 = vmul.f32 %v3732, 1.442695
    %v3784 = vpow.pop %v3783
    %v3785 = vmul.f32 %v3733, 1.442695
    %v3786 = vpow.pop %v3785
    %v3787 = vmul.f32 %v3734, 1.442695
    %v3788 = vpow.pop %v3787
    %v3789 = vmul.f32 %v3735, 1.442695
    %v3790 = vpow.pop %v3789
    %v3791 = vmul.f32 %v3736, 1.442695
    %v3792 = vpow.pop %v3791
    %v3793 = vmul.f32 %v3737, 1.442695
    %v3794 = vpow.pop %v3793
    %v3795 = vmul.f32 %v3738, 1.442695
    %v3796 = vpow.pop %v3795
    %v3797 = vmul.f32 %v3739, 1.442695
    %v3798 = vpow.pop %v3797
    %v3799 = vmul.f32 %v3740, 1.442695
    %v3800 = vpow.pop %v3799
    %v3801 = vmul.f32 %v3741, 1.442695
    %v3802 = vpow.pop %v3801
    %v3803 = vmul.f32 %v3742, 1.442695
    %v3804 = vpow.pop %v3803
    %v3805 = vmul.f32 %v3743, 1.442695
    %v3806 = vpow.pop %v3805
    %v3807 = vmul.f32 %v3744, 1.442695
    %v3808 = vpow.pop %v3807
    %v3809 = vsel %vm2816, %v3746, 0.0
    %3810 = vadd.xlane.f32.xlu0 %v3809
    %v3811 = vpop.xlane.xlu0 %3810
    %v3812 = vsel %vm2816, %v3748, 0.0
    %3813 = vadd.xlane.f32.xlu0 %v3812
    %v3814 = vpop.xlane.xlu0 %3813
    %v3815 = vsel %vm2816, %v3750, 0.0
    %3816 = vadd.xlane.f32.xlu0 %v3815
    %v3817 = vpop.xlane.xlu0 %3816
    %v3818 = vsel %vm2816, %v3752, 0.0
    %3819 = vadd.xlane.f32.xlu0 %v3818
    %v3820 = vpop.xlane.xlu0 %3819
    %v3821 = vsel %vm2816, %v3754, 0.0
    %3822 = vadd.xlane.f32.xlu0 %v3821
    %v3823 = vpop.xlane.xlu0 %3822
    %v3824 = vsel %vm2816, %v3756, 0.0
    %3825 = vadd.xlane.f32.xlu0 %v3824
    %v3826 = vpop.xlane.xlu0 %3825
    %v3827 = vsel %vm2816, %v3758, 0.0
    %3828 = vadd.xlane.f32.xlu0 %v3827
    %v3829 = vpop.xlane.xlu0 %3828
    %v3830 = vsel %vm2816, %v3760, 0.0
    %3831 = vadd.xlane.f32.xlu0 %v3830
    %v3832 = vpop.xlane.xlu0 %3831
    %v3833 = vsel %vm2816, %v3762, 0.0
    %3834 = vadd.xlane.f32.xlu0 %v3833
    %v3835 = vpop.xlane.xlu0 %3834
    %v3836 = vsel %vm2816, %v3764, 0.0
    %3837 = vadd.xlane.f32.xlu0 %v3836
    %v3838 = vpop.xlane.xlu0 %3837
    %v3839 = vsel %vm2816, %v3766, 0.0
    %3840 = vadd.xlane.f32.xlu0 %v3839
    %v3841 = vpop.xlane.xlu0 %3840
    %v3842 = vsel %vm2816, %v3768, 0.0
    %3843 = vadd.xlane.f32.xlu0 %v3842
    %v3844 = vpop.xlane.xlu0 %3843
    %v3845 = vsel %vm2816, %v3770, 0.0
    %3846 = vadd.xlane.f32.xlu0 %v3845
    %v3847 = vpop.xlane.xlu0 %3846
    %v3848 = vsel %vm2816, %v3772, 0.0
    %3849 = vadd.xlane.f32.xlu0 %v3848
    %v3850 = vpop.xlane.xlu0 %3849
    %v3851 = vsel %vm2816, %v3774, 0.0
    %3852 = vadd.xlane.f32.xlu0 %v3851
    %v3853 = vpop.xlane.xlu0 %3852
    %v3854 = vsel %vm2816, %v3776, 0.0
    %3855 = vadd.xlane.f32.xlu0 %v3854
    %v3856 = vpop.xlane.xlu0 %3855
    %v3857 = vsel %vm2816, %v3778, 0.0
    %3858 = vadd.xlane.f32.xlu0 %v3857
    %v3859 = vpop.xlane.xlu0 %3858
    %v3860 = vsel %vm2816, %v3780, 0.0
    %3861 = vadd.xlane.f32.xlu0 %v3860
    %v3862 = vpop.xlane.xlu0 %3861
    %v3863 = vsel %vm2816, %v3782, 0.0
    %3864 = vadd.xlane.f32.xlu0 %v3863
    %v3865 = vpop.xlane.xlu0 %3864
    %v3866 = vsel %vm2816, %v3784, 0.0
    %3867 = vadd.xlane.f32.xlu0 %v3866
    %v3868 = vpop.xlane.xlu0 %3867
    %v3869 = vsel %vm2816, %v3786, 0.0
    %3870 = vadd.xlane.f32.xlu0 %v3869
    %v3871 = vpop.xlane.xlu0 %3870
    %v3872 = vsel %vm2816, %v3788, 0.0
    %3873 = vadd.xlane.f32.xlu0 %v3872
    %v3874 = vpop.xlane.xlu0 %3873
    %v3875 = vsel %vm2816, %v3790, 0.0
    %3876 = vadd.xlane.f32.xlu0 %v3875
    %v3877 = vpop.xlane.xlu0 %3876
    %v3878 = vsel %vm2816, %v3792, 0.0
    %3879 = vadd.xlane.f32.xlu0 %v3878
    %v3880 = vpop.xlane.xlu0 %3879
    %v3881 = vsel %vm2816, %v3794, 0.0
    %3882 = vadd.xlane.f32.xlu0 %v3881
    %v3883 = vpop.xlane.xlu0 %3882
    %v3884 = vsel %vm2816, %v3796, 0.0
    %3885 = vadd.xlane.f32.xlu0 %v3884
    %v3886 = vpop.xlane.xlu0 %3885
    %v3887 = vsel %vm2816, %v3798, 0.0
    %3888 = vadd.xlane.f32.xlu0 %v3887
    %v3889 = vpop.xlane.xlu0 %3888
    %v3890 = vsel %vm2816, %v3800, 0.0
    %3891 = vadd.xlane.f32.xlu0 %v3890
    %v3892 = vpop.xlane.xlu0 %3891
    %v3893 = vsel %vm2816, %v3802, 0.0
    %3894 = vadd.xlane.f32.xlu0 %v3893
    %v3895 = vpop.xlane.xlu0 %3894
    %v3896 = vsel %vm2816, %v3804, 0.0
    %3897 = vadd.xlane.f32.xlu0 %v3896
    %v3898 = vpop.xlane.xlu0 %3897
    %v3899 = vsel %vm2816, %v3806, 0.0
    %3900 = vadd.xlane.f32.xlu0 %v3899
    %v3901 = vpop.xlane.xlu0 %3900
    %v3902 = vsel %vm2816, %v3808, 0.0
    %3903 = vadd.xlane.f32.xlu0 %v3902
    %v3904 = vpop.xlane.xlu0 %3903
    %v3905 = vrcp.pop %v3811
    %v3906 = vrcp.pop %v3814
    %v3907 = vrcp.pop %v3817
    %v3908 = vrcp.pop %v3820
    %v3909 = vrcp.pop %v3823
    %v3910 = vrcp.pop %v3826
    %v3911 = vrcp.pop %v3829
    %v3912 = vrcp.pop %v3832
    %v3913 = vrcp.pop %v3835
    %v3914 = vrcp.pop %v3838
    %v3915 = vrcp.pop %v3841
    %v3916 = vrcp.pop %v3844
    %v3917 = vrcp.pop %v3847
    %v3918 = vrcp.pop %v3850
    %v3919 = vrcp.pop %v3853
    %v3920 = vrcp.pop %v3856
    %v3921 = vrcp.pop %v3859
    %v3922 = vrcp.pop %v3862
    %v3923 = vrcp.pop %v3865
    %v3924 = vrcp.pop %v3868
    %v3925 = vrcp.pop %v3871
    %v3926 = vrcp.pop %v3874
    %v3927 = vrcp.pop %v3877
    %v3928 = vrcp.pop %v3880
    %v3929 = vrcp.pop %v3883
    %v3930 = vrcp.pop %v3886
    %v3931 = vrcp.pop %v3889
    %v3932 = vrcp.pop %v3892
    %v3933 = vrcp.pop %v3895
    %v3934 = vrcp.pop %v3898
    %v3935 = vrcp.pop %v3901
    %v3936 = vrcp.pop %v3904
    %v3937 = vmul.f32 %v3746, %v3905
    %v3938 = vmul.f32 %v3748, %v3906
    %v3939 = vmul.f32 %v3750, %v3907
    %v3940 = vmul.f32 %v3752, %v3908
    %v3941 = vmul.f32 %v3754, %v3909
    %v3942 = vmul.f32 %v3756, %v3910
    %v3943 = vmul.f32 %v3758, %v3911
    %v3944 = vmul.f32 %v3760, %v3912
    %v3945 = vmul.f32 %v3762, %v3913
    %v3946 = vmul.f32 %v3764, %v3914
    %v3947 = vmul.f32 %v3766, %v3915
    %v3948 = vmul.f32 %v3768, %v3916
    %v3949 = vmul.f32 %v3770, %v3917
    %v3950 = vmul.f32 %v3772, %v3918
    %v3951 = vmul.f32 %v3774, %v3919
    %v3952 = vmul.f32 %v3776, %v3920
    %v3953 = vmul.f32 %v3778, %v3921
    %v3954 = vmul.f32 %v3780, %v3922
    %v3955 = vmul.f32 %v3782, %v3923
    %v3956 = vmul.f32 %v3784, %v3924
    %v3957 = vmul.f32 %v3786, %v3925
    %v3958 = vmul.f32 %v3788, %v3926
    %v3959 = vmul.f32 %v3790, %v3927
    %v3960 = vmul.f32 %v3792, %v3928
    %v3961 = vmul.f32 %v3794, %v3929
    %v3962 = vmul.f32 %v3796, %v3930
    %v3963 = vmul.f32 %v3798, %v3931
    %v3964 = vmul.f32 %v3800, %v3932
    %v3965 = vmul.f32 %v3802, %v3933
    %v3966 = vmul.f32 %v3804, %v3934
    %v3967 = vmul.f32 %v3806, %v3935
    %v3968 = vmul.f32 %v3808, %v3936
    %v3969 = vpack.c.bf16 %v3938, %v3937
    %v3970 = vpack.c.bf16 %v3940, %v3939
    %v3971 = vpack.c.bf16 %v3942, %v3941
    %v3972 = vpack.c.bf16 %v3944, %v3943
    %v3973 = vpack.c.bf16 %v3946, %v3945
    %v3974 = vpack.c.bf16 %v3948, %v3947
    %v3975 = vpack.c.bf16 %v3950, %v3949
    %v3976 = vpack.c.bf16 %v3952, %v3951
    %v3977 = vpack.c.bf16 %v3954, %v3953
    %v3978 = vpack.c.bf16 %v3956, %v3955
    %v3979 = vpack.c.bf16 %v3958, %v3957
    %v3980 = vpack.c.bf16 %v3960, %v3959
    %v3981 = vpack.c.bf16 %v3962, %v3961
    %v3982 = vpack.c.bf16 %v3964, %v3963
    %v3983 = vpack.c.bf16 %v3966, %v3965
    %v3984 = vpack.c.bf16 %v3968, %v3967
    %v3985 = vpack.c.bf16 %v2062, %v2059
    %v3986 = vpack.c.bf16 %v2070, %v2067
    %v3987 = vpack.c.bf16 %v2159, %v2156
    %v3988 = vpack.c.bf16 %v2167, %v2164
    %v3989 = vpack.c.bf16 %v2256, %v2253
    %v3990 = vpack.c.bf16 %v2264, %v2261
    %v3991 = vpack.c.bf16 %v2353, %v2350
    %v3992 = vpack.c.bf16 %v2361, %v2358
    %v3993 = vpack.c.bf16 %v2450, %v2447
    %v3994 = vpack.c.bf16 %v2458, %v2455
    %v3995 = vpack.c.bf16 %v2547, %v2544
    %v3996 = vpack.c.bf16 %v2555, %v2552
    %v3997 = vpack.c.bf16 %v2644, %v2641
    %v3998 = vpack.c.bf16 %v2652, %v2649
    %v3999 = vpack.c.bf16 %v2741, %v2738
    %v4000 = vpack.c.bf16 %v2749, %v2746
    %v4002 = vsel %vm2816, %v3969, 0
    %4004 = vmatprep.subr.bf16.mxu0 0
    %4005 = vmatpush1.bf16.msra.mxu0 %v3985
    %4006 = vmatprep.subr.bf16.mxu0 0
    %4007 = vmatpush1.bf16.msra.mxu0 0
    %4008 = vmatprep.subr.bf16.mxu0 0
    %4009 = vmatpush1.bf16.msra.mxu0 0
    %4010 = vmatprep.subr.bf16.mxu0 0
    %4011 = vmatpush1.bf16.msra.mxu0 0
    %4012 = vmatprep.subr.bf16.mxu0 0
    %4013 = vmatpush1.bf16.msra.mxu0 0
    %4014 = vmatprep.subr.bf16.mxu0 0
    %4015 = vmatpush1.bf16.msra.mxu0 0
    %4016 = vmatprep.subr.bf16.mxu0 0
    %4017 = vmatpush1.bf16.msra.mxu0 0
    %4018 = vmatprep.subr.bf16.mxu0 0
    %4019 = vmatpush1.bf16.msra.mxu0 0
    %4020 = vmatprep.subr.bf16.mxu0 0
    %4021 = vmatpush1.bf16.msra.mxu0 0
    %4022 = vmatprep.subr.bf16.mxu0 0
    %4023 = vmatpush1.bf16.msra.mxu0 0
    %4024 = vmatprep.subr.bf16.mxu0 0
    %4025 = vmatpush1.bf16.msra.mxu0 0
    %4026 = vmatprep.subr.bf16.mxu0 0
    %4027 = vmatpush1.bf16.msra.mxu0 0
    %4028 = vmatprep.subr.bf16.mxu0 0
    %4029 = vmatpush1.bf16.msra.mxu0 0
    %4030 = vmatprep.subr.bf16.mxu0 0
    %4031 = vmatpush1.bf16.msra.mxu0 0
    %4032 = vmatprep.subr.bf16.mxu0 0
    %4033 = vmatpush1.bf16.msra.mxu0 0
    %4034 = vmatprep.subr.bf16.mxu0 0
    %4035 = vmatpush1.bf16.msra.mxu0 0
    %4036 = vmatprep.mubr.bf16.mxu0 0
    %4037 = vmatmul.mubr.bf16.gmra.mrb[0].mxu0 %v4002
    %v4038 = vpop.f32.mrb[0].mxu0
    %v4039 = vadd.f32 0.0, %v4038
    %v4040 = vpop.f32.mrb[0].mxu0
    %v4041 = vpop.f32.mrb[0].mxu0
    %v4042 = vadd.f32 0.0, %v4041
    %v4043 = vpop.f32.mrb[0].mxu0
    %4044 = vdwg.mxu0
    %v4046 = vsel %vm2816, %v3970, 0
    %4048 = vmatprep.subr.bf16.mxu0 0
    %4049 = vmatpush1.bf16.msra.mxu0 %v3986
    %4050 = vmatprep.subr.bf16.mxu0 0
    %4051 = vmatpush1.bf16.msra.mxu0 0
    %4052 = vmatprep.subr.bf16.mxu0 0
    %4053 = vmatpush1.bf16.msra.mxu0 0
    %4054 = vmatprep.subr.bf16.mxu0 0
    %4055 = vmatpush1.bf16.msra.mxu0 0
    %4056 = vmatprep.subr.bf16.mxu0 0
    %4057 = vmatpush1.bf16.msra.mxu0 0
    %4058 = vmatprep.subr.bf16.mxu0 0
    %4059 = vmatpush1.bf16.msra.mxu0 0
    %4060 = vmatprep.subr.bf16.mxu0 0
    %4061 = vmatpush1.bf16.msra.mxu0 0
    %4062 = vmatprep.subr.bf16.mxu0 0
    %4063 = vmatpush1.bf16.msra.mxu0 0
    %4064 = vmatprep.subr.bf16.mxu0 0
    %4065 = vmatpush1.bf16.msra.mxu0 0
    %4066 = vmatprep.subr.bf16.mxu0 0
    %4067 = vmatpush1.bf16.msra.mxu0 0
    %4068 = vmatprep.subr.bf16.mxu0 0
    %4069 = vmatpush1.bf16.msra.mxu0 0
    %4070 = vmatprep.subr.bf16.mxu0 0
    %4071 = vmatpush1.bf16.msra.mxu0 0
    %4072 = vmatprep.subr.bf16.mxu0 0
    %4073 = vmatpush1.bf16.msra.mxu0 0
    %4074 = vmatprep.subr.bf16.mxu0 0
    %4075 = vmatpush1.bf16.msra.mxu0 0
    %4076 = vmatprep.subr.bf16.mxu0 0
    %4077 = vmatpush1.bf16.msra.mxu0 0
    %4078 = vmatprep.subr.bf16.mxu0 0
    %4079 = vmatpush1.bf16.msra.mxu0 0
    %4080 = vmatprep.mubr.bf16.mxu0 0
    %4081 = vmatmul.mubr.bf16.gmra.mrb[0].mxu0 %v4046
    %v4082 = vpop.f32.mrb[0].mxu0
    %v4083 = vadd.f32 0.0, %v4082
    %v4084 = vpop.f32.mrb[0].mxu0
    %v4085 = vpop.f32.mrb[0].mxu0
    %v4086 = vadd.f32 0.0, %v4085
    %v4087 = vpop.f32.mrb[0].mxu0
    %4088 = vdwg.mxu0
    %v4090 = vsel %vm2816, %v3971, 0
    %4092 = vmatprep.subr.bf16.mxu0 0
    %4093 = vmatpush1.bf16.msra.mxu0 %v3987
    %4094 = vmatprep.subr.bf16.mxu0 0
    %4095 = vmatpush1.bf16.msra.mxu0 0
    %4096 = vmatprep.subr.bf16.mxu0 0
    %4097 = vmatpush1.bf16.msra.mxu0 0
    %4098 = vmatprep.subr.bf16.mxu0 0
    %4099 = vmatpush1.bf16.msra.mxu0 0
    %4100 = vmatprep.subr.bf16.mxu0 0
    %4101 = vmatpush1.bf16.msra.mxu0 0
    %4102 = vmatprep.subr.bf16.mxu0 0
    %4103 = vmatpush1.bf16.msra.mxu0 0
    %4104 = vmatprep.subr.bf16.mxu0 0
    %4105 = vmatpush1.bf16.msra.mxu0 0
    %4106 = vmatprep.subr.bf16.mxu0 0
    %4107 = vmatpush1.bf16.msra.mxu0 0
    %4108 = vmatprep.subr.bf16.mxu0 0
    %4109 = vmatpush1.bf16.msra.mxu0 0
    %4110 = vmatprep.subr.bf16.mxu0 0
    %4111 = vmatpush1.bf16.msra.mxu0 0
    %4112 = vmatprep.subr.bf16.mxu0 0
    %4113 = vmatpush1.bf16.msra.mxu0 0
    %4114 = vmatprep.subr.bf16.mxu0 0
    %4115 = vmatpush1.bf16.msra.mxu0 0
    %4116 = vmatprep.subr.bf16.mxu0 0
    %4117 = vmatpush1.bf16.msra.mxu0 0
    %4118 = vmatprep.subr.bf16.mxu0 0
    %4119 = vmatpush1.bf16.msra.mxu0 0
    %4120 = vmatprep.subr.bf16.mxu0 0
    %4121 = vmatpush1.bf16.msra.mxu0 0
    %4122 = vmatprep.subr.bf16.mxu0 0
    %4123 = vmatpush1.bf16.msra.mxu0 0
    %4124 = vmatprep.mubr.bf16.mxu0 0
    %4125 = vmatmul.mubr.bf16.gmra.mrb[0].mxu0 %v4090
    %v4126 = vpop.f32.mrb[0].mxu0
    %v4127 = vadd.f32 0.0, %v4126
    %v4128 = vpop.f32.mrb[0].mxu0
    %v4129 = vpop.f32.mrb[0].mxu0
    %v4130 = vadd.f32 0.0, %v4129
    %v4131 = vpop.f32.mrb[0].mxu0
    %4132 = vdwg.mxu0
    %v4134 = vsel %vm2816, %v3972, 0
    %4136 = vmatprep.subr.bf16.mxu0 0
    %4137 = vmatpush1.bf16.msra.mxu0 %v3988
    %4138 = vmatprep.subr.bf16.mxu0 0
    %4139 = vmatpush1.bf16.msra.mxu0 0
    %4140 = vmatprep.subr.bf16.mxu0 0
    %4141 = vmatpush1.bf16.msra.mxu0 0
    %4142 = vmatprep.subr.bf16.mxu0 0
    %4143 = vmatpush1.bf16.msra.mxu0 0
    %4144 = vmatprep.subr.bf16.mxu0 0
    %4145 = vmatpush1.bf16.msra.mxu0 0
    %4146 = vmatprep.subr.bf16.mxu0 0
    %4147 = vmatpush1.bf16.msra.mxu0 0
    %4148 = vmatprep.subr.bf16.mxu0 0
    %4149 = vmatpush1.bf16.msra.mxu0 0
    %4150 = vmatprep.subr.bf16.mxu0 0
    %4151 = vmatpush1.bf16.msra.mxu0 0
    %4152 = vmatprep.subr.bf16.mxu0 0
    %4153 = vmatpush1.bf16.msra.mxu0 0
    %4154 = vmatprep.subr.bf16.mxu0 0
    %4155 = vmatpush1.bf16.msra.mxu0 0
    %4156 = vmatprep.subr.bf16.mxu0 0
    %4157 = vmatpush1.bf16.msra.mxu0 0
    %4158 = vmatprep.subr.bf16.mxu0 0
    %4159 = vmatpush1.bf16.msra.mxu0 0
    %4160 = vmatprep.subr.bf16.mxu0 0
    %4161 = vmatpush1.bf16.msra.mxu0 0
    %4162 = vmatprep.subr.bf16.mxu0 0
    %4163 = vmatpush1.bf16.msra.mxu0 0
    %4164 = vmatprep.subr.bf16.mxu0 0
    %4165 = vmatpush1.bf16.msra.mxu0 0
    %4166 = vmatprep.subr.bf16.mxu0 0
    %4167 = vmatpush1.bf16.msra.mxu0 0
    %4168 = vmatprep.mubr.bf16.mxu0 0
    %4169 = vmatmul.mubr.bf16.gmra.mrb[0].mxu0 %v4134
    %v4170 = vpop.f32.mrb[0].mxu0
    %v4171 = vadd.f32 0.0, %v4170
    %v4172 = vpop.f32.mrb[0].mxu0
    %v4173 = vpop.f32.mrb[0].mxu0
    %v4174 = vadd.f32 0.0, %v4173
    %v4175 = vpop.f32.mrb[0].mxu0
    %4176 = vdwg.mxu0
    %v4178 = vsel %vm2816, %v3973, 0
    %4180 = vmatprep.subr.bf16.mxu0 0
    %4181 = vmatpush1.bf16.msra.mxu0 %v3989
    %4182 = vmatprep.subr.bf16.mxu0 0
    %4183 = vmatpush1.bf16.msra.mxu0 0
    %4184 = vmatprep.subr.bf16.mxu0 0
    %4185 = vmatpush1.bf16.msra.mxu0 0
    %4186 = vmatprep.subr.bf16.mxu0 0
    %4187 = vmatpush1.bf16.msra.mxu0 0
    %4188 = vmatprep.subr.bf16.mxu0 0
    %4189 = vmatpush1.bf16.msra.mxu0 0
    %4190 = vmatprep.subr.bf16.mxu0 0
    %4191 = vmatpush1.bf16.msra.mxu0 0
    %4192 = vmatprep.subr.bf16.mxu0 0
    %4193 = vmatpush1.bf16.msra.mxu0 0
    %4194 = vmatprep.subr.bf16.mxu0 0
    %4195 = vmatpush1.bf16.msra.mxu0 0
    %4196 = vmatprep.subr.bf16.mxu0 0
    %4197 = vmatpush1.bf16.msra.mxu0 0
    %4198 = vmatprep.subr.bf16.mxu0 0
    %4199 = vmatpush1.bf16.msra.mxu0 0
    %4200 = vmatprep.subr.bf16.mxu0 0
    %4201 = vmatpush1.bf16.msra.mxu0 0
    %4202 = vmatprep.subr.bf16.mxu0 0
    %4203 = vmatpush1.bf16.msra.mxu0 0
    %4204 = vmatprep.subr.bf16.mxu0 0
    %4205 = vmatpush1.bf16.msra.mxu0 0
    %4206 = vmatprep.subr.bf16.mxu0 0
    %4207 = vmatpush1.bf16.msra.mxu0 0
    %4208 = vmatprep.subr.bf16.mxu0 0
    %4209 = vmatpush1.bf16.msra.mxu0 0
    %4210 = vmatprep.subr.bf16.mxu0 0
    %4211 = vmatpush1.bf16.msra.mxu0 0
    %4212 = vmatprep.mubr.bf16.mxu0 0
    %4213 = vmatmul.mubr.bf16.gmra.mrb[0].mxu0 %v4178
    %v4214 = vpop.f32.mrb[0].mxu0
    %v4215 = vadd.f32 0.0, %v4214
    %v4216 = vpop.f32.mrb[0].mxu0
    %v4217 = vpop.f32.mrb[0].mxu0
    %v4218 = vadd.f32 0.0, %v4217
    %v4219 = vpop.f32.mrb[0].mxu0
    %4220 = vdwg.mxu0
    %v4222 = vsel %vm2816, %v3974, 0
    %4224 = vmatprep.subr.bf16.mxu0 0
    %4225 = vmatpush1.bf16.msra.mxu0 %v3990
    %4226 = vmatprep.subr.bf16.mxu0 0
    %4227 = vmatpush1.bf16.msra.mxu0 0
    %4228 = vmatprep.subr.bf16.mxu0 0
    %4229 = vmatpush1.bf16.msra.mxu0 0
    %4230 = vmatprep.subr.bf16.mxu0 0
    %4231 = vmatpush1.bf16.msra.mxu0 0
    %4232 = vmatprep.subr.bf16.mxu0 0
    %4233 = vmatpush1.bf16.msra.mxu0 0
    %4234 = vmatprep.subr.bf16.mxu0 0
    %4235 = vmatpush1.bf16.msra.mxu0 0
    %4236 = vmatprep.subr.bf16.mxu0 0
    %4237 = vmatpush1.bf16.msra.mxu0 0
    %4238 = vmatprep.subr.bf16.mxu0 0
    %4239 = vmatpush1.bf16.msra.mxu0 0
    %4240 = vmatprep.subr.bf16.mxu0 0
    %4241 = vmatpush1.bf16.msra.mxu0 0
    %4242 = vmatprep.subr.bf16.mxu0 0
    %4243 = vmatpush1.bf16.msra.mxu0 0
    %4244 = vmatprep.subr.bf16.mxu0 0
    %4245 = vmatpush1.bf16.msra.mxu0 0
    %4246 = vmatprep.subr.bf16.mxu0 0
    %4247 = vmatpush1.bf16.msra.mxu0 0
    %4248 = vmatprep.subr.bf16.mxu0 0
    %4249 = vmatpush1.bf16.msra.mxu0 0
    %4250 = vmatprep.subr.bf16.mxu0 0
    %4251 = vmatpush1.bf16.msra.mxu0 0
    %4252 = vmatprep.subr.bf16.mxu0 0
    %4253 = vmatpush1.bf16.msra.mxu0 0
    %4254 = vmatprep.subr.bf16.mxu0 0
    %4255 = vmatpush1.bf16.msra.mxu0 0
    %4256 = vmatprep.mubr.bf16.mxu0 0
    %4257 = vmatmul.mubr.bf16.gmra.mrb[0].mxu0 %v4222
    %v4258 = vpop.f32.mrb[0].mxu0
    %v4259 = vadd.f32 0.0, %v4258
    %v4260 = vpop.f32.mrb[0].mxu0
    %v4261 = vpop.f32.mrb[0].mxu0
    %v4262 = vadd.f32 0.0, %v4261
    %v4263 = vpop.f32.mrb[0].mxu0
    %4264 = vdwg.mxu0
    %v4266 = vsel %vm2816, %v3975, 0
    %4268 = vmatprep.subr.bf16.mxu0 0
    %4269 = vmatpush1.bf16.msra.mxu0 %v3991
    %4270 = vmatprep.subr.bf16.mxu0 0
    %4271 = vmatpush1.bf16.msra.mxu0 0
    %4272 = vmatprep.subr.bf16.mxu0 0
    %4273 = vmatpush1.bf16.msra.mxu0 0
    %4274 = vmatprep.subr.bf16.mxu0 0
    %4275 = vmatpush1.bf16.msra.mxu0 0
    %4276 = vmatprep.subr.bf16.mxu0 0
    %4277 = vmatpush1.bf16.msra.mxu0 0
    %4278 = vmatprep.subr.bf16.mxu0 0
    %4279 = vmatpush1.bf16.msra.mxu0 0
    %4280 = vmatprep.subr.bf16.mxu0 0
    %4281 = vmatpush1.bf16.msra.mxu0 0
    %4282 = vmatprep.subr.bf16.mxu0 0
    %4283 = vmatpush1.bf16.msra.mxu0 0
    %4284 = vmatprep.subr.bf16.mxu0 0
    %4285 = vmatpush1.bf16.msra.mxu0 0
    %4286 = vmatprep.subr.bf16.mxu0 0
    %4287 = vmatpush1.bf16.msra.mxu0 0
    %4288 = vmatprep.subr.bf16.mxu0 0
    %4289 = vmatpush1.bf16.msra.mxu0 0
    %4290 = vmatprep.subr.bf16.mxu0 0
    %4291 = vmatpush1.bf16.msra.mxu0 0
    %4292 = vmatprep.subr.bf16.mxu0 0
    %4293 = vmatpush1.bf16.msra.mxu0 0
    %4294 = vmatprep.subr.bf16.mxu0 0
    %4295 = vmatpush1.bf16.msra.mxu0 0
    %4296 = vmatprep.subr.bf16.mxu0 0
    %4297 = vmatpush1.bf16.msra.mxu0 0
    %4298 = vmatprep.subr.bf16.mxu0 0
    %4299 = vmatpush1.bf16.msra.mxu0 0
    %4300 = vmatprep.mubr.bf16.mxu0 0
    %4301 = vmatmul.mubr.bf16.gmra.mrb[0].mxu0 %v4266
    %v4302 = vpop.f32.mrb[0].mxu0
    %v4303 = vadd.f32 0.0, %v4302
    %v4304 = vpop.f32.mrb[0].mxu0
    %v4305 = vpop.f32.mrb[0].mxu0
    %v4306 = vadd.f32 0.0, %v4305
    %v4307 = vpop.f32.mrb[0].mxu0
    %4308 = vdwg.mxu0
    %v4310 = vsel %vm2816, %v3976, 0
    %4312 = vmatprep.subr.bf16.mxu0 0
    %4313 = vmatpush1.bf16.msra.mxu0 %v3992
    %4314 = vmatprep.subr.bf16.mxu0 0
    %4315 = vmatpush1.bf16.msra.mxu0 0
    %4316 = vmatprep.subr.bf16.mxu0 0
    %4317 = vmatpush1.bf16.msra.mxu0 0
    %4318 = vmatprep.subr.bf16.mxu0 0
    %4319 = vmatpush1.bf16.msra.mxu0 0
    %4320 = vmatprep.subr.bf16.mxu0 0
    %4321 = vmatpush1.bf16.msra.mxu0 0
    %4322 = vmatprep.subr.bf16.mxu0 0
    %4323 = vmatpush1.bf16.msra.mxu0 0
    %4324 = vmatprep.subr.bf16.mxu0 0
    %4325 = vmatpush1.bf16.msra.mxu0 0
    %4326 = vmatprep.subr.bf16.mxu0 0
    %4327 = vmatpush1.bf16.msra.mxu0 0
    %4328 = vmatprep.subr.bf16.mxu0 0
    %4329 = vmatpush1.bf16.msra.mxu0 0
    %4330 = vmatprep.subr.bf16.mxu0 0
    %4331 = vmatpush1.bf16.msra.mxu0 0
    %4332 = vmatprep.subr.bf16.mxu0 0
    %4333 = vmatpush1.bf16.msra.mxu0 0
    %4334 = vmatprep.subr.bf16.mxu0 0
    %4335 = vmatpush1.bf16.msra.mxu0 0
    %4336 = vmatprep.subr.bf16.mxu0 0
    %4337 = vmatpush1.bf16.msra.mxu0 0
    %4338 = vmatprep.subr.bf16.mxu0 0
    %4339 = vmatpush1.bf16.msra.mxu0 0
    %4340 = vmatprep.subr.bf16.mxu0 0
    %4341 = vmatpush1.bf16.msra.mxu0 0
    %4342 = vmatprep.subr.bf16.mxu0 0
    %4343 = vmatpush1.bf16.msra.mxu0 0
    %4344 = vmatprep.mubr.bf16.mxu0 0
    %4345 = vmatmul.mubr.bf16.gmra.mrb[0].mxu0 %v4310
    %v4346 = vpop.f32.mrb[0].mxu0
    %v4347 = vadd.f32 0.0, %v4346
    %v4348 = vpop.f32.mrb[0].mxu0
    %v4349 = vpop.f32.mrb[0].mxu0
    %v4350 = vadd.f32 0.0, %v4349
    %v4351 = vpop.f32.mrb[0].mxu0
    %4352 = vdwg.mxu0
    %v4354 = vsel %vm2816, %v3977, 0
    %4356 = vmatprep.subr.bf16.mxu0 0
    %4357 = vmatpush1.bf16.msra.mxu0 %v3993
    %4358 = vmatprep.subr.bf16.mxu0 0
    %4359 = vmatpush1.bf16.msra.mxu0 0
    %4360 = vmatprep.subr.bf16.mxu0 0
    %4361 = vmatpush1.bf16.msra.mxu0 0
    %4362 = vmatprep.subr.bf16.mxu0 0
    %4363 = vmatpush1.bf16.msra.mxu0 0
    %4364 = vmatprep.subr.bf16.mxu0 0
    %4365 = vmatpush1.bf16.msra.mxu0 0
    %4366 = vmatprep.subr.bf16.mxu0 0
    %4367 = vmatpush1.bf16.msra.mxu0 0
    %4368 = vmatprep.subr.bf16.mxu0 0
    %4369 = vmatpush1.bf16.msra.mxu0 0
    %4370 = vmatprep.subr.bf16.mxu0 0
    %4371 = vmatpush1.bf16.msra.mxu0 0
    %4372 = vmatprep.subr.bf16.mxu0 0
    %4373 = vmatpush1.bf16.msra.mxu0 0
    %4374 = vmatprep.subr.bf16.mxu0 0
    %4375 = vmatpush1.bf16.msra.mxu0 0
    %4376 = vmatprep.subr.bf16.mxu0 0
    %4377 = vmatpush1.bf16.msra.mxu0 0
    %4378 = vmatprep.subr.bf16.mxu0 0
    %4379 = vmatpush1.bf16.msra.mxu0 0
    %4380 = vmatprep.subr.bf16.mxu0 0
    %4381 = vmatpush1.bf16.msra.mxu0 0
    %4382 = vmatprep.subr.bf16.mxu0 0
    %4383 = vmatpush1.bf16.msra.mxu0 0
    %4384 = vmatprep.subr.bf16.mxu0 0
    %4385 = vmatpush1.bf16.msra.mxu0 0
    %4386 = vmatprep.subr.bf16.mxu0 0
    %4387 = vmatpush1.bf16.msra.mxu0 0
    %4388 = vmatprep.mubr.bf16.mxu0 0
    %4389 = vmatmul.mubr.bf16.gmra.mrb[0].mxu0 %v4354
    %v4390 = vpop.f32.mrb[0].mxu0
    %v4391 = vadd.f32 0.0, %v4390
    %v4392 = vpop.f32.mrb[0].mxu0
    %v4393 = vpop.f32.mrb[0].mxu0
    %v4394 = vadd.f32 0.0, %v4393
    %v4395 = vpop.f32.mrb[0].mxu0
    %4396 = vdwg.mxu0
    %v4398 = vsel %vm2816, %v3978, 0
    %4400 = vmatprep.subr.bf16.mxu0 0
    %4401 = vmatpush1.bf16.msra.mxu0 %v3994
    %4402 = vmatprep.subr.bf16.mxu0 0
    %4403 = vmatpush1.bf16.msra.mxu0 0
    %4404 = vmatprep.subr.bf16.mxu0 0
    %4405 = vmatpush1.bf16.msra.mxu0 0
    %4406 = vmatprep.subr.bf16.mxu0 0
    %4407 = vmatpush1.bf16.msra.mxu0 0
    %4408 = vmatprep.subr.bf16.mxu0 0
    %4409 = vmatpush1.bf16.msra.mxu0 0
    %4410 = vmatprep.subr.bf16.mxu0 0
    %4411 = vmatpush1.bf16.msra.mxu0 0
    %4412 = vmatprep.subr.bf16.mxu0 0
    %4413 = vmatpush1.bf16.msra.mxu0 0
    %4414 = vmatprep.subr.bf16.mxu0 0
    %4415 = vmatpush1.bf16.msra.mxu0 0
    %4416 = vmatprep.subr.bf16.mxu0 0
    %4417 = vmatpush1.bf16.msra.mxu0 0
    %4418 = vmatprep.subr.bf16.mxu0 0
    %4419 = vmatpush1.bf16.msra.mxu0 0
    %4420 = vmatprep.subr.bf16.mxu0 0
    %4421 = vmatpush1.bf16.msra.mxu0 0
    %4422 = vmatprep.subr.bf16.mxu0 0
    %4423 = vmatpush1.bf16.msra.mxu0 0
    %4424 = vmatprep.subr.bf16.mxu0 0
    %4425 = vmatpush1.bf16.msra.mxu0 0
    %4426 = vmatprep.subr.bf16.mxu0 0
    %4427 = vmatpush1.bf16.msra.mxu0 0
    %4428 = vmatprep.subr.bf16.mxu0 0
    %4429 = vmatpush1.bf16.msra.mxu0 0
    %4430 = vmatprep.subr.bf16.mxu0 0
    %4431 = vmatpush1.bf16.msra.mxu0 0
    %4432 = vmatprep.mubr.bf16.mxu0 0
    %4433 = vmatmul.mubr.bf16.gmra.mrb[0].mxu0 %v4398
    %v4434 = vpop.f32.mrb[0].mxu0
    %v4435 = vadd.f32 0.0, %v4434
    %v4436 = vpop.f32.mrb[0].mxu0
    %v4437 = vpop.f32.mrb[0].mxu0
    %v4438 = vadd.f32 0.0, %v4437
    %v4439 = vpop.f32.mrb[0].mxu0
    %4440 = vdwg.mxu0
    %v4442 = vsel %vm2816, %v3979, 0
    %4444 = vmatprep.subr.bf16.mxu0 0
    %4445 = vmatpush1.bf16.msra.mxu0 %v3995
    %4446 = vmatprep.subr.bf16.mxu0 0
    %4447 = vmatpush1.bf16.msra.mxu0 0
    %4448 = vmatprep.subr.bf16.mxu0 0
    %4449 = vmatpush1.bf16.msra.mxu0 0
    %4450 = vmatprep.subr.bf16.mxu0 0
    %4451 = vmatpush1.bf16.msra.mxu0 0
    %4452 = vmatprep.subr.bf16.mxu0 0
    %4453 = vmatpush1.bf16.msra.mxu0 0
    %4454 = vmatprep.subr.bf16.mxu0 0
    %4455 = vmatpush1.bf16.msra.mxu0 0
    %4456 = vmatprep.subr.bf16.mxu0 0
    %4457 = vmatpush1.bf16.msra.mxu0 0
    %4458 = vmatprep.subr.bf16.mxu0 0
    %4459 = vmatpush1.bf16.msra.mxu0 0
    %4460 = vmatprep.subr.bf16.mxu0 0
    %4461 = vmatpush1.bf16.msra.mxu0 0
    %4462 = vmatprep.subr.bf16.mxu0 0
    %4463 = vmatpush1.bf16.msra.mxu0 0
    %4464 = vmatprep.subr.bf16.mxu0 0
    %4465 = vmatpush1.bf16.msra.mxu0 0
    %4466 = vmatprep.subr.bf16.mxu0 0
    %4467 = vmatpush1.bf16.msra.mxu0 0
    %4468 = vmatprep.subr.bf16.mxu0 0
    %4469 = vmatpush1.bf16.msra.mxu0 0
    %4470 = vmatprep.subr.bf16.mxu0 0
    %4471 = vmatpush1.bf16.msra.mxu0 0
    %4472 = vmatprep.subr.bf16.mxu0 0
    %4473 = vmatpush1.bf16.msra.mxu0 0
    %4474 = vmatprep.subr.bf16.mxu0 0
    %4475 = vmatpush1.bf16.msra.mxu0 0
    %4476 = vmatprep.mubr.bf16.mxu0 0
    %4477 = vmatmul.mubr.bf16.gmra.mrb[0].mxu0 %v4442
    %v4478 = vpop.f32.mrb[0].mxu0
    %v4479 = vadd.f32 0.0, %v4478
    %v4480 = vpop.f32.mrb[0].mxu0
    %v4481 = vpop.f32.mrb[0].mxu0
    %v4482 = vadd.f32 0.0, %v4481
    %v4483 = vpop.f32.mrb[0].mxu0
    %4484 = vdwg.mxu0
    %v4486 = vsel %vm2816, %v3980, 0
    %4488 = vmatprep.subr.bf16.mxu0 0
    %4489 = vmatpush1.bf16.msra.mxu0 %v3996
    %4490 = vmatprep.subr.bf16.mxu0 0
    %4491 = vmatpush1.bf16.msra.mxu0 0
    %4492 = vmatprep.subr.bf16.mxu0 0
    %4493 = vmatpush1.bf16.msra.mxu0 0
    %4494 = vmatprep.subr.bf16.mxu0 0
    %4495 = vmatpush1.bf16.msra.mxu0 0
    %4496 = vmatprep.subr.bf16.mxu0 0
    %4497 = vmatpush1.bf16.msra.mxu0 0
    %4498 = vmatprep.subr.bf16.mxu0 0
    %4499 = vmatpush1.bf16.msra.mxu0 0
    %4500 = vmatprep.subr.bf16.mxu0 0
    %4501 = vmatpush1.bf16.msra.mxu0 0
    %4502 = vmatprep.subr.bf16.mxu0 0
    %4503 = vmatpush1.bf16.msra.mxu0 0
    %4504 = vmatprep.subr.bf16.mxu0 0
    %4505 = vmatpush1.bf16.msra.mxu0 0
    %4506 = vmatprep.subr.bf16.mxu0 0
    %4507 = vmatpush1.bf16.msra.mxu0 0
    %4508 = vmatprep.subr.bf16.mxu0 0
    %4509 = vmatpush1.bf16.msra.mxu0 0
    %4510 = vmatprep.subr.bf16.mxu0 0
    %4511 = vmatpush1.bf16.msra.mxu0 0
    %4512 = vmatprep.subr.bf16.mxu0 0
    %4513 = vmatpush1.bf16.msra.mxu0 0
    %4514 = vmatprep.subr.bf16.mxu0 0
    %4515 = vmatpush1.bf16.msra.mxu0 0
    %4516 = vmatprep.subr.bf16.mxu0 0
    %4517 = vmatpush1.bf16.msra.mxu0 0
    %4518 = vmatprep.subr.bf16.mxu0 0
    %4519 = vmatpush1.bf16.msra.mxu0 0
    %4520 = vmatprep.mubr.bf16.mxu0 0
    %4521 = vmatmul.mubr.bf16.gmra.mrb[0].mxu0 %v4486
    %v4522 = vpop.f32.mrb[0].mxu0
    %v4523 = vadd.f32 0.0, %v4522
    %v4524 = vpop.f32.mrb[0].mxu0
    %v4525 = vpop.f32.mrb[0].mxu0
    %v4526 = vadd.f32 0.0, %v4525
    %v4527 = vpop.f32.mrb[0].mxu0
    %4528 = vdwg.mxu0
    %v4530 = vsel %vm2816, %v3981, 0
    %4532 = vmatprep.subr.bf16.mxu0 0
    %4533 = vmatpush1.bf16.msra.mxu0 %v3997
    %4534 = vmatprep.subr.bf16.mxu0 0
    %4535 = vmatpush1.bf16.msra.mxu0 0
    %4536 = vmatprep.subr.bf16.mxu0 0
    %4537 = vmatpush1.bf16.msra.mxu0 0
    %4538 = vmatprep.subr.bf16.mxu0 0
    %4539 = vmatpush1.bf16.msra.mxu0 0
    %4540 = vmatprep.subr.bf16.mxu0 0
    %4541 = vmatpush1.bf16.msra.mxu0 0
    %4542 = vmatprep.subr.bf16.mxu0 0
    %4543 = vmatpush1.bf16.msra.mxu0 0
    %4544 = vmatprep.subr.bf16.mxu0 0
    %4545 = vmatpush1.bf16.msra.mxu0 0
    %4546 = vmatprep.subr.bf16.mxu0 0
    %4547 = vmatpush1.bf16.msra.mxu0 0
    %4548 = vmatprep.subr.bf16.mxu0 0
    %4549 = vmatpush1.bf16.msra.mxu0 0
    %4550 = vmatprep.subr.bf16.mxu0 0
    %4551 = vmatpush1.bf16.msra.mxu0 0
    %4552 = vmatprep.subr.bf16.mxu0 0
    %4553 = vmatpush1.bf16.msra.mxu0 0
    %4554 = vmatprep.subr.bf16.mxu0 0
    %4555 = vmatpush1.bf16.msra.mxu0 0
    %4556 = vmatprep.subr.bf16.mxu0 0
    %4557 = vmatpush1.bf16.msra.mxu0 0
    %4558 = vmatprep.subr.bf16.mxu0 0
    %4559 = vmatpush1.bf16.msra.mxu0 0
    %4560 = vmatprep.subr.bf16.mxu0 0
    %4561 = vmatpush1.bf16.msra.mxu0 0
    %4562 = vmatprep.subr.bf16.mxu0 0
    %4563 = vmatpush1.bf16.msra.mxu0 0
    %4564 = vmatprep.mubr.bf16.mxu0 0
    %4565 = vmatmul.mubr.bf16.gmra.mrb[0].mxu0 %v4530
    %v4566 = vpop.f32.mrb[0].mxu0
    %v4567 = vadd.f32 0.0, %v4566
    %v4568 = vpop.f32.mrb[0].mxu0
    %v4569 = vpop.f32.mrb[0].mxu0
    %v4570 = vadd.f32 0.0, %v4569
    %v4571 = vpop.f32.mrb[0].mxu0
    %4572 = vdwg.mxu0
    %v4574 = vsel %vm2816, %v3982, 0
    %4576 = vmatprep.subr.bf16.mxu0 0
    %4577 = vmatpush1.bf16.msra.mxu0 %v3998
    %4578 = vmatprep.subr.bf16.mxu0 0
    %4579 = vmatpush1.bf16.msra.mxu0 0
    %4580 = vmatprep.subr.bf16.mxu0 0
    %4581 = vmatpush1.bf16.msra.mxu0 0
    %4582 = vmatprep.subr.bf16.mxu0 0
    %4583 = vmatpush1.bf16.msra.mxu0 0
    %4584 = vmatprep.subr.bf16.mxu0 0
    %4585 = vmatpush1.bf16.msra.mxu0 0
    %4586 = vmatprep.subr.bf16.mxu0 0
    %4587 = vmatpush1.bf16.msra.mxu0 0
    %4588 = vmatprep.subr.bf16.mxu0 0
    %4589 = vmatpush1.bf16.msra.mxu0 0
    %4590 = vmatprep.subr.bf16.mxu0 0
    %4591 = vmatpush1.bf16.msra.mxu0 0
    %4592 = vmatprep.subr.bf16.mxu0 0
    %4593 = vmatpush1.bf16.msra.mxu0 0
    %4594 = vmatprep.subr.bf16.mxu0 0
    %4595 = vmatpush1.bf16.msra.mxu0 0
    %4596 = vmatprep.subr.bf16.mxu0 0
    %4597 = vmatpush1.bf16.msra.mxu0 0
    %4598 = vmatprep.subr.bf16.mxu0 0
    %4599 = vmatpush1.bf16.msra.mxu0 0
    %4600 = vmatprep.subr.bf16.mxu0 0
    %4601 = vmatpush1.bf16.msra.mxu0 0
    %4602 = vmatprep.subr.bf16.mxu0 0
    %4603 = vmatpush1.bf16.msra.mxu0 0
    %4604 = vmatprep.subr.bf16.mxu0 0
    %4605 = vmatpush1.bf16.msra.mxu0 0
    %4606 = vmatprep.subr.bf16.mxu0 0
    %4607 = vmatpush1.bf16.msra.mxu0 0
    %4608 = vmatprep.mubr.bf16.mxu0 0
    %4609 = vmatmul.mubr.bf16.gmra.mrb[0].mxu0 %v4574
    %v4610 = vpop.f32.mrb[0].mxu0
    %v4611 = vadd.f32 0.0, %v4610
    %v4612 = vpop.f32.mrb[0].mxu0
    %v4613 = vpop.f32.mrb[0].mxu0
    %v4614 = vadd.f32 0.0, %v4613
    %v4615 = vpop.f32.mrb[0].mxu0
    %4616 = vdwg.mxu0
    %v4618 = vsel %vm2816, %v3983, 0
    %4620 = vmatprep.subr.bf16.mxu0 0
    %4621 = vmatpush1.bf16.msra.mxu0 %v3999
    %4622 = vmatprep.subr.bf16.mxu0 0
    %4623 = vmatpush1.bf16.msra.mxu0 0
    %4624 = vmatprep.subr.bf16.mxu0 0
    %4625 = vmatpush1.bf16.msra.mxu0 0
    %4626 = vmatprep.subr.bf16.mxu0 0
    %4627 = vmatpush1.bf16.msra.mxu0 0
    %4628 = vmatprep.subr.bf16.mxu0 0
    %4629 = vmatpush1.bf16.msra.mxu0 0
    %4630 = vmatprep.subr.bf16.mxu0 0
    %4631 = vmatpush1.bf16.msra.mxu0 0
    %4632 = vmatprep.subr.bf16.mxu0 0
    %4633 = vmatpush1.bf16.msra.mxu0 0
    %4634 = vmatprep.subr.bf16.mxu0 0
    %4635 = vmatpush1.bf16.msra.mxu0 0
    %4636 = vmatprep.subr.bf16.mxu0 0
    %4637 = vmatpush1.bf16.msra.mxu0 0
    %4638 = vmatprep.subr.bf16.mxu0 0
    %4639 = vmatpush1.bf16.msra.mxu0 0
    %4640 = vmatprep.subr.bf16.mxu0 0
    %4641 = vmatpush1.bf16.msra.mxu0 0
    %4642 = vmatprep.subr.bf16.mxu0 0
    %4643 = vmatpush1.bf16.msra.mxu0 0
    %4644 = vmatprep.subr.bf16.mxu0 0
    %4645 = vmatpush1.bf16.msra.mxu0 0
    %4646 = vmatprep.subr.bf16.mxu0 0
    %4647 = vmatpush1.bf16.msra.mxu0 0
    %4648 = vmatprep.subr.bf16.mxu0 0
    %4649 = vmatpush1.bf16.msra.mxu0 0
    %4650 = vmatprep.subr.bf16.mxu0 0
    %4651 = vmatpush1.bf16.msra.mxu0 0
    %4652 = vmatprep.mubr.bf16.mxu0 0
    %4653 = vmatmul.mubr.bf16.gmra.mrb[0].mxu0 %v4618
    %v4654 = vpop.f32.mrb[0].mxu0
    %v4655 = vadd.f32 0.0, %v4654
    %v4656 = vpop.f32.mrb[0].mxu0
    %v4657 = vpop.f32.mrb[0].mxu0
    %v4658 = vadd.f32 0.0, %v4657
    %v4659 = vpop.f32.mrb[0].mxu0
    %4660 = vdwg.mxu0
    %v4662 = vsel %vm2816, %v3984, 0
    %4664 = vmatprep.subr.bf16.mxu0 0
    %4665 = vmatpush1.bf16.msra.mxu0 %v4000
    %4666 = vmatprep.subr.bf16.mxu0 0
    %4667 = vmatpush1.bf16.msra.mxu0 0
    %4668 = vmatprep.subr.bf16.mxu0 0
    %4669 = vmatpush1.bf16.msra.mxu0 0
    %4670 = vmatprep.subr.bf16.mxu0 0
    %4671 = vmatpush1.bf16.msra.mxu0 0
    %4672 = vmatprep.subr.bf16.mxu0 0
    %4673 = vmatpush1.bf16.msra.mxu0 0
    %4674 = vmatprep.subr.bf16.mxu0 0
    %4675 = vmatpush1.bf16.msra.mxu0 0
    %4676 = vmatprep.subr.bf16.mxu0 0
    %4677 = vmatpush1.bf16.msra.mxu0 0
    %4678 = vmatprep.subr.bf16.mxu0 0
    %4679 = vmatpush1.bf16.msra.mxu0 0
    %4680 = vmatprep.subr.bf16.mxu0 0
    %4681 = vmatpush1.bf16.msra.mxu0 0
    %4682 = vmatprep.subr.bf16.mxu0 0
    %4683 = vmatpush1.bf16.msra.mxu0 0
    %4684 = vmatprep.subr.bf16.mxu0 0
    %4685 = vmatpush1.bf16.msra.mxu0 0
    %4686 = vmatprep.subr.bf16.mxu0 0
    %4687 = vmatpush1.bf16.msra.mxu0 0
    %4688 = vmatprep.subr.bf16.mxu0 0
    %4689 = vmatpush1.bf16.msra.mxu0 0
    %4690 = vmatprep.subr.bf16.mxu0 0
    %4691 = vmatpush1.bf16.msra.mxu0 0
    %4692 = vmatprep.subr.bf16.mxu0 0
    %4693 = vmatpush1.bf16.msra.mxu0 0
    %4694 = vmatprep.subr.bf16.mxu0 0
    %4695 = vmatpush1.bf16.msra.mxu0 0
    %4696 = vmatprep.mubr.bf16.mxu0 0
    %4697 = vmatmul.mubr.bf16.gmra.mrb[0].mxu0 %v4662
    %v4698 = vpop.f32.mrb[0].mxu0
    %v4699 = vadd.f32 0.0, %v4698
    %v4700 = vpop.f32.mrb[0].mxu0
    %v4701 = vpop.f32.mrb[0].mxu0
    %v4702 = vadd.f32 0.0, %v4701
    %v4703 = vpop.f32.mrb[0].mxu0
    %4704 = vdwg.mxu0
    %v4705 = vsel %vm2816, %v4039, 0.0
    %v4706 = vsel %vm2816, %v4042, 0.0
    %v4707 = vadd.f32 %v4705, %v4706
    %v4708 = vrot.slane %v4707, 4
    %v4709 = vadd.f32 %v4707, %v4708
    %v4710 = vrot.slane %v4709, 2
    %v4711 = vadd.f32 %v4709, %v4710
    %v4712 = vrot.slane %v4711, 1
    %v4713 = vadd.f32 %v4711, %v4712
    %v4714 = vsel %vm2816, %v4083, 0.0
    %v4715 = vsel %vm2816, %v4086, 0.0
    %v4716 = vadd.f32 %v4714, %v4715
    %v4717 = vrot.slane %v4716, 4
    %v4718 = vadd.f32 %v4716, %v4717
    %v4719 = vrot.slane %v4718, 2
    %v4720 = vadd.f32 %v4718, %v4719
    %v4721 = vrot.slane %v4720, 1
    %v4722 = vadd.f32 %v4720, %v4721
    %v4723 = vsel %vm2816, %v4127, 0.0
    %v4724 = vsel %vm2816, %v4130, 0.0
    %v4725 = vadd.f32 %v4723, %v4724
    %v4726 = vrot.slane %v4725, 4
    %v4727 = vadd.f32 %v4725, %v4726
    %v4728 = vrot.slane %v4727, 2
    %v4729 = vadd.f32 %v4727, %v4728
    %v4730 = vrot.slane %v4729, 1
    %v4731 = vadd.f32 %v4729, %v4730
    %v4732 = vsel %vm2816, %v4171, 0.0
    %v4733 = vsel %vm2816, %v4174, 0.0
    %v4734 = vadd.f32 %v4732, %v4733
    %v4735 = vrot.slane %v4734, 4
    %v4736 = vadd.f32 %v4734, %v4735
    %v4737 = vrot.slane %v4736, 2
    %v4738 = vadd.f32 %v4736, %v4737
    %v4739 = vrot.slane %v4738, 1
    %v4740 = vadd.f32 %v4738, %v4739
    %v4741 = vsel %vm2816, %v4215, 0.0
    %v4742 = vsel %vm2816, %v4218, 0.0
    %v4743 = vadd.f32 %v4741, %v4742
    %v4744 = vrot.slane %v4743, 4
    %v4745 = vadd.f32 %v4743, %v4744
    %v4746 = vrot.slane %v4745, 2
    %v4747 = vadd.f32 %v4745, %v4746
    %v4748 = vrot.slane %v4747, 1
    %v4749 = vadd.f32 %v4747, %v4748
    %v4750 = vsel %vm2816, %v4259, 0.0
    %v4751 = vsel %vm2816, %v4262, 0.0
    %v4752 = vadd.f32 %v4750, %v4751
    %v4753 = vrot.slane %v4752, 4
    %v4754 = vadd.f32 %v4752, %v4753
    %v4755 = vrot.slane %v4754, 2
    %v4756 = vadd.f32 %v4754, %v4755
    %v4757 = vrot.slane %v4756, 1
    %v4758 = vadd.f32 %v4756, %v4757
    %v4759 = vsel %vm2816, %v4303, 0.0
    %v4760 = vsel %vm2816, %v4306, 0.0
    %v4761 = vadd.f32 %v4759, %v4760
    %v4762 = vrot.slane %v4761, 4
    %v4763 = vadd.f32 %v4761, %v4762
    %v4764 = vrot.slane %v4763, 2
    %v4765 = vadd.f32 %v4763, %v4764
    %v4766 = vrot.slane %v4765, 1
    %v4767 = vadd.f32 %v4765, %v4766
    %v4768 = vsel %vm2816, %v4347, 0.0
    %v4769 = vsel %vm2816, %v4350, 0.0
    %v4770 = vadd.f32 %v4768, %v4769
    %v4771 = vrot.slane %v4770, 4
    %v4772 = vadd.f32 %v4770, %v4771
    %v4773 = vrot.slane %v4772, 2
    %v4774 = vadd.f32 %v4772, %v4773
    %v4775 = vrot.slane %v4774, 1
    %v4776 = vadd.f32 %v4774, %v4775
    %v4777 = vsel %vm2816, %v4391, 0.0
    %v4778 = vsel %vm2816, %v4394, 0.0
    %v4779 = vadd.f32 %v4777, %v4778
    %v4780 = vrot.slane %v4779, 4
    %v4781 = vadd.f32 %v4779, %v4780
    %v4782 = vrot.slane %v4781, 2
    %v4783 = vadd.f32 %v4781, %v4782
    %v4784 = vrot.slane %v4783, 1
    %v4785 = vadd.f32 %v4783, %v4784
    %v4786 = vsel %vm2816, %v4435, 0.0
    %v4787 = vsel %vm2816, %v4438, 0.0
    %v4788 = vadd.f32 %v4786, %v4787
    %v4789 = vrot.slane %v4788, 4
    %v4790 = vadd.f32 %v4788, %v4789
    %v4791 = vrot.slane %v4790, 2
    %v4792 = vadd.f32 %v4790, %v4791
    %v4793 = vrot.slane %v4792, 1
    %v4794 = vadd.f32 %v4792, %v4793
    %v4795 = vsel %vm2816, %v4479, 0.0
    %v4796 = vsel %vm2816, %v4482, 0.0
    %v4797 = vadd.f32 %v4795, %v4796
    %v4798 = vrot.slane %v4797, 4
    %v4799 = vadd.f32 %v4797, %v4798
    %v4800 = vrot.slane %v4799, 2
    %v4801 = vadd.f32 %v4799, %v4800
    %v4802 = vrot.slane %v4801, 1
    %v4803 = vadd.f32 %v4801, %v4802
    %v4804 = vsel %vm2816, %v4523, 0.0
    %v4805 = vsel %vm2816, %v4526, 0.0
    %v4806 = vadd.f32 %v4804, %v4805
    %v4807 = vrot.slane %v4806, 4
    %v4808 = vadd.f32 %v4806, %v4807
    %v4809 = vrot.slane %v4808, 2
    %v4810 = vadd.f32 %v4808, %v4809
    %v4811 = vrot.slane %v4810, 1
    %v4812 = vadd.f32 %v4810, %v4811
    %v4813 = vsel %vm2816, %v4567, 0.0
    %v4814 = vsel %vm2816, %v4570, 0.0
    %v4815 = vadd.f32 %v4813, %v4814
    %v4816 = vrot.slane %v4815, 4
    %v4817 = vadd.f32 %v4815, %v4816
    %v4818 = vrot.slane %v4817, 2
    %v4819 = vadd.f32 %v4817, %v4818
    %v4820 = vrot.slane %v4819, 1
    %v4821 = vadd.f32 %v4819, %v4820
    %v4822 = vsel %vm2816, %v4611, 0.0
    %v4823 = vsel %vm2816, %v4614, 0.0
    %v4824 = vadd.f32 %v4822, %v4823
    %v4825 = vrot.slane %v4824, 4
    %v4826 = vadd.f32 %v4824, %v4825
    %v4827 = vrot.slane %v4826, 2
    %v4828 = vadd.f32 %v4826, %v4827
    %v4829 = vrot.slane %v4828, 1
    %v4830 = vadd.f32 %v4828, %v4829
    %v4831 = vsel %vm2816, %v4655, 0.0
    %v4832 = vsel %vm2816, %v4658, 0.0
    %v4833 = vadd.f32 %v4831, %v4832
    %v4834 = vrot.slane %v4833, 4
    %v4835 = vadd.f32 %v4833, %v4834
    %v4836 = vrot.slane %v4835, 2
    %v4837 = vadd.f32 %v4835, %v4836
    %v4838 = vrot.slane %v4837, 1
    %v4839 = vadd.f32 %v4837, %v4838
    %v4840 = vsel %vm2816, %v4699, 0.0
    %v4841 = vsel %vm2816, %v4702, 0.0
    %v4842 = vadd.f32 %v4840, %v4841
    %v4843 = vrot.slane %v4842, 4
    %v4844 = vadd.f32 %v4842, %v4843
    %v4845 = vrot.slane %v4844, 2
    %v4846 = vadd.f32 %v4844, %v4845
    %v4847 = vrot.slane %v4846, 1
    %v4848 = vadd.f32 %v4846, %v4847
    %v4849 = vrcp.pop 16.0
    %v4850 = vmul.f32 %v4713, %v4849
    %v4851 = vmul.f32 %v4722, %v4849
    %v4852 = vmul.f32 %v4731, %v4849
    %v4853 = vmul.f32 %v4740, %v4849
    %v4854 = vmul.f32 %v4749, %v4849
    %v4855 = vmul.f32 %v4758, %v4849
    %v4856 = vmul.f32 %v4767, %v4849
    %v4857 = vmul.f32 %v4776, %v4849
    %v4858 = vmul.f32 %v4785, %v4849
    %v4859 = vmul.f32 %v4794, %v4849
    %v4860 = vmul.f32 %v4803, %v4849
    %v4861 = vmul.f32 %v4812, %v4849
    %v4862 = vmul.f32 %v4821, %v4849
    %v4863 = vmul.f32 %v4830, %v4849
    %v4864 = vmul.f32 %v4839, %v4849
    %v4865 = vmul.f32 %v4848, %v4849
    %v4866 = vpack.c.bf16 %v4850, %v4850
    %v4867 = vpack.c.bf16 %v4851, %v4851
    %v4868 = vpack.c.bf16 %v4852, %v4852
    %v4869 = vpack.c.bf16 %v4853, %v4853
    %v4870 = vpack.c.bf16 %v4854, %v4854
    %v4871 = vpack.c.bf16 %v4855, %v4855
    %v4872 = vpack.c.bf16 %v4856, %v4856
    %v4873 = vpack.c.bf16 %v4857, %v4857
    %v4874 = vpack.c.bf16 %v4858, %v4858
    %v4875 = vpack.c.bf16 %v4859, %v4859
    %v4876 = vpack.c.bf16 %v4860, %v4860
    %v4877 = vpack.c.bf16 %v4861, %v4861
    %v4878 = vpack.c.bf16 %v4862, %v4862
    %v4879 = vpack.c.bf16 %v4863, %v4863
    %v4880 = vpack.c.bf16 %v4864, %v4864
    %v4881 = vpack.c.bf16 %v4865, %v4865
    %v4882 = vld [vmem:[%s5] sm:$0xf]
    %v4883 = vld [vmem:[%s5 + $0x4] sm:$0xf]
    %v4884 = vld [vmem:[%s5 + $0x8] sm:$0xf]
    %v4885 = vld [vmem:[%s5 + $0xc] sm:$0xf]
    %v4886 = vld [vmem:[%s5 + $0x10] sm:$0xf]
    %v4887 = vld [vmem:[%s5 + $0x14] sm:$0xf]
    %v4888 = vld [vmem:[%s5 + $0x18] sm:$0xf]
    %v4889 = vld [vmem:[%s5 + $0x1c] sm:$0xf]
    %v4890 = vld [vmem:[%s5 + $0x20] sm:$0xf]
    %v4891 = vld [vmem:[%s5 + $0x24] sm:$0xf]
    %v4892 = vld [vmem:[%s5 + $0x28] sm:$0xf]
    %v4893 = vld [vmem:[%s5 + $0x2c] sm:$0xf]
    %v4894 = vld [vmem:[%s5 + $0x30] sm:$0xf]
    %v4895 = vld [vmem:[%s5 + $0x34] sm:$0xf]
    %v4896 = vld [vmem:[%s5 + $0x38] sm:$0xf]
    %v4897 = vld [vmem:[%s5 + $0x3c] sm:$0xf]
    %v4900 = vunpack.c.l.b16 %v4866
    %v4901 = vunpack.c.l.b16 %v4867
    %vm4902 = vcmask 1041409
    %v4903 = vsel %vm4902, %v4901, %v4900
    %v4904 = vpack.c.b16 %v4903, %v4903
    %v4907 = vunpack.c.l.b16 %v4882
    %v4908 = vunpack.c.l.b16 %v4883
    %v4909 = vpack.c.b16 %v4908, %v4907
    %v4912 = vsel %vm2816, %v4904, 0
    %4914 = vmatprep.subr.bf16.mxu0 0
    %4915 = vmatpush1.bf16.msra.mxu0 %v4909
    %4916 = vmatprep.subr.bf16.mxu0 0
    %4917 = vmatpush1.bf16.msra.mxu0 0
    %4918 = vmatprep.subr.bf16.mxu0 0
    %4919 = vmatpush1.bf16.msra.mxu0 0
    %4920 = vmatprep.subr.bf16.mxu0 0
    %4921 = vmatpush1.bf16.msra.mxu0 0
    %4922 = vmatprep.subr.bf16.mxu0 0
    %4923 = vmatpush1.bf16.msra.mxu0 0
    %4924 = vmatprep.subr.bf16.mxu0 0
    %4925 = vmatpush1.bf16.msra.mxu0 0
    %4926 = vmatprep.subr.bf16.mxu0 0
    %4927 = vmatpush1.bf16.msra.mxu0 0
    %4928 = vmatprep.subr.bf16.mxu0 0
    %4929 = vmatpush1.bf16.msra.mxu0 0
    %4930 = vmatprep.subr.bf16.mxu0 0
    %4931 = vmatpush1.bf16.msra.mxu0 0
    %4932 = vmatprep.subr.bf16.mxu0 0
    %4933 = vmatpush1.bf16.msra.mxu0 0
    %4934 = vmatprep.subr.bf16.mxu0 0
    %4935 = vmatpush1.bf16.msra.mxu0 0
    %4936 = vmatprep.subr.bf16.mxu0 0
    %4937 = vmatpush1.bf16.msra.mxu0 0
    %4938 = vmatprep.subr.bf16.mxu0 0
    %4939 = vmatpush1.bf16.msra.mxu0 0
    %4940 = vmatprep.subr.bf16.mxu0 0
    %4941 = vmatpush1.bf16.msra.mxu0 0
    %4942 = vmatprep.subr.bf16.mxu0 0
    %4943 = vmatpush1.bf16.msra.mxu0 0
    %4944 = vmatprep.subr.bf16.mxu0 0
    %4945 = vmatpush1.bf16.msra.mxu0 0
    %4946 = vmatprep.mubr.bf16.mxu0 0
    %4947 = vmatmul.mubr.bf16.gmra.mrb[0].mxu0 %v4912
    %v4948 = vpop.f32.mrb[0].mxu0
    %v4949 = vadd.f32 0.0, %v4948
    %v4950 = vpop.f32.mrb[0].mxu0
    %v4951 = vpop.f32.mrb[0].mxu0
    %v4952 = vpop.f32.mrb[0].mxu0
    %4953 = vdwg.mxu0
    %v4956 = vunpack.c.l.b16 %v4868
    %v4957 = vunpack.c.l.b16 %v4869
    %v4958 = vsel %vm4902, %v4957, %v4956
    %v4959 = vpack.c.b16 %v4958, %v4958
    %v4962 = vunpack.c.l.b16 %v4884
    %v4963 = vunpack.c.l.b16 %v4885
    %v4964 = vpack.c.b16 %v4963, %v4962
    %v4967 = vsel %vm2816, %v4959, 0
    %4969 = vmatprep.subr.bf16.mxu0 0
    %4970 = vmatpush1.bf16.msra.mxu0 %v4964
    %4971 = vmatprep.subr.bf16.mxu0 0
    %4972 = vmatpush1.bf16.msra.mxu0 0
    %4973 = vmatprep.subr.bf16.mxu0 0
    %4974 = vmatpush1.bf16.msra.mxu0 0
    %4975 = vmatprep.subr.bf16.mxu0 0
    %4976 = vmatpush1.bf16.msra.mxu0 0
    %4977 = vmatprep.subr.bf16.mxu0 0
    %4978 = vmatpush1.bf16.msra.mxu0 0
    %4979 = vmatprep.subr.bf16.mxu0 0
    %4980 = vmatpush1.bf16.msra.mxu0 0
    %4981 = vmatprep.subr.bf16.mxu0 0
    %4982 = vmatpush1.bf16.msra.mxu0 0
    %4983 = vmatprep.subr.bf16.mxu0 0
    %4984 = vmatpush1.bf16.msra.mxu0 0
    %4985 = vmatprep.subr.bf16.mxu0 0
    %4986 = vmatpush1.bf16.msra.mxu0 0
    %4987 = vmatprep.subr.bf16.mxu0 0
    %4988 = vmatpush1.bf16.msra.mxu0 0
    %4989 = vmatprep.subr.bf16.mxu0 0
    %4990 = vmatpush1.bf16.msra.mxu0 0
    %4991 = vmatprep.subr.bf16.mxu0 0
    %4992 = vmatpush1.bf16.msra.mxu0 0
    %4993 = vmatprep.subr.bf16.mxu0 0
    %4994 = vmatpush1.bf16.msra.mxu0 0
    %4995 = vmatprep.subr.bf16.mxu0 0
    %4996 = vmatpush1.bf16.msra.mxu0 0
    %4997 = vmatprep.subr.bf16.mxu0 0
    %4998 = vmatpush1.bf16.msra.mxu0 0
    %4999 = vmatprep.subr.bf16.mxu0 0
    %5000 = vmatpush1.bf16.msra.mxu0 0
    %5001 = vmatprep.mubr.bf16.mxu0 0
    %5002 = vmatmul.mubr.bf16.gmra.mrb[0].mxu0 %v4967
    %v5003 = vpop.f32.mrb[0].mxu0
    %v5004 = vadd.f32 0.0, %v5003
    %v5005 = vpop.f32.mrb[0].mxu0
    %v5006 = vpop.f32.mrb[0].mxu0
    %v5007 = vpop.f32.mrb[0].mxu0
    %5008 = vdwg.mxu0
    %v5011 = vunpack.c.l.b16 %v4870
    %v5012 = vunpack.c.l.b16 %v4871
    %v5013 = vsel %vm4902, %v5012, %v5011
    %v5014 = vpack.c.b16 %v5013, %v5013
    %v5017 = vunpack.c.l.b16 %v4886
    %v5018 = vunpack.c.l.b16 %v4887
    %v5019 = vpack.c.b16 %v5018, %v5017
    %v5022 = vsel %vm2816, %v5014, 0
    %5024 = vmatprep.subr.bf16.mxu0 0
    %5025 = vmatpush1.bf16.msra.mxu0 %v5019
    %5026 = vmatprep.subr.bf16.mxu0 0
    %5027 = vmatpush1.bf16.msra.mxu0 0
    %5028 = vmatprep.subr.bf16.mxu0 0
    %5029 = vmatpush1.bf16.msra.mxu0 0
    %5030 = vmatprep.subr.bf16.mxu0 0
    %5031 = vmatpush1.bf16.msra.mxu0 0
    %5032 = vmatprep.subr.bf16.mxu0 0
    %5033 = vmatpush1.bf16.msra.mxu0 0
    %5034 = vmatprep.subr.bf16.mxu0 0
    %5035 = vmatpush1.bf16.msra.mxu0 0
    %5036 = vmatprep.subr.bf16.mxu0 0
    %5037 = vmatpush1.bf16.msra.mxu0 0
    %5038 = vmatprep.subr.bf16.mxu0 0
    %5039 = vmatpush1.bf16.msra.mxu0 0
    %5040 = vmatprep.subr.bf16.mxu0 0
    %5041 = vmatpush1.bf16.msra.mxu0 0
    %5042 = vmatprep.subr.bf16.mxu0 0
    %5043 = vmatpush1.bf16.msra.mxu0 0
    %5044 = vmatprep.subr.bf16.mxu0 0
    %5045 = vmatpush1.bf16.msra.mxu0 0
    %5046 = vmatprep.subr.bf16.mxu0 0
    %5047 = vmatpush1.bf16.msra.mxu0 0
    %5048 = vmatprep.subr.bf16.mxu0 0
    %5049 = vmatpush1.bf16.msra.mxu0 0
    %5050 = vmatprep.subr.bf16.mxu0 0
    %5051 = vmatpush1.bf16.msra.mxu0 0
    %5052 = vmatprep.subr.bf16.mxu0 0
    %5053 = vmatpush1.bf16.msra.mxu0 0
    %5054 = vmatprep.subr.bf16.mxu0 0
    %5055 = vmatpush1.bf16.msra.mxu0 0
    %5056 = vmatprep.mubr.bf16.mxu0 0
    %5057 = vmatmul.mubr.bf16.gmra.mrb[0].mxu0 %v5022
    %v5058 = vpop.f32.mrb[0].mxu0
    %v5059 = vadd.f32 0.0, %v5058
    %v5060 = vpop.f32.mrb[0].mxu0
    %v5061 = vpop.f32.mrb[0].mxu0
    %v5062 = vpop.f32.mrb[0].mxu0
    %5063 = vdwg.mxu0
    %v5066 = vunpack.c.l.b16 %v4872
    %v5067 = vunpack.c.l.b16 %v4873
    %v5068 = vsel %vm4902, %v5067, %v5066
    %v5069 = vpack.c.b16 %v5068, %v5068
    %v5072 = vunpack.c.l.b16 %v4888
    %v5073 = vunpack.c.l.b16 %v4889
    %v5074 = vpack.c.b16 %v5073, %v5072
    %v5077 = vsel %vm2816, %v5069, 0
    %5079 = vmatprep.subr.bf16.mxu0 0
    %5080 = vmatpush1.bf16.msra.mxu0 %v5074
    %5081 = vmatprep.subr.bf16.mxu0 0
    %5082 = vmatpush1.bf16.msra.mxu0 0
    %5083 = vmatprep.subr.bf16.mxu0 0
    %5084 = vmatpush1.bf16.msra.mxu0 0
    %5085 = vmatprep.subr.bf16.mxu0 0
    %5086 = vmatpush1.bf16.msra.mxu0 0
    %5087 = vmatprep.subr.bf16.mxu0 0
    %5088 = vmatpush1.bf16.msra.mxu0 0
    %5089 = vmatprep.subr.bf16.mxu0 0
    %5090 = vmatpush1.bf16.msra.mxu0 0
    %5091 = vmatprep.subr.bf16.mxu0 0
    %5092 = vmatpush1.bf16.msra.mxu0 0
    %5093 = vmatprep.subr.bf16.mxu0 0
    %5094 = vmatpush1.bf16.msra.mxu0 0
    %5095 = vmatprep.subr.bf16.mxu0 0
    %5096 = vmatpush1.bf16.msra.mxu0 0
    %5097 = vmatprep.subr.bf16.mxu0 0
    %5098 = vmatpush1.bf16.msra.mxu0 0
    %5099 = vmatprep.subr.bf16.mxu0 0
    %5100 = vmatpush1.bf16.msra.mxu0 0
    %5101 = vmatprep.subr.bf16.mxu0 0
    %5102 = vmatpush1.bf16.msra.mxu0 0
    %5103 = vmatprep.subr.bf16.mxu0 0
    %5104 = vmatpush1.bf16.msra.mxu0 0
    %5105 = vmatprep.subr.bf16.mxu0 0
    %5106 = vmatpush1.bf16.msra.mxu0 0
    %5107 = vmatprep.subr.bf16.mxu0 0
    %5108 = vmatpush1.bf16.msra.mxu0 0
    %5109 = vmatprep.subr.bf16.mxu0 0
    %5110 = vmatpush1.bf16.msra.mxu0 0
    %5111 = vmatprep.mubr.bf16.mxu0 0
    %5112 = vmatmul.mubr.bf16.gmra.mrb[0].mxu0 %v5077
    %v5113 = vpop.f32.mrb[0].mxu0
    %v5114 = vadd.f32 0.0, %v5113
    %v5115 = vpop.f32.mrb[0].mxu0
    %v5116 = vpop.f32.mrb[0].mxu0
    %v5117 = vpop.f32.mrb[0].mxu0
    %5118 = vdwg.mxu0
    %v5121 = vunpack.c.l.b16 %v4874
    %v5122 = vunpack.c.l.b16 %v4875
    %v5123 = vsel %vm4902, %v5122, %v5121
    %v5124 = vpack.c.b16 %v5123, %v5123
    %v5127 = vunpack.c.l.b16 %v4890
    %v5128 = vunpack.c.l.b16 %v4891
    %v5129 = vpack.c.b16 %v5128, %v5127
    %v5132 = vsel %vm2816, %v5124, 0
    %5134 = vmatprep.subr.bf16.mxu0 0
    %5135 = vmatpush1.bf16.msra.mxu0 %v5129
    %5136 = vmatprep.subr.bf16.mxu0 0
    %5137 = vmatpush1.bf16.msra.mxu0 0
    %5138 = vmatprep.subr.bf16.mxu0 0
    %5139 = vmatpush1.bf16.msra.mxu0 0
    %5140 = vmatprep.subr.bf16.mxu0 0
    %5141 = vmatpush1.bf16.msra.mxu0 0
    %5142 = vmatprep.subr.bf16.mxu0 0
    %5143 = vmatpush1.bf16.msra.mxu0 0
    %5144 = vmatprep.subr.bf16.mxu0 0
    %5145 = vmatpush1.bf16.msra.mxu0 0
    %5146 = vmatprep.subr.bf16.mxu0 0
    %5147 = vmatpush1.bf16.msra.mxu0 0
    %5148 = vmatprep.subr.bf16.mxu0 0
    %5149 = vmatpush1.bf16.msra.mxu0 0
    %5150 = vmatprep.subr.bf16.mxu0 0
    %5151 = vmatpush1.bf16.msra.mxu0 0
    %5152 = vmatprep.subr.bf16.mxu0 0
    %5153 = vmatpush1.bf16.msra.mxu0 0
    %5154 = vmatprep.subr.bf16.mxu0 0
    %5155 = vmatpush1.bf16.msra.mxu0 0
    %5156 = vmatprep.subr.bf16.mxu0 0
    %5157 = vmatpush1.bf16.msra.mxu0 0
    %5158 = vmatprep.subr.bf16.mxu0 0
    %5159 = vmatpush1.bf16.msra.mxu0 0
    %5160 = vmatprep.subr.bf16.mxu0 0
    %5161 = vmatpush1.bf16.msra.mxu0 0
    %5162 = vmatprep.subr.bf16.mxu0 0
    %5163 = vmatpush1.bf16.msra.mxu0 0
    %5164 = vmatprep.subr.bf16.mxu0 0
    %5165 = vmatpush1.bf16.msra.mxu0 0
    %5166 = vmatprep.mubr.bf16.mxu0 0
    %5167 = vmatmul.mubr.bf16.gmra.mrb[0].mxu0 %v5132
    %v5168 = vpop.f32.mrb[0].mxu0
    %v5169 = vadd.f32 0.0, %v5168
    %v5170 = vpop.f32.mrb[0].mxu0
    %v5171 = vpop.f32.mrb[0].mxu0
    %v5172 = vpop.f32.mrb[0].mxu0
    %5173 = vdwg.mxu0
    %v5176 = vunpack.c.l.b16 %v4876
    %v5177 = vunpack.c.l.b16 %v4877
    %v5178 = vsel %vm4902, %v5177, %v5176
    %v5179 = vpack.c.b16 %v5178, %v5178
    %v5182 = vunpack.c.l.b16 %v4892
    %v5183 = vunpack.c.l.b16 %v4893
    %v5184 = vpack.c.b16 %v5183, %v5182
    %v5187 = vsel %vm2816, %v5179, 0
    %5189 = vmatprep.subr.bf16.mxu0 0
    %5190 = vmatpush1.bf16.msra.mxu0 %v5184
    %5191 = vmatprep.subr.bf16.mxu0 0
    %5192 = vmatpush1.bf16.msra.mxu0 0
    %5193 = vmatprep.subr.bf16.mxu0 0
    %5194 = vmatpush1.bf16.msra.mxu0 0
    %5195 = vmatprep.subr.bf16.mxu0 0
    %5196 = vmatpush1.bf16.msra.mxu0 0
    %5197 = vmatprep.subr.bf16.mxu0 0
    %5198 = vmatpush1.bf16.msra.mxu0 0
    %5199 = vmatprep.subr.bf16.mxu0 0
    %5200 = vmatpush1.bf16.msra.mxu0 0
    %5201 = vmatprep.subr.bf16.mxu0 0
    %5202 = vmatpush1.bf16.msra.mxu0 0
    %5203 = vmatprep.subr.bf16.mxu0 0
    %5204 = vmatpush1.bf16.msra.mxu0 0
    %5205 = vmatprep.subr.bf16.mxu0 0
    %5206 = vmatpush1.bf16.msra.mxu0 0
    %5207 = vmatprep.subr.bf16.mxu0 0
    %5208 = vmatpush1.bf16.msra.mxu0 0
    %5209 = vmatprep.subr.bf16.mxu0 0
    %5210 = vmatpush1.bf16.msra.mxu0 0
    %5211 = vmatprep.subr.bf16.mxu0 0
    %5212 = vmatpush1.bf16.msra.mxu0 0
    %5213 = vmatprep.subr.bf16.mxu0 0
    %5214 = vmatpush1.bf16.msra.mxu0 0
    %5215 = vmatprep.subr.bf16.mxu0 0
    %5216 = vmatpush1.bf16.msra.mxu0 0
    %5217 = vmatprep.subr.bf16.mxu0 0
    %5218 = vmatpush1.bf16.msra.mxu0 0
    %5219 = vmatprep.subr.bf16.mxu0 0
    %5220 = vmatpush1.bf16.msra.mxu0 0
    %5221 = vmatprep.mubr.bf16.mxu0 0
    %5222 = vmatmul.mubr.bf16.gmra.mrb[0].mxu0 %v5187
    %v5223 = vpop.f32.mrb[0].mxu0
    %v5224 = vadd.f32 0.0, %v5223
    %v5225 = vpop.f32.mrb[0].mxu0
    %v5226 = vpop.f32.mrb[0].mxu0
    %v5227 = vpop.f32.mrb[0].mxu0
    %5228 = vdwg.mxu0
    %v5231 = vunpack.c.l.b16 %v4878
    %v5232 = vunpack.c.l.b16 %v4879
    %v5233 = vsel %vm4902, %v5232, %v5231
    %v5234 = vpack.c.b16 %v5233, %v5233
    %v5237 = vunpack.c.l.b16 %v4894
    %v5238 = vunpack.c.l.b16 %v4895
    %v5239 = vpack.c.b16 %v5238, %v5237
    %v5242 = vsel %vm2816, %v5234, 0
    %5244 = vmatprep.subr.bf16.mxu0 0
    %5245 = vmatpush1.bf16.msra.mxu0 %v5239
    %5246 = vmatprep.subr.bf16.mxu0 0
    %5247 = vmatpush1.bf16.msra.mxu0 0
    %5248 = vmatprep.subr.bf16.mxu0 0
    %5249 = vmatpush1.bf16.msra.mxu0 0
    %5250 = vmatprep.subr.bf16.mxu0 0
    %5251 = vmatpush1.bf16.msra.mxu0 0
    %5252 = vmatprep.subr.bf16.mxu0 0
    %5253 = vmatpush1.bf16.msra.mxu0 0
    %5254 = vmatprep.subr.bf16.mxu0 0
    %5255 = vmatpush1.bf16.msra.mxu0 0
    %5256 = vmatprep.subr.bf16.mxu0 0
    %5257 = vmatpush1.bf16.msra.mxu0 0
    %5258 = vmatprep.subr.bf16.mxu0 0
    %5259 = vmatpush1.bf16.msra.mxu0 0
    %5260 = vmatprep.subr.bf16.mxu0 0
    %5261 = vmatpush1.bf16.msra.mxu0 0
    %5262 = vmatprep.subr.bf16.mxu0 0
    %5263 = vmatpush1.bf16.msra.mxu0 0
    %5264 = vmatprep.subr.bf16.mxu0 0
    %5265 = vmatpush1.bf16.msra.mxu0 0
    %5266 = vmatprep.subr.bf16.mxu0 0
    %5267 = vmatpush1.bf16.msra.mxu0 0
    %5268 = vmatprep.subr.bf16.mxu0 0
    %5269 = vmatpush1.bf16.msra.mxu0 0
    %5270 = vmatprep.subr.bf16.mxu0 0
    %5271 = vmatpush1.bf16.msra.mxu0 0
    %5272 = vmatprep.subr.bf16.mxu0 0
    %5273 = vmatpush1.bf16.msra.mxu0 0
    %5274 = vmatprep.subr.bf16.mxu0 0
    %5275 = vmatpush1.bf16.msra.mxu0 0
    %5276 = vmatprep.mubr.bf16.mxu0 0
    %5277 = vmatmul.mubr.bf16.gmra.mrb[0].mxu0 %v5242
    %v5278 = vpop.f32.mrb[0].mxu0
    %v5279 = vadd.f32 0.0, %v5278
    %v5280 = vpop.f32.mrb[0].mxu0
    %v5281 = vpop.f32.mrb[0].mxu0
    %v5282 = vpop.f32.mrb[0].mxu0
    %5283 = vdwg.mxu0
    %v5286 = vunpack.c.l.b16 %v4880
    %v5287 = vunpack.c.l.b16 %v4881
    %v5288 = vsel %vm4902, %v5287, %v5286
    %v5289 = vpack.c.b16 %v5288, %v5288
    %v5292 = vunpack.c.l.b16 %v4896
    %v5293 = vunpack.c.l.b16 %v4897
    %v5294 = vpack.c.b16 %v5293, %v5292
    %v5297 = vsel %vm2816, %v5289, 0
    %5299 = vmatprep.subr.bf16.mxu0 0
    %5300 = vmatpush1.bf16.msra.mxu0 %v5294
    %5301 = vmatprep.subr.bf16.mxu0 0
    %5302 = vmatpush1.bf16.msra.mxu0 0
    %5303 = vmatprep.subr.bf16.mxu0 0
    %5304 = vmatpush1.bf16.msra.mxu0 0
    %5305 = vmatprep.subr.bf16.mxu0 0
    %5306 = vmatpush1.bf16.msra.mxu0 0
    %5307 = vmatprep.subr.bf16.mxu0 0
    %5308 = vmatpush1.bf16.msra.mxu0 0
    %5309 = vmatprep.subr.bf16.mxu0 0
    %5310 = vmatpush1.bf16.msra.mxu0 0
    %5311 = vmatprep.subr.bf16.mxu0 0
    %5312 = vmatpush1.bf16.msra.mxu0 0
    %5313 = vmatprep.subr.bf16.mxu0 0
    %5314 = vmatpush1.bf16.msra.mxu0 0
    %5315 = vmatprep.subr.bf16.mxu0 0
    %5316 = vmatpush1.bf16.msra.mxu0 0
    %5317 = vmatprep.subr.bf16.mxu0 0
    %5318 = vmatpush1.bf16.msra.mxu0 0
    %5319 = vmatprep.subr.bf16.mxu0 0
    %5320 = vmatpush1.bf16.msra.mxu0 0
    %5321 = vmatprep.subr.bf16.mxu0 0
    %5322 = vmatpush1.bf16.msra.mxu0 0
    %5323 = vmatprep.subr.bf16.mxu0 0
    %5324 = vmatpush1.bf16.msra.mxu0 0
    %5325 = vmatprep.subr.bf16.mxu0 0
    %5326 = vmatpush1.bf16.msra.mxu0 0
    %5327 = vmatprep.subr.bf16.mxu0 0
    %5328 = vmatpush1.bf16.msra.mxu0 0
    %5329 = vmatprep.subr.bf16.mxu0 0
    %5330 = vmatpush1.bf16.msra.mxu0 0
    %5331 = vmatprep.mubr.bf16.mxu0 0
    %5332 = vmatmul.mubr.bf16.gmra.mrb[0].mxu0 %v5297
    %v5333 = vpop.f32.mrb[0].mxu0
    %v5334 = vadd.f32 0.0, %v5333
    %v5335 = vpop.f32.mrb[0].mxu0
    %v5336 = vpop.f32.mrb[0].mxu0
    %v5337 = vpop.f32.mrb[0].mxu0
    %5338 = vdwg.mxu0
    %vm5339 = vcmask 1041408
    %v5340 = vsel %vm5339, %v4949, 0.0
    %v5341 = vsel %vm5339, %v5004, 0.0
    %v5342 = vadd.f32 %v5340, %v5341
    %v5343 = vsel %vm5339, %v5059, 0.0
    %v5344 = vadd.f32 %v5342, %v5343
    %v5345 = vsel %vm5339, %v5114, 0.0
    %v5346 = vadd.f32 %v5344, %v5345
    %v5347 = vsel %vm5339, %v5169, 0.0
    %v5348 = vadd.f32 %v5346, %v5347
    %v5349 = vsel %vm5339, %v5224, 0.0
    %v5350 = vadd.f32 %v5348, %v5349
    %v5351 = vsel %vm5339, %v5279, 0.0
    %v5352 = vadd.f32 %v5350, %v5351
    %v5353 = vsel %vm5339, %v5334, 0.0
    %v5354 = vadd.f32 %v5352, %v5353
    %v5355 = vld [vmem:[%s6] sm:$0x1]
    %v5357 = vlaneseq
    %v5358 = vshrl.u32 %v5357, 7
    %v5359 = vsub.s32 0, %v5358
    %v5360 = vrot.slane %v5355, %v5359
    %v5362 = vadd.f32 %v5354, %v5360
    %v5363 = vpack.c.bf16 %v5362, %v5362
    %v5364 = vld [vmem:[%s7] sm:$0xf]
    %v5365 = vld [vmem:[%s7 + $0x4] sm:$0xf]
    %v5366 = vld [vmem:[%s7 + $0x8] sm:$0xf]
    %v5367 = vld [vmem:[%s7 + $0xc] sm:$0xf]
    %v5368 = vld [vmem:[%s7 + $0x10] sm:$0xf]
    %v5369 = vld [vmem:[%s7 + $0x14] sm:$0xf]
    %v5370 = vld [vmem:[%s7 + $0x18] sm:$0xf]
    %v5371 = vld [vmem:[%s7 + $0x1c] sm:$0xf]
    %v5372 = vld [vmem:[%s7 + $0x20] sm:$0xf]
    %v5373 = vld [vmem:[%s7 + $0x24] sm:$0xf]
    %v5374 = vld [vmem:[%s7 + $0x28] sm:$0xf]
    %v5375 = vld [vmem:[%s7 + $0x2c] sm:$0xf]
    %v5376 = vld [vmem:[%s7 + $0x30] sm:$0xf]
    %v5377 = vld [vmem:[%s7 + $0x34] sm:$0xf]
    %v5378 = vld [vmem:[%s7 + $0x38] sm:$0xf]
    %v5379 = vld [vmem:[%s7 + $0x3c] sm:$0xf]
    %v5380 = vld [vmem:[%s8] sm:$0x1]
    %v5382 = vlaneseq
    %v5383 = vshrl.u32 %v5382, 7
    %v5384 = vsub.s32 0, %v5383
    %v5385 = vrot.slane %v5380, %v5384
    %v5403 = vunpack.c.l.b16 %v5364
    %v5404 = vunpack.c.l.b16 %v5365
    %v5405 = vunpack.c.l.b16 %v5366
    %v5406 = vunpack.c.l.b16 %v5367
    %v5407 = vunpack.c.l.b16 %v5368
    %v5408 = vunpack.c.l.b16 %v5369
    %v5409 = vunpack.c.l.b16 %v5370
    %v5410 = vunpack.c.l.b16 %v5371
    %v5411 = vunpack.c.l.b16 %v5372
    %v5412 = vunpack.c.l.b16 %v5373
    %v5413 = vunpack.c.l.b16 %v5374
    %v5414 = vunpack.c.l.b16 %v5375
    %v5415 = vunpack.c.l.b16 %v5376
    %v5416 = vunpack.c.l.b16 %v5377
    %v5417 = vunpack.c.l.b16 %v5378
    %v5418 = vunpack.c.l.b16 %v5379
    %v5419 = vpack.c.b16 %v5404, %v5403
    %v5420 = vpack.c.b16 %v5406, %v5405
    %v5421 = vpack.c.b16 %v5408, %v5407
    %v5422 = vpack.c.b16 %v5410, %v5409
    %v5423 = vpack.c.b16 %v5412, %v5411
    %v5424 = vpack.c.b16 %v5414, %v5413
    %v5425 = vpack.c.b16 %v5416, %v5415
    %v5426 = vpack.c.b16 %v5418, %v5417
    %5435 = vmatprep.subr.bf16.mxu0 0
    %5436 = vmatpush1.bf16.msra.mxu0 %v5419
    %5437 = vmatprep.subr.bf16.mxu0 0
    %5438 = vmatpush1.bf16.msra.mxu0 %v5420
    %5439 = vmatprep.subr.bf16.mxu0 0
    %5440 = vmatpush1.bf16.msra.mxu0 %v5421
    %5441 = vmatprep.subr.bf16.mxu0 0
    %5442 = vmatpush1.bf16.msra.mxu0 %v5422
    %5443 = vmatprep.subr.bf16.mxu0 0
    %5444 = vmatpush1.bf16.msra.mxu0 %v5423
    %5445 = vmatprep.subr.bf16.mxu0 0
    %5446 = vmatpush1.bf16.msra.mxu0 %v5424
    %5447 = vmatprep.subr.bf16.mxu0 0
    %5448 = vmatpush1.bf16.msra.mxu0 %v5425
    %5449 = vmatprep.subr.bf16.mxu0 0
    %5450 = vmatpush1.bf16.msra.mxu0 %v5426
    %5451 = vmatprep.subr.bf16.mxu0 0
    %5452 = vmatpush1.bf16.msra.mxu0 0
    %5453 = vmatprep.subr.bf16.mxu0 0
    %5454 = vmatpush1.bf16.msra.mxu0 0
    %5455 = vmatprep.subr.bf16.mxu0 0
    %5456 = vmatpush1.bf16.msra.mxu0 0
    %5457 = vmatprep.subr.bf16.mxu0 0
    %5458 = vmatpush1.bf16.msra.mxu0 0
    %5459 = vmatprep.subr.bf16.mxu0 0
    %5460 = vmatpush1.bf16.msra.mxu0 0
    %5461 = vmatprep.subr.bf16.mxu0 0
    %5462 = vmatpush1.bf16.msra.mxu0 0
    %5463 = vmatprep.subr.bf16.mxu0 0
    %5464 = vmatpush1.bf16.msra.mxu0 0
    %5465 = vmatprep.subr.bf16.mxu0 0
    %5466 = vmatpush1.bf16.msra.mxu0 0
    %5467 = vmatprep.mubr.bf16.mxu0 0
    %5468 = vmatmul.mubr.bf16.gmra.mrb[0].mxu0 %v5363
    %v5469 = vpop.f32.mrb[0].mxu0
    %v5470 = vadd.f32 %v5385, %v5469
    %v5471 = vpop.f32.mrb[0].mxu0
    %v5472 = vpop.f32.mrb[0].mxu0
    %v5473 = vpop.f32.mrb[0].mxu0
    %5474 = vdwg.mxu0
    %5475 = vst [vmem:[#allocation2] sm:$0x3] %v5470
    // Predicated region
    $region38: #{tpu_custom_call.1} parent=1 // pred_check
      _
    $region39: #{tpu_custom_call.1} parent=1 // pred_check_branch
      %5477 = sbr.rel (0) target = $region41
    $region40: #{tpu_custom_call.1} parent=1 // pred_region
      %s5479 = ssub.s32 32, 32
      %5480 = vsyncadd [#allocation3], %s5479
      %s5482 = sshll.u32 [#allocation2], 4
      %s5483 = int_to_ptr.vmem [resolvable:$true] %s5482
      %5485 = dma.vmem_to_hbm [thread:$0]  %s5483, 32, %s9, [#allocation3]
    $region41: #{tpu_custom_call.1} parent=1 // pred_fallthru
      _
    // Predicated region
    $region42: #{tpu_custom_call.1} parent=1 // pred_check
      _
    $region43: #{tpu_custom_call.1} parent=1 // pred_check_branch
      %5487 = sbr.rel (0) target = $region45
    $region44: #{tpu_custom_call.1} parent=1 // pred_region
      %5488 = dma.done [#allocation3], 32
    $region45: #{tpu_custom_call.1} parent=1 // pred_fallthru
      _
    %5489 = vsyncpa [#allocation3], 1

</llo_original>
